<compile_context>
chip_gen: v6e
topology: v6e:2x2x1
jax: 0.10.0
libtpu: 0.0.40
codegen_flags: <defaults>
</compile_context>

<pallas_src>
import jax
import jax.numpy as jnp
from jax.experimental import pallas as pl
from jax.experimental.pallas import tpu as pltpu

_LANE = 128                 # lane-dense padded feature width for the MXU
_N_LAYERS = 6
_NARROW_IO_MIN_ROWS = 1024  # below this, use the lane-dense (128-wide) I/O path


# --------------------------------------------------------------------------
# Kernel
# --------------------------------------------------------------------------
def dae_kernel(x_ref, w_ref, b_ref, o_ref):
    """Fused 6-layer MLP (Linear+ReLU x5, Linear last), all in VMEM.

    x_ref: (batch_tile, d_in_blk)   d_in_blk is either d_in (narrow path) or 128
    w_ref: (6, 128, 128)            stacked, pre-transposed (in,out), zero-padded
    b_ref: (6, 1, 128)              stacked biases, zero-padded
    o_ref: (batch_tile, d_out_blk)  d_out_blk is either d_out or 128
    """
    d_in = x_ref.shape[-1]
    d_out = o_ref.shape[-1]

    x = x_ref[...].astype(jnp.float32)
    # First layer contracts over the true input width; the remaining padded
    # weight rows are zero so later 128-wide contractions are exact.
    h = jnp.dot(x, w_ref[0, :d_in, :],
                preferred_element_type=jnp.float32,
                precision=jax.lax.Precision.HIGHEST) + b_ref[0]
    h = jnp.maximum(h, 0.0)

    for layer in range(1, _N_LAYERS):
        h = jnp.dot(h, w_ref[layer],
                    preferred_element_type=jnp.float32,
                    precision=jax.lax.Precision.HIGHEST) + b_ref[layer]
        if layer != _N_LAYERS - 1:
            h = jnp.maximum(h, 0.0)

    o_ref[...] = h[:, :d_out].astype(o_ref.dtype)


# --------------------------------------------------------------------------
# Wrapper helpers
# --------------------------------------------------------------------------
def _round_up(n, m):
    return (n + m - 1) // m * m


def _choose_batch_tile(b8):
    """b8 = batch rounded up to a multiple of 8.

    Small batches: one block (everything trivially fits in VMEM).
    Large batches: tiles in [256, 1024] rows so the 1-D grid is several steps
    deep (double-buffered DMA + balanced 2-TensorCore sharding on v7x) while
    staying well within VMEM on every generation.
    """
    if b8 <= 1024:
        return b8
    tile = min(1024, max(256, (b8 // 8) // 8 * 8))
    return tile


def _pack_params(params, pad=_LANE):
    """Pack 6 (W_t, b) pairs into one weight stack and one bias stack, zero-padded."""
    w_stack = jnp.zeros((_N_LAYERS, pad, pad), jnp.float32)
    b_stack = jnp.zeros((_N_LAYERS, 1, pad), jnp.float32)
    for l, (w, b) in enumerate(params):
        fan_in, fan_out = w.shape
        w_stack = w_stack.at[l, :fan_in, :fan_out].set(w.astype(jnp.float32))
        b_stack = b_stack.at[l, 0, :fan_out].set(b.reshape(-1).astype(jnp.float32))
    return w_stack, b_stack


# --------------------------------------------------------------------------
# Wrapper
# --------------------------------------------------------------------------
def denoising_autoencoder(x, params, *, batch_tile=None):
    """x: (B, in_out_channels) float32. params: list of 6 (W_t, b), W_t is (in,out)."""
    B, d_in = x.shape
    d_out = params[-1][0].shape[1]
    P = _LANE
    assert d_in <= P and d_out <= P, "feature width must fit one 128-lane tile"

    w_stack, b_stack = _pack_params(params, P)

    # ---- batch tiling (always multiples of 8; pad rows with zeros, drop later)
    B8 = _round_up(B, 8)
    if batch_tile is None:
        batch_tile = _choose_batch_tile(B8)
    batch_tile = max(8, _round_up(int(batch_tile), 8))
    B_pad = _round_up(B8, batch_tile)
    grid = (B_pad // batch_tile,)

    # ---- I/O width: narrow (true widths) for large batches, lane-dense for small
    narrow_io = B_pad >= _NARROW_IO_MIN_ROWS
    if narrow_io:
        in_w, out_w = d_in, d_out
        x_in = x
    else:
        in_w, out_w = P, P
        x_in = jnp.pad(x, ((0, 0), (0, P - d_in))) if d_in != P else x
    if B_pad != B:
        x_in = jnp.pad(x_in, ((0, B_pad - B), (0, 0)))

    # ---- advisory cost estimate: what the kernel actually executes
    flops = 2 * B_pad * _N_LAYERS * P * P
    bytes_accessed = (B_pad * (in_w + out_w) * 4
                      + int(w_stack.size + b_stack.size) * 4)
    cost = pl.CostEstimate(flops=int(flops), transcendentals=0,
                           bytes_accessed=int(bytes_accessed))

    # ---- VMEM budget: double-buffered x/out blocks + double-buffered packed
    # params + headroom for live f32 intermediates.  Tiny on every generation.
    block_in = batch_tile * in_w * 4
    block_out = batch_tile * out_w * 4
    param_bytes = int(w_stack.size + b_stack.size) * 4
    interm_bytes = 4 * batch_tile * P * 4
    vmem_needed = 2 * (block_in + block_out) + 2 * param_bytes + interm_bytes
    vmem_limit = int(min(max(16 * 1024 * 1024, 2 * vmem_needed), 48 * 1024 * 1024))

    out_pad = pl.pallas_call(
        dae_kernel,
        out_shape=jax.ShapeDtypeStruct((B_pad, out_w), x.dtype),
        grid_spec=pltpu.PrefetchScalarGridSpec(
            num_scalar_prefetch=0,
            grid=grid,
            in_specs=[
                pl.BlockSpec((batch_tile, in_w), lambda i: (i, 0)),        # x
                pl.BlockSpec((_N_LAYERS, P, P), lambda i: (0, 0, 0)),      # packed W
                pl.BlockSpec((_N_LAYERS, 1, P), lambda i: (0, 0, 0)),      # packed b
            ],
            out_specs=pl.BlockSpec((batch_tile, out_w), lambda i: (i, 0)),
        ),
        compiler_params=pltpu.CompilerParams(
            dimension_semantics=("parallel",),
            vmem_limit_bytes=vmem_limit,
        ),
        cost_estimate=cost,
    )(x_in, w_stack, b_stack)

    out = out_pad
    if B_pad != B:
        out = out[:B]
    if out_w != d_out:
        out = out[:, :d_out]
    return out


# --------------------------------------------------------------------------
# Params / reference (for the self-test)
# --------------------------------------------------------------------------
def init_params(key, in_out_channels):
    """nn.Linear-shaped params.  Weights stored pre-transposed as (fan_in, fan_out).

    Layer dims (PyTorch):
      encoder: in -> h, h -> h//2, h//2 -> h//4
      decoder: h//4 -> h//2, h//2 -> h, h -> in
    """
    hidden = in_out_channels * 3 // 5
    dims = [
        (in_out_channels, hidden),
        (hidden, hidden // 2),
        (hidden // 2, hidden // 4),
        (hidden // 4, hidden // 2),
        (hidden // 2, hidden),
        (hidden, in_out_channels),
    ]
    params = []
    for fan_in, fan_out in dims:
        key, kw, kb = jax.random.split(key, 3)
        bound = 1.0 / (fan_in ** 0.5)      # PyTorch default Linear init range
        w_t = jax.random.uniform(kw, (fan_in, fan_out), jnp.float32,
                                 minval=-bound, maxval=bound)
        b = jax.random.uniform(kb, (1, fan_out), jnp.float32,
                               minval=-bound, maxval=bound)
        params.append((w_t, b))
    return params


def reference_forward(x, params):
    h = x
    for li, (w, b) in enumerate(params):
        h = jnp.dot(h, w, precision=jax.lax.Precision.HIGHEST) + b
        if li != len(params) - 1:
            h = jnp.maximum(h, 0.0)
    return h


if __name__ == "__main__":
    key = jax.random.PRNGKey(0)
    in_out_channels = 40          # c.model_params.model_input
    kp, kx1, kx2 = jax.random.split(key, 3)
    params = init_params(kp, in_out_channels)

    # 1) Small batch -> lane-dense padded path, single grid step.
    x_small = jax.random.normal(kx1, (8, in_out_channels), jnp.float32)
    out_small = jax.block_until_ready(denoising_autoencoder(x_small, params))
    ref_small = reference_forward(x_small, params)
    assert out_small.shape == x_small.shape
    assert jnp.allclose(out_small, ref_small, atol=1e-4, rtol=1e-4), \
        "small-batch mismatch vs JAX reference"

    # 2) Larger, non-multiple-of-8 batch -> narrow-I/O path, multi-step grid,
    #    zero-row padding exercised.
    x_large = jax.random.normal(kx2, (1030, in_out_channels), jnp.float32)
    out_large = jax.block_until_ready(denoising_autoencoder(x_large, params))
    ref_large = reference_forward(x_large, params)
    assert out_large.shape == x_large.shape
    assert jnp.allclose(out_large, ref_large, atol=1e-4, rtol=1e-4), \
        "large-batch mismatch vs JAX reference"

    print("KERNEL_OK")
</pallas_src>

<mosaic_0001>
module attributes {stable_mosaic.version = 11 : i64} {
  func.func @dae_kernel(%arg0: i32, %arg1: memref<8x128xf32, #tpu.memory_space<vmem>>, %arg2: memref<6x128x128xf32, #tpu.memory_space<vmem>>, %arg3: memref<6x1x128xf32, #tpu.memory_space<vmem>>, %arg4: memref<8x128xf32, #tpu.memory_space<vmem>>) attributes {dimension_semantics = [#tpu.dimension_semantics<parallel>], iteration_bounds = array<i64: 1>, scalar_prefetch = 0 : i64, scratch_operands = 0 : i64, tpu.core_type = #tpu.core_type<tc>, window_params = [{transform_indices = @transform_0, window_bounds = array<i64: 8, 128>}, {pipeline_mode = #tpu.pipeline_mode<synchronous>, transform_indices = @transform_1, window_bounds = array<i64: 6, 128, 128>}, {pipeline_mode = #tpu.pipeline_mode<synchronous>, transform_indices = @transform_2, window_bounds = array<i64: 6, 1, 128>}, {transform_indices = @transform_3, window_bounds = array<i64: 8, 128>}]} {
    %c0 = arith.constant 0 : index
    %c0_0 = arith.constant 0 : index
    %0 = vector.load %arg1[%c0, %c0_0] : memref<8x128xf32, #tpu.memory_space<vmem>>, vector<8x128xf32>
    %c0_1 = arith.constant 0 : index
    %c0_2 = arith.constant 0 : index
    %c0_3 = arith.constant 0 : index
    %1 = vector.load %arg2[%c0_1, %c0_2, %c0_3] : memref<6x128x128xf32, #tpu.memory_space<vmem>>, vector<1x128x128xf32>
    %2 = vector.shape_cast %1 : vector<1x128x128xf32> to vector<128x128xf32>
    %cst = arith.constant dense<0.000000e+00> : vector<8x128xf32>
    %3 = tpu.matmul %0, %2, %cst {dimension_numbers = #tpu.dot_dimension_numbers<[1], [0], [0], [1], [0, 0, 1, 1], [], []>, precision = #tpu.contract_precision<fp32>} : vector<8x128xf32>, vector<128x128xf32>, vector<8x128xf32> -> vector<8x128xf32>
    %c0_4 = arith.constant 0 : index
    %c0_5 = arith.constant 0 : index
    %c0_6 = arith.constant 0 : index
    %4 = vector.load %arg3[%c0_4, %c0_5, %c0_6] : memref<6x1x128xf32, #tpu.memory_space<vmem>>, vector<1x1x128xf32>
    %5 = vector.shape_cast %4 : vector<1x1x128xf32> to vector<1x128xf32>
    %6 = vector.broadcast %5 : vector<1x128xf32> to vector<8x128xf32>
    %7 = arith.addf %3, %6 : vector<8x128xf32>
    %cst_7 = arith.constant 0.000000e+00 : f32
    %8 = vector.broadcast %cst_7 : f32 to vector<8x128xf32>
    %9 = arith.maximumf %7, %8 : vector<8x128xf32>
    %c1 = arith.constant 1 : index
    %c0_8 = arith.constant 0 : index
    %c0_9 = arith.constant 0 : index
    %10 = vector.load %arg2[%c1, %c0_8, %c0_9] : memref<6x128x128xf32, #tpu.memory_space<vmem>>, vector<1x128x128xf32>
    %11 = vector.shape_cast %10 : vector<1x128x128xf32> to vector<128x128xf32>
    %cst_10 = arith.constant dense<0.000000e+00> : vector<8x128xf32>
    %12 = tpu.matmul %9, %11, %cst_10 {dimension_numbers = #tpu.dot_dimension_numbers<[1], [0], [0], [1], [0, 0, 1, 1], [], []>, precision = #tpu.contract_precision<fp32>} : vector<8x128xf32>, vector<128x128xf32>, vector<8x128xf32> -> vector<8x128xf32>
    %c1_11 = arith.constant 1 : index
    %c0_12 = arith.constant 0 : index
    %c0_13 = arith.constant 0 : index
    %13 = vector.load %arg3[%c1_11, %c0_12, %c0_13] : memref<6x1x128xf32, #tpu.memory_space<vmem>>, vector<1x1x128xf32>
    %14 = vector.shape_cast %13 : vector<1x1x128xf32> to vector<1x128xf32>
    %15 = vector.broadcast %14 : vector<1x128xf32> to vector<8x128xf32>
    %16 = arith.addf %12, %15 : vector<8x128xf32>
    %cst_14 = arith.constant 0.000000e+00 : f32
    %17 = vector.broadcast %cst_14 : f32 to vector<8x128xf32>
    %18 = arith.maximumf %16, %17 : vector<8x128xf32>
    %c2 = arith.constant 2 : index
    %c0_15 = arith.constant 0 : index
    %c0_16 = arith.constant 0 : index
    %19 = vector.load %arg2[%c2, %c0_15, %c0_16] : memref<6x128x128xf32, #tpu.memory_space<vmem>>, vector<1x128x128xf32>
    %20 = vector.shape_cast %19 : vector<1x128x128xf32> to vector<128x128xf32>
    %cst_17 = arith.constant dense<0.000000e+00> : vector<8x128xf32>
    %21 = tpu.matmul %18, %20, %cst_17 {dimension_numbers = #tpu.dot_dimension_numbers<[1], [0], [0], [1], [0, 0, 1, 1], [], []>, precision = #tpu.contract_precision<fp32>} : vector<8x128xf32>, vector<128x128xf32>, vector<8x128xf32> -> vector<8x128xf32>
    %c2_18 = arith.constant 2 : index
    %c0_19 = arith.constant 0 : index
    %c0_20 = arith.constant 0 : index
    %22 = vector.load %arg3[%c2_18, %c0_19, %c0_20] : memref<6x1x128xf32, #tpu.memory_space<vmem>>, vector<1x1x128xf32>
    %23 = vector.shape_cast %22 : vector<1x1x128xf32> to vector<1x128xf32>
    %24 = vector.broadcast %23 : vector<1x128xf32> to vector<8x128xf32>
    %25 = arith.addf %21, %24 : vector<8x128xf32>
    %cst_21 = arith.constant 0.000000e+00 : f32
    %26 = vector.broadcast %cst_21 : f32 to vector<8x128xf32>
    %27 = arith.maximumf %25, %26 : vector<8x128xf32>
    %c3 = arith.constant 3 : index
    %c0_22 = arith.constant 0 : index
    %c0_23 = arith.constant 0 : index
    %28 = vector.load %arg2[%c3, %c0_22, %c0_23] : memref<6x128x128xf32, #tpu.memory_space<vmem>>, vector<1x128x128xf32>
    %29 = vector.shape_cast %28 : vector<1x128x128xf32> to vector<128x128xf32>
    %cst_24 = arith.constant dense<0.000000e+00> : vector<8x128xf32>
    %30 = tpu.matmul %27, %29, %cst_24 {dimension_numbers = #tpu.dot_dimension_numbers<[1], [0], [0], [1], [0, 0, 1, 1], [], []>, precision = #tpu.contract_precision<fp32>} : vector<8x128xf32>, vector<128x128xf32>, vector<8x128xf32> -> vector<8x128xf32>
    %c3_25 = arith.constant 3 : index
    %c0_26 = arith.constant 0 : index
    %c0_27 = arith.constant 0 : index
    %31 = vector.load %arg3[%c3_25, %c0_26, %c0_27] : memref<6x1x128xf32, #tpu.memory_space<vmem>>, vector<1x1x128xf32>
    %32 = vector.shape_cast %31 : vector<1x1x128xf32> to vector<1x128xf32>
    %33 = vector.broadcast %32 : vector<1x128xf32> to vector<8x128xf32>
    %34 = arith.addf %30, %33 : vector<8x128xf32>
    %cst_28 = arith.constant 0.000000e+00 : f32
    %35 = vector.broadcast %cst_28 : f32 to vector<8x128xf32>
    %36 = arith.maximumf %34, %35 : vector<8x128xf32>
    %c4 = arith.constant 4 : index
    %c0_29 = arith.constant 0 : index
    %c0_30 = arith.constant 0 : index
    %37 = vector.load %arg2[%c4, %c0_29, %c0_30] : memref<6x128x128xf32, #tpu.memory_space<vmem>>, vector<1x128x128xf32>
    %38 = vector.shape_cast %37 : vector<1x128x128xf32> to vector<128x128xf32>
    %cst_31 = arith.constant dense<0.000000e+00> : vector<8x128xf32>
    %39 = tpu.matmul %36, %38, %cst_31 {dimension_numbers = #tpu.dot_dimension_numbers<[1], [0], [0], [1], [0, 0, 1, 1], [], []>, precision = #tpu.contract_precision<fp32>} : vector<8x128xf32>, vector<128x128xf32>, vector<8x128xf32> -> vector<8x128xf32>
    %c4_32 = arith.constant 4 : index
    %c0_33 = arith.constant 0 : index
    %c0_34 = arith.constant 0 : index
    %40 = vector.load %arg3[%c4_32, %c0_33, %c0_34] : memref<6x1x128xf32, #tpu.memory_space<vmem>>, vector<1x1x128xf32>
    %41 = vector.shape_cast %40 : vector<1x1x128xf32> to vector<1x128xf32>
    %42 = vector.broadcast %41 : vector<1x128xf32> to vector<8x128xf32>
    %43 = arith.addf %39, %42 : vector<8x128xf32>
    %cst_35 = arith.constant 0.000000e+00 : f32
    %44 = vector.broadcast %cst_35 : f32 to vector<8x128xf32>
    %45 = arith.maximumf %43, %44 : vector<8x128xf32>
    %c5 = arith.constant 5 : index
    %c0_36 = arith.constant 0 : index
    %c0_37 = arith.constant 0 : index
    %46 = vector.load %arg2[%c5, %c0_36, %c0_37] : memref<6x128x128xf32, #tpu.memory_space<vmem>>, vector<1x128x128xf32>
    %47 = vector.shape_cast %46 : vector<1x128x128xf32> to vector<128x128xf32>
    %cst_38 = arith.constant dense<0.000000e+00> : vector<8x128xf32>
    %48 = tpu.matmul %45, %47, %cst_38 {dimension_numbers = #tpu.dot_dimension_numbers<[1], [0], [0], [1], [0, 0, 1, 1], [], []>, precision = #tpu.contract_precision<fp32>} : vector<8x128xf32>, vector<128x128xf32>, vector<8x128xf32> -> vector<8x128xf32>
    %c5_39 = arith.constant 5 : index
    %c0_40 = arith.constant 0 : index
    %c0_41 = arith.constant 0 : index
    %49 = vector.load %arg3[%c5_39, %c0_40, %c0_41] : memref<6x1x128xf32, #tpu.memory_space<vmem>>, vector<1x1x128xf32>
    %50 = vector.shape_cast %49 : vector<1x1x128xf32> to vector<1x128xf32>
    %51 = vector.broadcast %50 : vector<1x128xf32> to vector<8x128xf32>
    %52 = arith.addf %48, %51 : vector<8x128xf32>
    %c0_42 = arith.constant 0 : index
    %c0_43 = arith.constant 0 : index
    %53 = vector.load %arg4[%c0_42, %c0_43] : memref<8x128xf32, #tpu.memory_space<vmem>>, vector<8x128xf32>
    tpu.vector_store %arg4[%c0_42, %c0_43], %52 {strides = array<i32>} : memref<8x128xf32, #tpu.memory_space<vmem>>, vector<8x128xf32>,
    return
  }
  func.func @transform_0(%arg0: i32) -> (i32, i32) {
    %c0_i32 = arith.constant 0 : i32
    %c0_i32_0 = arith.constant 0 : i32
    return %arg0, %c0_i32 : i32, i32
  }
  func.func @transform_1(%arg0: i32) -> (i32, i32, i32) {
    %c0_i32 = arith.constant 0 : i32
    %c0_i32_0 = arith.constant 0 : i32
    %c0_i32_1 = arith.constant 0 : i32
    %c0_i32_2 = arith.constant 0 : i32
    return %c0_i32, %c0_i32_0, %c0_i32_1 : i32, i32, i32
  }
  func.func @transform_2(%arg0: i32) -> (i32, i32, i32) {
    %c0_i32 = arith.constant 0 : i32
    %c0_i32_0 = arith.constant 0 : i32
    %c0_i32_1 = arith.constant 0 : i32
    %c0_i32_2 = arith.constant 0 : i32
    return %c0_i32, %c0_i32_0, %c0_i32_1 : i32, i32, i32
  }
  func.func @transform_3(%arg0: i32) -> (i32, i32) {
    %c0_i32 = arith.constant 0 : i32
    %c0_i32_0 = arith.constant 0 : i32
    return %arg0, %c0_i32 : i32, i32
  }
}

</mosaic_0001>

<llo_original>
// kernel: tpu_custom_call.1
$region0: #{tpu_custom_call.1}
  #allocation0 [shape = 'u32[]', space=smem, size = 0x4, offset = 0x4, fixed_abs, tag = 'smem constant byte address 0x4 - core index']
  #allocation1 [shape = 'u32[144,128]{1,0:T(1,128)}', space=vmem, size = 0x12000, scoped, tag = 'internal scratch']
  %s0 = inlined_call_operand.hbm [shape: f32[8,128], index: 0, kind: input, shape index: {}]
  %s1 = inlined_call_operand.hbm [shape: f32[6,128,128], index: 1, kind: input, shape index: {}]
  %s2 = inlined_call_operand.hbm [shape: f32[6,1,128], index: 2, kind: input, shape index: {}]
  %s3 = inlined_call_operand.hbm [shape: f32[8,128], index: 3, kind: output, shape index: {}]
  %s4 = sld [smem:[#allocation0]]
  $region34: #{tpu_custom_call.1} parent=0
    _
  %s6 = ssub.s32 1, %s4
  %s7 = scalar_select 0, %s6, %s4
  $region1: #{tpu_custom_call.1} parent=0
    #allocation2 [shape = 'u8[4096]{0}', space=vmem, size = 0x1000, scoped, tag = 'input window, operand 0, single buffered']
    #allocation3 [shape = 's32[1]{0}', space=sflag, size = 0x4, scoped, tag = 'scoped memory for tpu_custom_call.1']
    #allocation4 [shape = 's32[1]{0}', space=sflag, size = 0x4, scoped, tag = 'scoped memory for tpu_custom_call.1']
    #allocation5 [shape = 'u8[393216]{0}', space=vmem, size = 0x60000, scoped, tag = 'input window, operand 1, single buffered']
    #allocation6 [shape = 's32[1]{0}', space=sflag, size = 0x4, scoped, tag = 'scoped memory for tpu_custom_call.1']
    #allocation7 [shape = 'u8[3072]{0}', space=vmem, size = 0xc00, scoped, tag = 'input window, operand 2, single buffered']
    #allocation8 [shape = 'u8[4096]{0}', space=vmem, size = 0x1000, scoped, tag = 'output window, operand 0, single buffered']
    %8 = vsyncpa [#allocation3], 0
    %9 = vsyncpa [#allocation6], 0
    %10 = vsyncpa [#allocation4], 0
    // Predicated region
    $region2: #{tpu_custom_call.1} parent=1 // pred_check
      _
    $region3: #{tpu_custom_call.1} parent=1 // pred_check_branch
      %12 = sbr.rel (0) target = $region5
    $region4: #{tpu_custom_call.1} parent=1 // pred_region
      %s14 = ssub.s32 128, 128
      %15 = vsyncadd [#allocation3], %s14
      %s17 = sshll.u32 [#allocation2], 4
      %s18 = int_to_ptr.vmem [resolvable:$true] %s17
      %20 = dma.hbm_to_vmem [thread:$0]  %s0, 128, %s18, [#allocation3]
    $region5: #{tpu_custom_call.1} parent=1 // pred_fallthru
      _
    // Predicated region
    $region6: #{tpu_custom_call.1} parent=1 // pred_check
      _
    $region7: #{tpu_custom_call.1} parent=1 // pred_check_branch
      %22 = sbr.rel (0) target = $region9
    $region8: #{tpu_custom_call.1} parent=1 // pred_region
      %s24 = ssub.s32 12288, 12288
      %25 = vsyncadd [#allocation6], %s24
      %s26 = sshll.u32 [#allocation5], 4
      %s27 = int_to_ptr.vmem [resolvable:$true] %s26
      %32 = dma.hbm_to_vmem [thread:$0]  %s1, 12288, %s27, [#allocation6], 128, 128, 8
    $region9: #{tpu_custom_call.1} parent=1 // pred_fallthru
      _
    // Predicated region
    $region10: #{tpu_custom_call.1} parent=1 // pred_check
      _
    $region11: #{tpu_custom_call.1} parent=1 // pred_check_branch
      %34 = sbr.rel (0) target = $region13
    $region12: #{tpu_custom_call.1} parent=1 // pred_region
      %s36 = ssub.s32 96, 96
      %37 = vsyncadd [#allocation6], %s36
      %s38 = sshll.u32 [#allocation7], 4
      %s39 = int_to_ptr.vmem [resolvable:$true] %s38
      %44 = dma.hbm_to_vmem [thread:$0]  %s2, 96, %s39, [#allocation6], 16, 16, 1
    $region13: #{tpu_custom_call.1} parent=1 // pred_fallthru
      _
    // Predicated region
    $region14: #{tpu_custom_call.1} parent=1 // pred_check
      _
    $region15: #{tpu_custom_call.1} parent=1 // pred_check_branch
      %46 = sbr.rel (0) target = $region17
    $region16: #{tpu_custom_call.1} parent=1 // pred_region
      %47 = dma.done [#allocation3], 128
    $region17: #{tpu_custom_call.1} parent=1 // pred_fallthru
      _
    // Predicated region
    $region18: #{tpu_custom_call.1} parent=1 // pred_check
      _
    $region19: #{tpu_custom_call.1} parent=1 // pred_check_branch
      %49 = sbr.rel (0) target = $region21
    $region20: #{tpu_custom_call.1} parent=1 // pred_region
      %50 = dma.done [#allocation6], 12288
    $region21: #{tpu_custom_call.1} parent=1 // pred_fallthru
      _
    // Predicated region
    $region22: #{tpu_custom_call.1} parent=1 // pred_check
      _
    $region23: #{tpu_custom_call.1} parent=1 // pred_check_branch
      %52 = sbr.rel (0) target = $region25
    $region24: #{tpu_custom_call.1} parent=1 // pred_region
      %53 = dma.done [#allocation6], 96
    $region25: #{tpu_custom_call.1} parent=1 // pred_fallthru
      _
    %v54 = vld [vmem:[#allocation2] sm:$0xff]
    %v55 = vld [vmem:[#allocation5] sm:$0xff]
    %v56 = vld [vmem:[#allocation5 + $0x8] sm:$0xff]
    %v57 = vld [vmem:[#allocation5 + $0x10] sm:$0xff]
    %v58 = vld [vmem:[#allocation5 + $0x18] sm:$0xff]
    %v59 = vld [vmem:[#allocation5 + $0x20] sm:$0xff]
    %v60 = vld [vmem:[#allocation5 + $0x28] sm:$0xff]
    %v61 = vld [vmem:[#allocation5 + $0x30] sm:$0xff]
    %v62 = vld [vmem:[#allocation5 + $0x38] sm:$0xff]
    %v63 = vld [vmem:[#allocation5 + $0x40] sm:$0xff]
    %v64 = vld [vmem:[#allocation5 + $0x48] sm:$0xff]
    %v65 = vld [vmem:[#allocation5 + $0x50] sm:$0xff]
    %v66 = vld [vmem:[#allocation5 + $0x58] sm:$0xff]
    %v67 = vld [vmem:[#allocation5 + $0x60] sm:$0xff]
    %v68 = vld [vmem:[#allocation5 + $0x68] sm:$0xff]
    %v69 = vld [vmem:[#allocation5 + $0x70] sm:$0xff]
    %v70 = vld [vmem:[#allocation5 + $0x78] sm:$0xff]
    %v71 = vld [vmem:[#allocation7] sm:$0x1]
    %v73 = vlaneseq
    %v74 = vshrl.u32 %v73, 7
    %v75 = vsub.s32 0, %v74
    %v76 = vrot.slane %v71, %v75
    %78 = vmatprep.subr.mxu0 0.0
    %v79 = vand.u32 %v70, 4294901760
    %80 = vmatpush1.msra.mxu0 %v79
    %81 = vmatprep.subr.mxu0 0.0
    %v82 = vand.u32 %v69, 4294901760
    %83 = vmatpush1.msra.mxu0 %v82
    %84 = vmatprep.subr.mxu0 0.0
    %v85 = vand.u32 %v68, 4294901760
    %86 = vmatpush1.msra.mxu0 %v85
    %87 = vmatprep.subr.mxu0 0.0
    %v88 = vand.u32 %v67, 4294901760
    %89 = vmatpush1.msra.mxu0 %v88
    %90 = vmatprep.subr.mxu0 0.0
    %v91 = vand.u32 %v66, 4294901760
    %92 = vmatpush1.msra.mxu0 %v91
    %93 = vmatprep.subr.mxu0 0.0
    %v94 = vand.u32 %v65, 4294901760
    %95 = vmatpush1.msra.mxu0 %v94
    %96 = vmatprep.subr.mxu0 0.0
    %v97 = vand.u32 %v64, 4294901760
    %98 = vmatpush1.msra.mxu0 %v97
    %99 = vmatprep.subr.mxu0 0.0
    %v100 = vand.u32 %v63, 4294901760
    %101 = vmatpush1.msra.mxu0 %v100
    %102 = vmatprep.subr.mxu0 0.0
    %v103 = vand.u32 %v62, 4294901760
    %104 = vmatpush1.msra.mxu0 %v103
    %105 = vmatprep.subr.mxu0 0.0
    %v106 = vand.u32 %v61, 4294901760
    %107 = vmatpush1.msra.mxu0 %v106
    %108 = vmatprep.subr.mxu0 0.0
    %v109 = vand.u32 %v60, 4294901760
    %110 = vmatpush1.msra.mxu0 %v109
    %111 = vmatprep.subr.mxu0 0.0
    %v112 = vand.u32 %v59, 4294901760
    %113 = vmatpush1.msra.mxu0 %v112
    %114 = vmatprep.subr.mxu0 0.0
    %v115 = vand.u32 %v58, 4294901760
    %116 = vmatpush1.msra.mxu0 %v115
    %117 = vmatprep.subr.mxu0 0.0
    %v118 = vand.u32 %v57, 4294901760
    %119 = vmatpush1.msra.mxu0 %v118
    %120 = vmatprep.subr.mxu0 0.0
    %v121 = vand.u32 %v56, 4294901760
    %122 = vmatpush1.msra.mxu0 %v121
    %123 = vmatprep.subr.mxu0 0.0
    %v124 = vand.u32 %v55, 4294901760
    %125 = vmatpush1.msra.mxu0 %v124
    %126 = vmatprep.subr.mxu0 0.0
    %127 = vmatpush2.msra.mxu0 0.0
    %128 = vmatprep.subr.mxu0 0.0
    %129 = vmatpush2.msra.mxu0 0.0
    %130 = vmatprep.subr.mxu0 0.0
    %131 = vmatpush2.msra.mxu0 0.0
    %132 = vmatprep.subr.mxu0 0.0
    %133 = vmatpush2.msra.mxu0 0.0
    %134 = vmatprep.subr.mxu0 0.0
    %135 = vmatpush2.msra.mxu0 0.0
    %136 = vmatprep.subr.mxu0 0.0
    %137 = vmatpush2.msra.mxu0 0.0
    %138 = vmatprep.subr.mxu0 0.0
    %139 = vmatpush2.msra.mxu0 0.0
    %140 = vmatprep.subr.mxu0 0.0
    %141 = vmatpush2.msra.mxu0 0.0
    %142 = vmatprep.subr.mxu0 0.0
    %143 = vmatpush2.msra.mxu0 0.0
    %144 = vmatprep.subr.mxu0 0.0
    %145 = vmatpush2.msra.mxu0 0.0
    %146 = vmatprep.subr.mxu0 0.0
    %147 = vmatpush2.msra.mxu0 0.0
    %148 = vmatprep.subr.mxu0 0.0
    %149 = vmatpush2.msra.mxu0 0.0
    %150 = vmatprep.subr.mxu0 0.0
    %151 = vmatpush2.msra.mxu0 0.0
    %152 = vmatprep.subr.mxu0 0.0
    %153 = vmatpush2.msra.mxu0 0.0
    %154 = vmatprep.subr.mxu0 0.0
    %155 = vmatpush2.msra.mxu0 0.0
    %156 = vmatprep.subr.mxu0 0.0
    %157 = vmatpush2.msra.mxu0 0.0
    %158 = vmatprep.mubr.f32.mxu0 0.0
    %v159 = vand.u32 %v54, 4294901760
    %v160 = vsub.f32 %v54, %v159
    %v161 = vand.u32 %v160, 4294901760
    %v162 = vsub.f32 %v160, %v161
    %v163 = vand.u32 %v162, 4294901760
    %164 = vmatmul.mubr.f32.gmra.mxu0 %v163
    %v165 = vpop.f32.mrf.mxu0
    %v166 = vadd.f32 %v76, %v165
    %v167 = vpop.f32.mrf.mxu0
    %168 = vdwg.mxu0
    %169 = vmatprep.subr.mxu0 0.0
    %v170 = vand.u32 %v70, 4294901760
    %v171 = vsub.f32 %v70, %v170
    %v172 = vand.u32 %v171, 4294901760
    %v173 = vsub.f32 %v171, %v172
    %v174 = vand.u32 %v173, 4294901760
    %175 = vmatpush1.msra.mxu0 %v174
    %176 = vmatprep.subr.mxu0 0.0
    %v177 = vand.u32 %v69, 4294901760
    %v178 = vsub.f32 %v69, %v177
    %v179 = vand.u32 %v178, 4294901760
    %v180 = vsub.f32 %v178, %v179
    %v181 = vand.u32 %v180, 4294901760
    %182 = vmatpush1.msra.mxu0 %v181
    %183 = vmatprep.subr.mxu0 0.0
    %v184 = vand.u32 %v68, 4294901760
    %v185 = vsub.f32 %v68, %v184
    %v186 = vand.u32 %v185, 4294901760
    %v187 = vsub.f32 %v185, %v186
    %v188 = vand.u32 %v187, 4294901760
    %189 = vmatpush1.msra.mxu0 %v188
    %190 = vmatprep.subr.mxu0 0.0
    %v191 = vand.u32 %v67, 4294901760
    %v192 = vsub.f32 %v67, %v191
    %v193 = vand.u32 %v192, 4294901760
    %v194 = vsub.f32 %v192, %v193
    %v195 = vand.u32 %v194, 4294901760
    %196 = vmatpush1.msra.mxu0 %v195
    %197 = vmatprep.subr.mxu0 0.0
    %v198 = vand.u32 %v66, 4294901760
    %v199 = vsub.f32 %v66, %v198
    %v200 = vand.u32 %v199, 4294901760
    %v201 = vsub.f32 %v199, %v200
    %v202 = vand.u32 %v201, 4294901760
    %203 = vmatpush1.msra.mxu0 %v202
    %204 = vmatprep.subr.mxu0 0.0
    %v205 = vand.u32 %v65, 4294901760
    %v206 = vsub.f32 %v65, %v205
    %v207 = vand.u32 %v206, 4294901760
    %v208 = vsub.f32 %v206, %v207
    %v209 = vand.u32 %v208, 4294901760
    %210 = vmatpush1.msra.mxu0 %v209
    %211 = vmatprep.subr.mxu0 0.0
    %v212 = vand.u32 %v64, 4294901760
    %v213 = vsub.f32 %v64, %v212
    %v214 = vand.u32 %v213, 4294901760
    %v215 = vsub.f32 %v213, %v214
    %v216 = vand.u32 %v215, 4294901760
    %217 = vmatpush1.msra.mxu0 %v216
    %218 = vmatprep.subr.mxu0 0.0
    %v219 = vand.u32 %v63, 4294901760
    %v220 = vsub.f32 %v63, %v219
    %v221 = vand.u32 %v220, 4294901760
    %v222 = vsub.f32 %v220, %v221
    %v223 = vand.u32 %v222, 4294901760
    %224 = vmatpush1.msra.mxu0 %v223
    %225 = vmatprep.subr.mxu0 0.0
    %v226 = vand.u32 %v62, 4294901760
    %v227 = vsub.f32 %v62, %v226
    %v228 = vand.u32 %v227, 4294901760
    %v229 = vsub.f32 %v227, %v228
    %v230 = vand.u32 %v229, 4294901760
    %231 = vmatpush1.msra.mxu0 %v230
    %232 = vmatprep.subr.mxu0 0.0
    %v233 = vand.u32 %v61, 4294901760
    %v234 = vsub.f32 %v61, %v233
    %v235 = vand.u32 %v234, 4294901760
    %v236 = vsub.f32 %v234, %v235
    %v237 = vand.u32 %v236, 4294901760
    %238 = vmatpush1.msra.mxu0 %v237
    %239 = vmatprep.subr.mxu0 0.0
    %v240 = vand.u32 %v60, 4294901760
    %v241 = vsub.f32 %v60, %v240
    %v242 = vand.u32 %v241, 4294901760
    %v243 = vsub.f32 %v241, %v242
    %v244 = vand.u32 %v243, 4294901760
    %245 = vmatpush1.msra.mxu0 %v244
    %246 = vmatprep.subr.mxu0 0.0
    %v247 = vand.u32 %v59, 4294901760
    %v248 = vsub.f32 %v59, %v247
    %v249 = vand.u32 %v248, 4294901760
    %v250 = vsub.f32 %v248, %v249
    %v251 = vand.u32 %v250, 4294901760
    %252 = vmatpush1.msra.mxu0 %v251
    %253 = vmatprep.subr.mxu0 0.0
    %v254 = vand.u32 %v58, 4294901760
    %v255 = vsub.f32 %v58, %v254
    %v256 = vand.u32 %v255, 4294901760
    %v257 = vsub.f32 %v255, %v256
    %v258 = vand.u32 %v257, 4294901760
    %259 = vmatpush1.msra.mxu0 %v258
    %260 = vmatprep.subr.mxu0 0.0
    %v261 = vand.u32 %v57, 4294901760
    %v262 = vsub.f32 %v57, %v261
    %v263 = vand.u32 %v262, 4294901760
    %v264 = vsub.f32 %v262, %v263
    %v265 = vand.u32 %v264, 4294901760
    %266 = vmatpush1.msra.mxu0 %v265
    %267 = vmatprep.subr.mxu0 0.0
    %v268 = vand.u32 %v56, 4294901760
    %v269 = vsub.f32 %v56, %v268
    %v270 = vand.u32 %v269, 4294901760
    %v271 = vsub.f32 %v269, %v270
    %v272 = vand.u32 %v271, 4294901760
    %273 = vmatpush1.msra.mxu0 %v272
    %274 = vmatprep.subr.mxu0 0.0
    %v275 = vand.u32 %v55, 4294901760
    %v276 = vsub.f32 %v55, %v275
    %v277 = vand.u32 %v276, 4294901760
    %v278 = vsub.f32 %v276, %v277
    %v279 = vand.u32 %v278, 4294901760
    %280 = vmatpush1.msra.mxu0 %v279
    %281 = vmatprep.subr.mxu0 0.0
    %282 = vmatpush2.msra.mxu0 0.0
    %283 = vmatprep.subr.mxu0 0.0
    %284 = vmatpush2.msra.mxu0 0.0
    %285 = vmatprep.subr.mxu0 0.0
    %286 = vmatpush2.msra.mxu0 0.0
    %287 = vmatprep.subr.mxu0 0.0
    %288 = vmatpush2.msra.mxu0 0.0
    %289 = vmatprep.subr.mxu0 0.0
    %290 = vmatpush2.msra.mxu0 0.0
    %291 = vmatprep.subr.mxu0 0.0
    %292 = vmatpush2.msra.mxu0 0.0
    %293 = vmatprep.subr.mxu0 0.0
    %294 = vmatpush2.msra.mxu0 0.0
    %295 = vmatprep.subr.mxu0 0.0
    %296 = vmatpush2.msra.mxu0 0.0
    %297 = vmatprep.subr.mxu0 0.0
    %298 = vmatpush2.msra.mxu0 0.0
    %299 = vmatprep.subr.mxu0 0.0
    %300 = vmatpush2.msra.mxu0 0.0
    %301 = vmatprep.subr.mxu0 0.0
    %302 = vmatpush2.msra.mxu0 0.0
    %303 = vmatprep.subr.mxu0 0.0
    %304 = vmatpush2.msra.mxu0 0.0
    %305 = vmatprep.subr.mxu0 0.0
    %306 = vmatpush2.msra.mxu0 0.0
    %307 = vmatprep.subr.mxu0 0.0
    %308 = vmatpush2.msra.mxu0 0.0
    %309 = vmatprep.subr.mxu0 0.0
    %310 = vmatpush2.msra.mxu0 0.0
    %311 = vmatprep.subr.mxu0 0.0
    %312 = vmatpush2.msra.mxu0 0.0
    %313 = vmatprep.mubr.f32.mxu0 0.0
    %v314 = vand.u32 %v54, 4294901760
    %315 = vmatmul.mubr.f32.gmra.mxu0 %v314
    %v316 = vpop.f32.mrf.mxu0
    %v317 = vadd.f32 %v166, %v316
    %v318 = vpop.f32.mrf.mxu0
    %319 = vdwg.mxu0
    %320 = vmatprep.subr.mxu0 0.0
    %v321 = vand.u32 %v70, 4294901760
    %v322 = vsub.f32 %v70, %v321
    %323 = vmatpush1.msra.mxu0 %v322
    %324 = vmatprep.subr.mxu0 0.0
    %v325 = vand.u32 %v69, 4294901760
    %v326 = vsub.f32 %v69, %v325
    %327 = vmatpush1.msra.mxu0 %v326
    %328 = vmatprep.subr.mxu0 0.0
    %v329 = vand.u32 %v68, 4294901760
    %v330 = vsub.f32 %v68, %v329
    %331 = vmatpush1.msra.mxu0 %v330
    %332 = vmatprep.subr.mxu0 0.0
    %v333 = vand.u32 %v67, 4294901760
    %v334 = vsub.f32 %v67, %v333
    %335 = vmatpush1.msra.mxu0 %v334
    %336 = vmatprep.subr.mxu0 0.0
    %v337 = vand.u32 %v66, 4294901760
    %v338 = vsub.f32 %v66, %v337
    %339 = vmatpush1.msra.mxu0 %v338
    %340 = vmatprep.subr.mxu0 0.0
    %v341 = vand.u32 %v65, 4294901760
    %v342 = vsub.f32 %v65, %v341
    %343 = vmatpush1.msra.mxu0 %v342
    %344 = vmatprep.subr.mxu0 0.0
    %v345 = vand.u32 %v64, 4294901760
    %v346 = vsub.f32 %v64, %v345
    %347 = vmatpush1.msra.mxu0 %v346
    %348 = vmatprep.subr.mxu0 0.0
    %v349 = vand.u32 %v63, 4294901760
    %v350 = vsub.f32 %v63, %v349
    %351 = vmatpush1.msra.mxu0 %v350
    %352 = vmatprep.subr.mxu0 0.0
    %v353 = vand.u32 %v62, 4294901760
    %v354 = vsub.f32 %v62, %v353
    %355 = vmatpush1.msra.mxu0 %v354
    %356 = vmatprep.subr.mxu0 0.0
    %v357 = vand.u32 %v61, 4294901760
    %v358 = vsub.f32 %v61, %v357
    %359 = vmatpush1.msra.mxu0 %v358
    %360 = vmatprep.subr.mxu0 0.0
    %v361 = vand.u32 %v60, 4294901760
    %v362 = vsub.f32 %v60, %v361
    %363 = vmatpush1.msra.mxu0 %v362
    %364 = vmatprep.subr.mxu0 0.0
    %v365 = vand.u32 %v59, 4294901760
    %v366 = vsub.f32 %v59, %v365
    %367 = vmatpush1.msra.mxu0 %v366
    %368 = vmatprep.subr.mxu0 0.0
    %v369 = vand.u32 %v58, 4294901760
    %v370 = vsub.f32 %v58, %v369
    %371 = vmatpush1.msra.mxu0 %v370
    %372 = vmatprep.subr.mxu0 0.0
    %v373 = vand.u32 %v57, 4294901760
    %v374 = vsub.f32 %v57, %v373
    %375 = vmatpush1.msra.mxu0 %v374
    %376 = vmatprep.subr.mxu0 0.0
    %v377 = vand.u32 %v56, 4294901760
    %v378 = vsub.f32 %v56, %v377
    %379 = vmatpush1.msra.mxu0 %v378
    %380 = vmatprep.subr.mxu0 0.0
    %v381 = vand.u32 %v55, 4294901760
    %v382 = vsub.f32 %v55, %v381
    %383 = vmatpush1.msra.mxu0 %v382
    %384 = vmatprep.subr.mxu0 0.0
    %385 = vmatpush2.msra.mxu0 0.0
    %386 = vmatprep.subr.mxu0 0.0
    %387 = vmatpush2.msra.mxu0 0.0
    %388 = vmatprep.subr.mxu0 0.0
    %389 = vmatpush2.msra.mxu0 0.0
    %390 = vmatprep.subr.mxu0 0.0
    %391 = vmatpush2.msra.mxu0 0.0
    %392 = vmatprep.subr.mxu0 0.0
    %393 = vmatpush2.msra.mxu0 0.0
    %394 = vmatprep.subr.mxu0 0.0
    %395 = vmatpush2.msra.mxu0 0.0
    %396 = vmatprep.subr.mxu0 0.0
    %397 = vmatpush2.msra.mxu0 0.0
    %398 = vmatprep.subr.mxu0 0.0
    %399 = vmatpush2.msra.mxu0 0.0
    %400 = vmatprep.subr.mxu0 0.0
    %401 = vmatpush2.msra.mxu0 0.0
    %402 = vmatprep.subr.mxu0 0.0
    %403 = vmatpush2.msra.mxu0 0.0
    %404 = vmatprep.subr.mxu0 0.0
    %405 = vmatpush2.msra.mxu0 0.0
    %406 = vmatprep.subr.mxu0 0.0
    %407 = vmatpush2.msra.mxu0 0.0
    %408 = vmatprep.subr.mxu0 0.0
    %409 = vmatpush2.msra.mxu0 0.0
    %410 = vmatprep.subr.mxu0 0.0
    %411 = vmatpush2.msra.mxu0 0.0
    %412 = vmatprep.subr.mxu0 0.0
    %413 = vmatpush2.msra.mxu0 0.0
    %414 = vmatprep.subr.mxu0 0.0
    %415 = vmatpush2.msra.mxu0 0.0
    %416 = vmatprep.mubr.f32.mxu0 0.0
    %v417 = vand.u32 %v54, 4294901760
    %v418 = vsub.f32 %v54, %v417
    %419 = vmatmul.mubr.f32.gmra.mxu0 %v418
    %v420 = vpop.f32.mrf.mxu0
    %v421 = vadd.f32 %v317, %v420
    %v422 = vpop.f32.mrf.mxu0
    %423 = vdwg.mxu0
    %424 = vmatprep.subr.mxu0 0.0
    %v425 = vand.u32 %v70, 4294901760
    %426 = vmatpush1.msra.mxu0 %v425
    %427 = vmatprep.subr.mxu0 0.0
    %v428 = vand.u32 %v69, 4294901760
    %429 = vmatpush1.msra.mxu0 %v428
    %430 = vmatprep.subr.mxu0 0.0
    %v431 = vand.u32 %v68, 4294901760
    %432 = vmatpush1.msra.mxu0 %v431
    %433 = vmatprep.subr.mxu0 0.0
    %v434 = vand.u32 %v67, 4294901760
    %435 = vmatpush1.msra.mxu0 %v434
    %436 = vmatprep.subr.mxu0 0.0
    %v437 = vand.u32 %v66, 4294901760
    %438 = vmatpush1.msra.mxu0 %v437
    %439 = vmatprep.subr.mxu0 0.0
    %v440 = vand.u32 %v65, 4294901760
    %441 = vmatpush1.msra.mxu0 %v440
    %442 = vmatprep.subr.mxu0 0.0
    %v443 = vand.u32 %v64, 4294901760
    %444 = vmatpush1.msra.mxu0 %v443
    %445 = vmatprep.subr.mxu0 0.0
    %v446 = vand.u32 %v63, 4294901760
    %447 = vmatpush1.msra.mxu0 %v446
    %448 = vmatprep.subr.mxu0 0.0
    %v449 = vand.u32 %v62, 4294901760
    %450 = vmatpush1.msra.mxu0 %v449
    %451 = vmatprep.subr.mxu0 0.0
    %v452 = vand.u32 %v61, 4294901760
    %453 = vmatpush1.msra.mxu0 %v452
    %454 = vmatprep.subr.mxu0 0.0
    %v455 = vand.u32 %v60, 4294901760
    %456 = vmatpush1.msra.mxu0 %v455
    %457 = vmatprep.subr.mxu0 0.0
    %v458 = vand.u32 %v59, 4294901760
    %459 = vmatpush1.msra.mxu0 %v458
    %460 = vmatprep.subr.mxu0 0.0
    %v461 = vand.u32 %v58, 4294901760
    %462 = vmatpush1.msra.mxu0 %v461
    %463 = vmatprep.subr.mxu0 0.0
    %v464 = vand.u32 %v57, 4294901760
    %465 = vmatpush1.msra.mxu0 %v464
    %466 = vmatprep.subr.mxu0 0.0
    %v467 = vand.u32 %v56, 4294901760
    %468 = vmatpush1.msra.mxu0 %v467
    %469 = vmatprep.subr.mxu0 0.0
    %v470 = vand.u32 %v55, 4294901760
    %471 = vmatpush1.msra.mxu0 %v470
    %472 = vmatprep.subr.mxu0 0.0
    %473 = vmatpush2.msra.mxu0 0.0
    %474 = vmatprep.subr.mxu0 0.0
    %475 = vmatpush2.msra.mxu0 0.0
    %476 = vmatprep.subr.mxu0 0.0
    %477 = vmatpush2.msra.mxu0 0.0
    %478 = vmatprep.subr.mxu0 0.0
    %479 = vmatpush2.msra.mxu0 0.0
    %480 = vmatprep.subr.mxu0 0.0
    %481 = vmatpush2.msra.mxu0 0.0
    %482 = vmatprep.subr.mxu0 0.0
    %483 = vmatpush2.msra.mxu0 0.0
    %484 = vmatprep.subr.mxu0 0.0
    %485 = vmatpush2.msra.mxu0 0.0
    %486 = vmatprep.subr.mxu0 0.0
    %487 = vmatpush2.msra.mxu0 0.0
    %488 = vmatprep.subr.mxu0 0.0
    %489 = vmatpush2.msra.mxu0 0.0
    %490 = vmatprep.subr.mxu0 0.0
    %491 = vmatpush2.msra.mxu0 0.0
    %492 = vmatprep.subr.mxu0 0.0
    %493 = vmatpush2.msra.mxu0 0.0
    %494 = vmatprep.subr.mxu0 0.0
    %495 = vmatpush2.msra.mxu0 0.0
    %496 = vmatprep.subr.mxu0 0.0
    %497 = vmatpush2.msra.mxu0 0.0
    %498 = vmatprep.subr.mxu0 0.0
    %499 = vmatpush2.msra.mxu0 0.0
    %500 = vmatprep.subr.mxu0 0.0
    %501 = vmatpush2.msra.mxu0 0.0
    %502 = vmatprep.subr.mxu0 0.0
    %503 = vmatpush2.msra.mxu0 0.0
    %504 = vmatprep.mubr.f32.mxu0 0.0
    %v505 = vand.u32 %v54, 4294901760
    %v506 = vsub.f32 %v54, %v505
    %v507 = vand.u32 %v506, 4294901760
    %508 = vmatmul.mubr.f32.gmra.mxu0 %v507
    %v509 = vpop.f32.mrf.mxu0
    %v510 = vadd.f32 %v421, %v509
    %v511 = vpop.f32.mrf.mxu0
    %512 = vdwg.mxu0
    %513 = vmatprep.subr.mxu0 0.0
    %v514 = vand.u32 %v70, 4294901760
    %v515 = vsub.f32 %v70, %v514
    %v516 = vand.u32 %v515, 4294901760
    %517 = vmatpush1.msra.mxu0 %v516
    %518 = vmatprep.subr.mxu0 0.0
    %v519 = vand.u32 %v69, 4294901760
    %v520 = vsub.f32 %v69, %v519
    %v521 = vand.u32 %v520, 4294901760
    %522 = vmatpush1.msra.mxu0 %v521
    %523 = vmatprep.subr.mxu0 0.0
    %v524 = vand.u32 %v68, 4294901760
    %v525 = vsub.f32 %v68, %v524
    %v526 = vand.u32 %v525, 4294901760
    %527 = vmatpush1.msra.mxu0 %v526
    %528 = vmatprep.subr.mxu0 0.0
    %v529 = vand.u32 %v67, 4294901760
    %v530 = vsub.f32 %v67, %v529
    %v531 = vand.u32 %v530, 4294901760
    %532 = vmatpush1.msra.mxu0 %v531
    %533 = vmatprep.subr.mxu0 0.0
    %v534 = vand.u32 %v66, 4294901760
    %v535 = vsub.f32 %v66, %v534
    %v536 = vand.u32 %v535, 4294901760
    %537 = vmatpush1.msra.mxu0 %v536
    %538 = vmatprep.subr.mxu0 0.0
    %v539 = vand.u32 %v65, 4294901760
    %v540 = vsub.f32 %v65, %v539
    %v541 = vand.u32 %v540, 4294901760
    %542 = vmatpush1.msra.mxu0 %v541
    %543 = vmatprep.subr.mxu0 0.0
    %v544 = vand.u32 %v64, 4294901760
    %v545 = vsub.f32 %v64, %v544
    %v546 = vand.u32 %v545, 4294901760
    %547 = vmatpush1.msra.mxu0 %v546
    %548 = vmatprep.subr.mxu0 0.0
    %v549 = vand.u32 %v63, 4294901760
    %v550 = vsub.f32 %v63, %v549
    %v551 = vand.u32 %v550, 4294901760
    %552 = vmatpush1.msra.mxu0 %v551
    %553 = vmatprep.subr.mxu0 0.0
    %v554 = vand.u32 %v62, 4294901760
    %v555 = vsub.f32 %v62, %v554
    %v556 = vand.u32 %v555, 4294901760
    %557 = vmatpush1.msra.mxu0 %v556
    %558 = vmatprep.subr.mxu0 0.0
    %v559 = vand.u32 %v61, 4294901760
    %v560 = vsub.f32 %v61, %v559
    %v561 = vand.u32 %v560, 4294901760
    %562 = vmatpush1.msra.mxu0 %v561
    %563 = vmatprep.subr.mxu0 0.0
    %v564 = vand.u32 %v60, 4294901760
    %v565 = vsub.f32 %v60, %v564
    %v566 = vand.u32 %v565, 4294901760
    %567 = vmatpush1.msra.mxu0 %v566
    %568 = vmatprep.subr.mxu0 0.0
    %v569 = vand.u32 %v59, 4294901760
    %v570 = vsub.f32 %v59, %v569
    %v571 = vand.u32 %v570, 4294901760
    %572 = vmatpush1.msra.mxu0 %v571
    %573 = vmatprep.subr.mxu0 0.0
    %v574 = vand.u32 %v58, 4294901760
    %v575 = vsub.f32 %v58, %v574
    %v576 = vand.u32 %v575, 4294901760
    %577 = vmatpush1.msra.mxu0 %v576
    %578 = vmatprep.subr.mxu0 0.0
    %v579 = vand.u32 %v57, 4294901760
    %v580 = vsub.f32 %v57, %v579
    %v581 = vand.u32 %v580, 4294901760
    %582 = vmatpush1.msra.mxu0 %v581
    %583 = vmatprep.subr.mxu0 0.0
    %v584 = vand.u32 %v56, 4294901760
    %v585 = vsub.f32 %v56, %v584
    %v586 = vand.u32 %v585, 4294901760
    %587 = vmatpush1.msra.mxu0 %v586
    %588 = vmatprep.subr.mxu0 0.0
    %v589 = vand.u32 %v55, 4294901760
    %v590 = vsub.f32 %v55, %v589
    %v591 = vand.u32 %v590, 4294901760
    %592 = vmatpush1.msra.mxu0 %v591
    %593 = vmatprep.subr.mxu0 0.0
    %594 = vmatpush2.msra.mxu0 0.0
    %595 = vmatprep.subr.mxu0 0.0
    %596 = vmatpush2.msra.mxu0 0.0
    %597 = vmatprep.subr.mxu0 0.0
    %598 = vmatpush2.msra.mxu0 0.0
    %599 = vmatprep.subr.mxu0 0.0
    %600 = vmatpush2.msra.mxu0 0.0
    %601 = vmatprep.subr.mxu0 0.0
    %602 = vmatpush2.msra.mxu0 0.0
    %603 = vmatprep.subr.mxu0 0.0
    %604 = vmatpush2.msra.mxu0 0.0
    %605 = vmatprep.subr.mxu0 0.0
    %606 = vmatpush2.msra.mxu0 0.0
    %607 = vmatprep.subr.mxu0 0.0
    %608 = vmatpush2.msra.mxu0 0.0
    %609 = vmatprep.subr.mxu0 0.0
    %610 = vmatpush2.msra.mxu0 0.0
    %611 = vmatprep.subr.mxu0 0.0
    %612 = vmatpush2.msra.mxu0 0.0
    %613 = vmatprep.subr.mxu0 0.0
    %614 = vmatpush2.msra.mxu0 0.0
    %615 = vmatprep.subr.mxu0 0.0
    %616 = vmatpush2.msra.mxu0 0.0
    %617 = vmatprep.subr.mxu0 0.0
    %618 = vmatpush2.msra.mxu0 0.0
    %619 = vmatprep.subr.mxu0 0.0
    %620 = vmatpush2.msra.mxu0 0.0
    %621 = vmatprep.subr.mxu0 0.0
    %622 = vmatpush2.msra.mxu0 0.0
    %623 = vmatprep.subr.mxu0 0.0
    %624 = vmatpush2.msra.mxu0 0.0
    %625 = vmatprep.mubr.f32.mxu0 0.0
    %v626 = vand.u32 %v54, 4294901760
    %627 = vmatmul.mubr.f32.gmra.mxu0 %v626
    %v628 = vpop.f32.mrf.mxu0
    %v629 = vadd.f32 %v510, %v628
    %v630 = vpop.f32.mrf.mxu0
    %631 = vdwg.mxu0
    %632 = vmatprep.subr.mxu0 0.0
    %v633 = vand.u32 %v70, 4294901760
    %634 = vmatpush1.msra.mxu0 %v633
    %635 = vmatprep.subr.mxu0 0.0
    %v636 = vand.u32 %v69, 4294901760
    %637 = vmatpush1.msra.mxu0 %v636
    %638 = vmatprep.subr.mxu0 0.0
    %v639 = vand.u32 %v68, 4294901760
    %640 = vmatpush1.msra.mxu0 %v639
    %641 = vmatprep.subr.mxu0 0.0
    %v642 = vand.u32 %v67, 4294901760
    %643 = vmatpush1.msra.mxu0 %v642
    %644 = vmatprep.subr.mxu0 0.0
    %v645 = vand.u32 %v66, 4294901760
    %646 = vmatpush1.msra.mxu0 %v645
    %647 = vmatprep.subr.mxu0 0.0
    %v648 = vand.u32 %v65, 4294901760
    %649 = vmatpush1.msra.mxu0 %v648
    %650 = vmatprep.subr.mxu0 0.0
    %v651 = vand.u32 %v64, 4294901760
    %652 = vmatpush1.msra.mxu0 %v651
    %653 = vmatprep.subr.mxu0 0.0
    %v654 = vand.u32 %v63, 4294901760
    %655 = vmatpush1.msra.mxu0 %v654
    %656 = vmatprep.subr.mxu0 0.0
    %v657 = vand.u32 %v62, 4294901760
    %658 = vmatpush1.msra.mxu0 %v657
    %659 = vmatprep.subr.mxu0 0.0
    %v660 = vand.u32 %v61, 4294901760
    %661 = vmatpush1.msra.mxu0 %v660
    %662 = vmatprep.subr.mxu0 0.0
    %v663 = vand.u32 %v60, 4294901760
    %664 = vmatpush1.msra.mxu0 %v663
    %665 = vmatprep.subr.mxu0 0.0
    %v666 = vand.u32 %v59, 4294901760
    %667 = vmatpush1.msra.mxu0 %v666
    %668 = vmatprep.subr.mxu0 0.0
    %v669 = vand.u32 %v58, 4294901760
    %670 = vmatpush1.msra.mxu0 %v669
    %671 = vmatprep.subr.mxu0 0.0
    %v672 = vand.u32 %v57, 4294901760
    %673 = vmatpush1.msra.mxu0 %v672
    %674 = vmatprep.subr.mxu0 0.0
    %v675 = vand.u32 %v56, 4294901760
    %676 = vmatpush1.msra.mxu0 %v675
    %677 = vmatprep.subr.mxu0 0.0
    %v678 = vand.u32 %v55, 4294901760
    %679 = vmatpush1.msra.mxu0 %v678
    %680 = vmatprep.subr.mxu0 0.0
    %681 = vmatpush2.msra.mxu0 0.0
    %682 = vmatprep.subr.mxu0 0.0
    %683 = vmatpush2.msra.mxu0 0.0
    %684 = vmatprep.subr.mxu0 0.0
    %685 = vmatpush2.msra.mxu0 0.0
    %686 = vmatprep.subr.mxu0 0.0
    %687 = vmatpush2.msra.mxu0 0.0
    %688 = vmatprep.subr.mxu0 0.0
    %689 = vmatpush2.msra.mxu0 0.0
    %690 = vmatprep.subr.mxu0 0.0
    %691 = vmatpush2.msra.mxu0 0.0
    %692 = vmatprep.subr.mxu0 0.0
    %693 = vmatpush2.msra.mxu0 0.0
    %694 = vmatprep.subr.mxu0 0.0
    %695 = vmatpush2.msra.mxu0 0.0
    %696 = vmatprep.subr.mxu0 0.0
    %697 = vmatpush2.msra.mxu0 0.0
    %698 = vmatprep.subr.mxu0 0.0
    %699 = vmatpush2.msra.mxu0 0.0
    %700 = vmatprep.subr.mxu0 0.0
    %701 = vmatpush2.msra.mxu0 0.0
    %702 = vmatprep.subr.mxu0 0.0
    %703 = vmatpush2.msra.mxu0 0.0
    %704 = vmatprep.subr.mxu0 0.0
    %705 = vmatpush2.msra.mxu0 0.0
    %706 = vmatprep.subr.mxu0 0.0
    %707 = vmatpush2.msra.mxu0 0.0
    %708 = vmatprep.subr.mxu0 0.0
    %709 = vmatpush2.msra.mxu0 0.0
    %710 = vmatprep.subr.mxu0 0.0
    %711 = vmatpush2.msra.mxu0 0.0
    %712 = vmatprep.mubr.f32.mxu0 0.0
    %v713 = vand.u32 %v54, 4294901760
    %714 = vmatmul.mubr.f32.gmra.mxu0 %v713
    %v715 = vpop.f32.mrf.mxu0
    %v716 = vadd.f32 %v629, %v715
    %v717 = vpop.f32.mrf.mxu0
    %718 = vdwg.mxu0
    %v719 = vmax.f32 %v716, 0.0
    %s720 = scalar_lea.vmem [#allocation5], 128
    %v721 = vld [vmem:[%s720] sm:$0xff]
    %v722 = vld [vmem:[%s720 + $0x8] sm:$0xff]
    %v723 = vld [vmem:[%s720 + $0x10] sm:$0xff]
    %v724 = vld [vmem:[%s720 + $0x18] sm:$0xff]
    %v725 = vld [vmem:[%s720 + $0x20] sm:$0xff]
    %v726 = vld [vmem:[%s720 + $0x28] sm:$0xff]
    %v727 = vld [vmem:[%s720 + $0x30] sm:$0xff]
    %v728 = vld [vmem:[%s720 + $0x38] sm:$0xff]
    %v729 = vld [vmem:[%s720 + $0x40] sm:$0xff]
    %v730 = vld [vmem:[%s720 + $0x48] sm:$0xff]
    %v731 = vld [vmem:[%s720 + $0x50] sm:$0xff]
    %v732 = vld [vmem:[%s720 + $0x58] sm:$0xff]
    %v733 = vld [vmem:[%s720 + $0x60] sm:$0xff]
    %v734 = vld [vmem:[%s720 + $0x68] sm:$0xff]
    %v735 = vld [vmem:[%s720 + $0x70] sm:$0xff]
    %v736 = vld [vmem:[%s720 + $0x78] sm:$0xff]
    %s737 = scalar_lea.vmem [#allocation7], 1
    %v738 = vld [vmem:[%s737] sm:$0x1]
    %v740 = vlaneseq
    %v741 = vshrl.u32 %v740, 7
    %v742 = vsub.s32 0, %v741
    %v743 = vrot.slane %v738, %v742
    %745 = vmatprep.subr.mxu0 0.0
    %v746 = vand.u32 %v736, 4294901760
    %747 = vmatpush1.msra.mxu0 %v746
    %748 = vmatprep.subr.mxu0 0.0
    %v749 = vand.u32 %v735, 4294901760
    %750 = vmatpush1.msra.mxu0 %v749
    %751 = vmatprep.subr.mxu0 0.0
    %v752 = vand.u32 %v734, 4294901760
    %753 = vmatpush1.msra.mxu0 %v752
    %754 = vmatprep.subr.mxu0 0.0
    %v755 = vand.u32 %v733, 4294901760
    %756 = vmatpush1.msra.mxu0 %v755
    %757 = vmatprep.subr.mxu0 0.0
    %v758 = vand.u32 %v732, 4294901760
    %759 = vmatpush1.msra.mxu0 %v758
    %760 = vmatprep.subr.mxu0 0.0
    %v761 = vand.u32 %v731, 4294901760
    %762 = vmatpush1.msra.mxu0 %v761
    %763 = vmatprep.subr.mxu0 0.0
    %v764 = vand.u32 %v730, 4294901760
    %765 = vmatpush1.msra.mxu0 %v764
    %766 = vmatprep.subr.mxu0 0.0
    %v767 = vand.u32 %v729, 4294901760
    %768 = vmatpush1.msra.mxu0 %v767
    %769 = vmatprep.subr.mxu0 0.0
    %v770 = vand.u32 %v728, 4294901760
    %771 = vmatpush1.msra.mxu0 %v770
    %772 = vmatprep.subr.mxu0 0.0
    %v773 = vand.u32 %v727, 4294901760
    %774 = vmatpush1.msra.mxu0 %v773
    %775 = vmatprep.subr.mxu0 0.0
    %v776 = vand.u32 %v726, 4294901760
    %777 = vmatpush1.msra.mxu0 %v776
    %778 = vmatprep.subr.mxu0 0.0
    %v779 = vand.u32 %v725, 4294901760
    %780 = vmatpush1.msra.mxu0 %v779
    %781 = vmatprep.subr.mxu0 0.0
    %v782 = vand.u32 %v724, 4294901760
    %783 = vmatpush1.msra.mxu0 %v782
    %784 = vmatprep.subr.mxu0 0.0
    %v785 = vand.u32 %v723, 4294901760
    %786 = vmatpush1.msra.mxu0 %v785
    %787 = vmatprep.subr.mxu0 0.0
    %v788 = vand.u32 %v722, 4294901760
    %789 = vmatpush1.msra.mxu0 %v788
    %790 = vmatprep.subr.mxu0 0.0
    %v791 = vand.u32 %v721, 4294901760
    %792 = vmatpush1.msra.mxu0 %v791
    %793 = vmatprep.subr.mxu0 0.0
    %794 = vmatpush2.msra.mxu0 0.0
    %795 = vmatprep.subr.mxu0 0.0
    %796 = vmatpush2.msra.mxu0 0.0
    %797 = vmatprep.subr.mxu0 0.0
    %798 = vmatpush2.msra.mxu0 0.0
    %799 = vmatprep.subr.mxu0 0.0
    %800 = vmatpush2.msra.mxu0 0.0
    %801 = vmatprep.subr.mxu0 0.0
    %802 = vmatpush2.msra.mxu0 0.0
    %803 = vmatprep.subr.mxu0 0.0
    %804 = vmatpush2.msra.mxu0 0.0
    %805 = vmatprep.subr.mxu0 0.0
    %806 = vmatpush2.msra.mxu0 0.0
    %807 = vmatprep.subr.mxu0 0.0
    %808 = vmatpush2.msra.mxu0 0.0
    %809 = vmatprep.subr.mxu0 0.0
    %810 = vmatpush2.msra.mxu0 0.0
    %811 = vmatprep.subr.mxu0 0.0
    %812 = vmatpush2.msra.mxu0 0.0
    %813 = vmatprep.subr.mxu0 0.0
    %814 = vmatpush2.msra.mxu0 0.0
    %815 = vmatprep.subr.mxu0 0.0
    %816 = vmatpush2.msra.mxu0 0.0
    %817 = vmatprep.subr.mxu0 0.0
    %818 = vmatpush2.msra.mxu0 0.0
    %819 = vmatprep.subr.mxu0 0.0
    %820 = vmatpush2.msra.mxu0 0.0
    %821 = vmatprep.subr.mxu0 0.0
    %822 = vmatpush2.msra.mxu0 0.0
    %823 = vmatprep.subr.mxu0 0.0
    %824 = vmatpush2.msra.mxu0 0.0
    %825 = vmatprep.mubr.f32.mxu0 0.0
    %v826 = vand.u32 %v719, 4294901760
    %v827 = vsub.f32 %v719, %v826
    %v828 = vand.u32 %v827, 4294901760
    %v829 = vsub.f32 %v827, %v828
    %v830 = vand.u32 %v829, 4294901760
    %831 = vmatmul.mubr.f32.gmra.mxu0 %v830
    %v832 = vpop.f32.mrf.mxu0
    %v833 = vadd.f32 %v743, %v832
    %v834 = vpop.f32.mrf.mxu0
    %835 = vdwg.mxu0
    %836 = vmatprep.subr.mxu0 0.0
    %v837 = vand.u32 %v736, 4294901760
    %v838 = vsub.f32 %v736, %v837
    %v839 = vand.u32 %v838, 4294901760
    %v840 = vsub.f32 %v838, %v839
    %v841 = vand.u32 %v840, 4294901760
    %842 = vmatpush1.msra.mxu0 %v841
    %843 = vmatprep.subr.mxu0 0.0
    %v844 = vand.u32 %v735, 4294901760
    %v845 = vsub.f32 %v735, %v844
    %v846 = vand.u32 %v845, 4294901760
    %v847 = vsub.f32 %v845, %v846
    %v848 = vand.u32 %v847, 4294901760
    %849 = vmatpush1.msra.mxu0 %v848
    %850 = vmatprep.subr.mxu0 0.0
    %v851 = vand.u32 %v734, 4294901760
    %v852 = vsub.f32 %v734, %v851
    %v853 = vand.u32 %v852, 4294901760
    %v854 = vsub.f32 %v852, %v853
    %v855 = vand.u32 %v854, 4294901760
    %856 = vmatpush1.msra.mxu0 %v855
    %857 = vmatprep.subr.mxu0 0.0
    %v858 = vand.u32 %v733, 4294901760
    %v859 = vsub.f32 %v733, %v858
    %v860 = vand.u32 %v859, 4294901760
    %v861 = vsub.f32 %v859, %v860
    %v862 = vand.u32 %v861, 4294901760
    %863 = vmatpush1.msra.mxu0 %v862
    %864 = vmatprep.subr.mxu0 0.0
    %v865 = vand.u32 %v732, 4294901760
    %v866 = vsub.f32 %v732, %v865
    %v867 = vand.u32 %v866, 4294901760
    %v868 = vsub.f32 %v866, %v867
    %v869 = vand.u32 %v868, 4294901760
    %870 = vmatpush1.msra.mxu0 %v869
    %871 = vmatprep.subr.mxu0 0.0
    %v872 = vand.u32 %v731, 4294901760
    %v873 = vsub.f32 %v731, %v872
    %v874 = vand.u32 %v873, 4294901760
    %v875 = vsub.f32 %v873, %v874
    %v876 = vand.u32 %v875, 4294901760
    %877 = vmatpush1.msra.mxu0 %v876
    %878 = vmatprep.subr.mxu0 0.0
    %v879 = vand.u32 %v730, 4294901760
    %v880 = vsub.f32 %v730, %v879
    %v881 = vand.u32 %v880, 4294901760
    %v882 = vsub.f32 %v880, %v881
    %v883 = vand.u32 %v882, 4294901760
    %884 = vmatpush1.msra.mxu0 %v883
    %885 = vmatprep.subr.mxu0 0.0
    %v886 = vand.u32 %v729, 4294901760
    %v887 = vsub.f32 %v729, %v886
    %v888 = vand.u32 %v887, 4294901760
    %v889 = vsub.f32 %v887, %v888
    %v890 = vand.u32 %v889, 4294901760
    %891 = vmatpush1.msra.mxu0 %v890
    %892 = vmatprep.subr.mxu0 0.0
    %v893 = vand.u32 %v728, 4294901760
    %v894 = vsub.f32 %v728, %v893
    %v895 = vand.u32 %v894, 4294901760
    %v896 = vsub.f32 %v894, %v895
    %v897 = vand.u32 %v896, 4294901760
    %898 = vmatpush1.msra.mxu0 %v897
    %899 = vmatprep.subr.mxu0 0.0
    %v900 = vand.u32 %v727, 4294901760
    %v901 = vsub.f32 %v727, %v900
    %v902 = vand.u32 %v901, 4294901760
    %v903 = vsub.f32 %v901, %v902
    %v904 = vand.u32 %v903, 4294901760
    %905 = vmatpush1.msra.mxu0 %v904
    %906 = vmatprep.subr.mxu0 0.0
    %v907 = vand.u32 %v726, 4294901760
    %v908 = vsub.f32 %v726, %v907
    %v909 = vand.u32 %v908, 4294901760
    %v910 = vsub.f32 %v908, %v909
    %v911 = vand.u32 %v910, 4294901760
    %912 = vmatpush1.msra.mxu0 %v911
    %913 = vmatprep.subr.mxu0 0.0
    %v914 = vand.u32 %v725, 4294901760
    %v915 = vsub.f32 %v725, %v914
    %v916 = vand.u32 %v915, 4294901760
    %v917 = vsub.f32 %v915, %v916
    %v918 = vand.u32 %v917, 4294901760
    %919 = vmatpush1.msra.mxu0 %v918
    %920 = vmatprep.subr.mxu0 0.0
    %v921 = vand.u32 %v724, 4294901760
    %v922 = vsub.f32 %v724, %v921
    %v923 = vand.u32 %v922, 4294901760
    %v924 = vsub.f32 %v922, %v923
    %v925 = vand.u32 %v924, 4294901760
    %926 = vmatpush1.msra.mxu0 %v925
    %927 = vmatprep.subr.mxu0 0.0
    %v928 = vand.u32 %v723, 4294901760
    %v929 = vsub.f32 %v723, %v928
    %v930 = vand.u32 %v929, 4294901760
    %v931 = vsub.f32 %v929, %v930
    %v932 = vand.u32 %v931, 4294901760
    %933 = vmatpush1.msra.mxu0 %v932
    %934 = vmatprep.subr.mxu0 0.0
    %v935 = vand.u32 %v722, 4294901760
    %v936 = vsub.f32 %v722, %v935
    %v937 = vand.u32 %v936, 4294901760
    %v938 = vsub.f32 %v936, %v937
    %v939 = vand.u32 %v938, 4294901760
    %940 = vmatpush1.msra.mxu0 %v939
    %941 = vmatprep.subr.mxu0 0.0
    %v942 = vand.u32 %v721, 4294901760
    %v943 = vsub.f32 %v721, %v942
    %v944 = vand.u32 %v943, 4294901760
    %v945 = vsub.f32 %v943, %v944
    %v946 = vand.u32 %v945, 4294901760
    %947 = vmatpush1.msra.mxu0 %v946
    %948 = vmatprep.subr.mxu0 0.0
    %949 = vmatpush2.msra.mxu0 0.0
    %950 = vmatprep.subr.mxu0 0.0
    %951 = vmatpush2.msra.mxu0 0.0
    %952 = vmatprep.subr.mxu0 0.0
    %953 = vmatpush2.msra.mxu0 0.0
    %954 = vmatprep.subr.mxu0 0.0
    %955 = vmatpush2.msra.mxu0 0.0
    %956 = vmatprep.subr.mxu0 0.0
    %957 = vmatpush2.msra.mxu0 0.0
    %958 = vmatprep.subr.mxu0 0.0
    %959 = vmatpush2.msra.mxu0 0.0
    %960 = vmatprep.subr.mxu0 0.0
    %961 = vmatpush2.msra.mxu0 0.0
    %962 = vmatprep.subr.mxu0 0.0
    %963 = vmatpush2.msra.mxu0 0.0
    %964 = vmatprep.subr.mxu0 0.0
    %965 = vmatpush2.msra.mxu0 0.0
    %966 = vmatprep.subr.mxu0 0.0
    %967 = vmatpush2.msra.mxu0 0.0
    %968 = vmatprep.subr.mxu0 0.0
    %969 = vmatpush2.msra.mxu0 0.0
    %970 = vmatprep.subr.mxu0 0.0
    %971 = vmatpush2.msra.mxu0 0.0
    %972 = vmatprep.subr.mxu0 0.0
    %973 = vmatpush2.msra.mxu0 0.0
    %974 = vmatprep.subr.mxu0 0.0
    %975 = vmatpush2.msra.mxu0 0.0
    %976 = vmatprep.subr.mxu0 0.0
    %977 = vmatpush2.msra.mxu0 0.0
    %978 = vmatprep.subr.mxu0 0.0
    %979 = vmatpush2.msra.mxu0 0.0
    %980 = vmatprep.mubr.f32.mxu0 0.0
    %v981 = vand.u32 %v719, 4294901760
    %982 = vmatmul.mubr.f32.gmra.mxu0 %v981
    %v983 = vpop.f32.mrf.mxu0
    %v984 = vadd.f32 %v833, %v983
    %v985 = vpop.f32.mrf.mxu0
    %986 = vdwg.mxu0
    %987 = vmatprep.subr.mxu0 0.0
    %v988 = vand.u32 %v736, 4294901760
    %v989 = vsub.f32 %v736, %v988
    %990 = vmatpush1.msra.mxu0 %v989
    %991 = vmatprep.subr.mxu0 0.0
    %v992 = vand.u32 %v735, 4294901760
    %v993 = vsub.f32 %v735, %v992
    %994 = vmatpush1.msra.mxu0 %v993
    %995 = vmatprep.subr.mxu0 0.0
    %v996 = vand.u32 %v734, 4294901760
    %v997 = vsub.f32 %v734, %v996
    %998 = vmatpush1.msra.mxu0 %v997
    %999 = vmatprep.subr.mxu0 0.0
    %v1000 = vand.u32 %v733, 4294901760
    %v1001 = vsub.f32 %v733, %v1000
    %1002 = vmatpush1.msra.mxu0 %v1001
    %1003 = vmatprep.subr.mxu0 0.0
    %v1004 = vand.u32 %v732, 4294901760
    %v1005 = vsub.f32 %v732, %v1004
    %1006 = vmatpush1.msra.mxu0 %v1005
    %1007 = vmatprep.subr.mxu0 0.0
    %v1008 = vand.u32 %v731, 4294901760
    %v1009 = vsub.f32 %v731, %v1008
    %1010 = vmatpush1.msra.mxu0 %v1009
    %1011 = vmatprep.subr.mxu0 0.0
    %v1012 = vand.u32 %v730, 4294901760
    %v1013 = vsub.f32 %v730, %v1012
    %1014 = vmatpush1.msra.mxu0 %v1013
    %1015 = vmatprep.subr.mxu0 0.0
    %v1016 = vand.u32 %v729, 4294901760
    %v1017 = vsub.f32 %v729, %v1016
    %1018 = vmatpush1.msra.mxu0 %v1017
    %1019 = vmatprep.subr.mxu0 0.0
    %v1020 = vand.u32 %v728, 4294901760
    %v1021 = vsub.f32 %v728, %v1020
    %1022 = vmatpush1.msra.mxu0 %v1021
    %1023 = vmatprep.subr.mxu0 0.0
    %v1024 = vand.u32 %v727, 4294901760
    %v1025 = vsub.f32 %v727, %v1024
    %1026 = vmatpush1.msra.mxu0 %v1025
    %1027 = vmatprep.subr.mxu0 0.0
    %v1028 = vand.u32 %v726, 4294901760
    %v1029 = vsub.f32 %v726, %v1028
    %1030 = vmatpush1.msra.mxu0 %v1029
    %1031 = vmatprep.subr.mxu0 0.0
    %v1032 = vand.u32 %v725, 4294901760
    %v1033 = vsub.f32 %v725, %v1032
    %1034 = vmatpush1.msra.mxu0 %v1033
    %1035 = vmatprep.subr.mxu0 0.0
    %v1036 = vand.u32 %v724, 4294901760
    %v1037 = vsub.f32 %v724, %v1036
    %1038 = vmatpush1.msra.mxu0 %v1037
    %1039 = vmatprep.subr.mxu0 0.0
    %v1040 = vand.u32 %v723, 4294901760
    %v1041 = vsub.f32 %v723, %v1040
    %1042 = vmatpush1.msra.mxu0 %v1041
    %1043 = vmatprep.subr.mxu0 0.0
    %v1044 = vand.u32 %v722, 4294901760
    %v1045 = vsub.f32 %v722, %v1044
    %1046 = vmatpush1.msra.mxu0 %v1045
    %1047 = vmatprep.subr.mxu0 0.0
    %v1048 = vand.u32 %v721, 4294901760
    %v1049 = vsub.f32 %v721, %v1048
    %1050 = vmatpush1.msra.mxu0 %v1049
    %1051 = vmatprep.subr.mxu0 0.0
    %1052 = vmatpush2.msra.mxu0 0.0
    %1053 = vmatprep.subr.mxu0 0.0
    %1054 = vmatpush2.msra.mxu0 0.0
    %1055 = vmatprep.subr.mxu0 0.0
    %1056 = vmatpush2.msra.mxu0 0.0
    %1057 = vmatprep.subr.mxu0 0.0
    %1058 = vmatpush2.msra.mxu0 0.0
    %1059 = vmatprep.subr.mxu0 0.0
    %1060 = vmatpush2.msra.mxu0 0.0
    %1061 = vmatprep.subr.mxu0 0.0
    %1062 = vmatpush2.msra.mxu0 0.0
    %1063 = vmatprep.subr.mxu0 0.0
    %1064 = vmatpush2.msra.mxu0 0.0
    %1065 = vmatprep.subr.mxu0 0.0
    %1066 = vmatpush2.msra.mxu0 0.0
    %1067 = vmatprep.subr.mxu0 0.0
    %1068 = vmatpush2.msra.mxu0 0.0
    %1069 = vmatprep.subr.mxu0 0.0
    %1070 = vmatpush2.msra.mxu0 0.0
    %1071 = vmatprep.subr.mxu0 0.0
    %1072 = vmatpush2.msra.mxu0 0.0
    %1073 = vmatprep.subr.mxu0 0.0
    %1074 = vmatpush2.msra.mxu0 0.0
    %1075 = vmatprep.subr.mxu0 0.0
    %1076 = vmatpush2.msra.mxu0 0.0
    %1077 = vmatprep.subr.mxu0 0.0
    %1078 = vmatpush2.msra.mxu0 0.0
    %1079 = vmatprep.subr.mxu0 0.0
    %1080 = vmatpush2.msra.mxu0 0.0
    %1081 = vmatprep.subr.mxu0 0.0
    %1082 = vmatpush2.msra.mxu0 0.0
    %1083 = vmatprep.mubr.f32.mxu0 0.0
    %v1084 = vand.u32 %v719, 4294901760
    %v1085 = vsub.f32 %v719, %v1084
    %1086 = vmatmul.mubr.f32.gmra.mxu0 %v1085
    %v1087 = vpop.f32.mrf.mxu0
    %v1088 = vadd.f32 %v984, %v1087
    %v1089 = vpop.f32.mrf.mxu0
    %1090 = vdwg.mxu0
    %1091 = vmatprep.subr.mxu0 0.0
    %v1092 = vand.u32 %v736, 4294901760
    %1093 = vmatpush1.msra.mxu0 %v1092
    %1094 = vmatprep.subr.mxu0 0.0
    %v1095 = vand.u32 %v735, 4294901760
    %1096 = vmatpush1.msra.mxu0 %v1095
    %1097 = vmatprep.subr.mxu0 0.0
    %v1098 = vand.u32 %v734, 4294901760
    %1099 = vmatpush1.msra.mxu0 %v1098
    %1100 = vmatprep.subr.mxu0 0.0
    %v1101 = vand.u32 %v733, 4294901760
    %1102 = vmatpush1.msra.mxu0 %v1101
    %1103 = vmatprep.subr.mxu0 0.0
    %v1104 = vand.u32 %v732, 4294901760
    %1105 = vmatpush1.msra.mxu0 %v1104
    %1106 = vmatprep.subr.mxu0 0.0
    %v1107 = vand.u32 %v731, 4294901760
    %1108 = vmatpush1.msra.mxu0 %v1107
    %1109 = vmatprep.subr.mxu0 0.0
    %v1110 = vand.u32 %v730, 4294901760
    %1111 = vmatpush1.msra.mxu0 %v1110
    %1112 = vmatprep.subr.mxu0 0.0
    %v1113 = vand.u32 %v729, 4294901760
    %1114 = vmatpush1.msra.mxu0 %v1113
    %1115 = vmatprep.subr.mxu0 0.0
    %v1116 = vand.u32 %v728, 4294901760
    %1117 = vmatpush1.msra.mxu0 %v1116
    %1118 = vmatprep.subr.mxu0 0.0
    %v1119 = vand.u32 %v727, 4294901760
    %1120 = vmatpush1.msra.mxu0 %v1119
    %1121 = vmatprep.subr.mxu0 0.0
    %v1122 = vand.u32 %v726, 4294901760
    %1123 = vmatpush1.msra.mxu0 %v1122
    %1124 = vmatprep.subr.mxu0 0.0
    %v1125 = vand.u32 %v725, 4294901760
    %1126 = vmatpush1.msra.mxu0 %v1125
    %1127 = vmatprep.subr.mxu0 0.0
    %v1128 = vand.u32 %v724, 4294901760
    %1129 = vmatpush1.msra.mxu0 %v1128
    %1130 = vmatprep.subr.mxu0 0.0
    %v1131 = vand.u32 %v723, 4294901760
    %1132 = vmatpush1.msra.mxu0 %v1131
    %1133 = vmatprep.subr.mxu0 0.0
    %v1134 = vand.u32 %v722, 4294901760
    %1135 = vmatpush1.msra.mxu0 %v1134
    %1136 = vmatprep.subr.mxu0 0.0
    %v1137 = vand.u32 %v721, 4294901760
    %1138 = vmatpush1.msra.mxu0 %v1137
    %1139 = vmatprep.subr.mxu0 0.0
    %1140 = vmatpush2.msra.mxu0 0.0
    %1141 = vmatprep.subr.mxu0 0.0
    %1142 = vmatpush2.msra.mxu0 0.0
    %1143 = vmatprep.subr.mxu0 0.0
    %1144 = vmatpush2.msra.mxu0 0.0
    %1145 = vmatprep.subr.mxu0 0.0
    %1146 = vmatpush2.msra.mxu0 0.0
    %1147 = vmatprep.subr.mxu0 0.0
    %1148 = vmatpush2.msra.mxu0 0.0
    %1149 = vmatprep.subr.mxu0 0.0
    %1150 = vmatpush2.msra.mxu0 0.0
    %1151 = vmatprep.subr.mxu0 0.0
    %1152 = vmatpush2.msra.mxu0 0.0
    %1153 = vmatprep.subr.mxu0 0.0
    %1154 = vmatpush2.msra.mxu0 0.0
    %1155 = vmatprep.subr.mxu0 0.0
    %1156 = vmatpush2.msra.mxu0 0.0
    %1157 = vmatprep.subr.mxu0 0.0
    %1158 = vmatpush2.msra.mxu0 0.0
    %1159 = vmatprep.subr.mxu0 0.0
    %1160 = vmatpush2.msra.mxu0 0.0
    %1161 = vmatprep.subr.mxu0 0.0
    %1162 = vmatpush2.msra.mxu0 0.0
    %1163 = vmatprep.subr.mxu0 0.0
    %1164 = vmatpush2.msra.mxu0 0.0
    %1165 = vmatprep.subr.mxu0 0.0
    %1166 = vmatpush2.msra.mxu0 0.0
    %1167 = vmatprep.subr.mxu0 0.0
    %1168 = vmatpush2.msra.mxu0 0.0
    %1169 = vmatprep.subr.mxu0 0.0
    %1170 = vmatpush2.msra.mxu0 0.0
    %1171 = vmatprep.mubr.f32.mxu0 0.0
    %v1172 = vand.u32 %v719, 4294901760
    %v1173 = vsub.f32 %v719, %v1172
    %v1174 = vand.u32 %v1173, 4294901760
    %1175 = vmatmul.mubr.f32.gmra.mxu0 %v1174
    %v1176 = vpop.f32.mrf.mxu0
    %v1177 = vadd.f32 %v1088, %v1176
    %v1178 = vpop.f32.mrf.mxu0
    %1179 = vdwg.mxu0
    %1180 = vmatprep.subr.mxu0 0.0
    %v1181 = vand.u32 %v736, 4294901760
    %v1182 = vsub.f32 %v736, %v1181
    %v1183 = vand.u32 %v1182, 4294901760
    %1184 = vmatpush1.msra.mxu0 %v1183
    %1185 = vmatprep.subr.mxu0 0.0
    %v1186 = vand.u32 %v735, 4294901760
    %v1187 = vsub.f32 %v735, %v1186
    %v1188 = vand.u32 %v1187, 4294901760
    %1189 = vmatpush1.msra.mxu0 %v1188
    %1190 = vmatprep.subr.mxu0 0.0
    %v1191 = vand.u32 %v734, 4294901760
    %v1192 = vsub.f32 %v734, %v1191
    %v1193 = vand.u32 %v1192, 4294901760
    %1194 = vmatpush1.msra.mxu0 %v1193
    %1195 = vmatprep.subr.mxu0 0.0
    %v1196 = vand.u32 %v733, 4294901760
    %v1197 = vsub.f32 %v733, %v1196
    %v1198 = vand.u32 %v1197, 4294901760
    %1199 = vmatpush1.msra.mxu0 %v1198
    %1200 = vmatprep.subr.mxu0 0.0
    %v1201 = vand.u32 %v732, 4294901760
    %v1202 = vsub.f32 %v732, %v1201
    %v1203 = vand.u32 %v1202, 4294901760
    %1204 = vmatpush1.msra.mxu0 %v1203
    %1205 = vmatprep.subr.mxu0 0.0
    %v1206 = vand.u32 %v731, 4294901760
    %v1207 = vsub.f32 %v731, %v1206
    %v1208 = vand.u32 %v1207, 4294901760
    %1209 = vmatpush1.msra.mxu0 %v1208
    %1210 = vmatprep.subr.mxu0 0.0
    %v1211 = vand.u32 %v730, 4294901760
    %v1212 = vsub.f32 %v730, %v1211
    %v1213 = vand.u32 %v1212, 4294901760
    %1214 = vmatpush1.msra.mxu0 %v1213
    %1215 = vmatprep.subr.mxu0 0.0
    %v1216 = vand.u32 %v729, 4294901760
    %v1217 = vsub.f32 %v729, %v1216
    %v1218 = vand.u32 %v1217, 4294901760
    %1219 = vmatpush1.msra.mxu0 %v1218
    %1220 = vmatprep.subr.mxu0 0.0
    %v1221 = vand.u32 %v728, 4294901760
    %v1222 = vsub.f32 %v728, %v1221
    %v1223 = vand.u32 %v1222, 4294901760
    %1224 = vmatpush1.msra.mxu0 %v1223
    %1225 = vmatprep.subr.mxu0 0.0
    %v1226 = vand.u32 %v727, 4294901760
    %v1227 = vsub.f32 %v727, %v1226
    %v1228 = vand.u32 %v1227, 4294901760
    %1229 = vmatpush1.msra.mxu0 %v1228
    %1230 = vmatprep.subr.mxu0 0.0
    %v1231 = vand.u32 %v726, 4294901760
    %v1232 = vsub.f32 %v726, %v1231
    %v1233 = vand.u32 %v1232, 4294901760
    %1234 = vmatpush1.msra.mxu0 %v1233
    %1235 = vmatprep.subr.mxu0 0.0
    %v1236 = vand.u32 %v725, 4294901760
    %v1237 = vsub.f32 %v725, %v1236
    %v1238 = vand.u32 %v1237, 4294901760
    %1239 = vmatpush1.msra.mxu0 %v1238
    %1240 = vmatprep.subr.mxu0 0.0
    %v1241 = vand.u32 %v724, 4294901760
    %v1242 = vsub.f32 %v724, %v1241
    %v1243 = vand.u32 %v1242, 4294901760
    %1244 = vmatpush1.msra.mxu0 %v1243
    %1245 = vmatprep.subr.mxu0 0.0
    %v1246 = vand.u32 %v723, 4294901760
    %v1247 = vsub.f32 %v723, %v1246
    %v1248 = vand.u32 %v1247, 4294901760
    %1249 = vmatpush1.msra.mxu0 %v1248
    %1250 = vmatprep.subr.mxu0 0.0
    %v1251 = vand.u32 %v722, 4294901760
    %v1252 = vsub.f32 %v722, %v1251
    %v1253 = vand.u32 %v1252, 4294901760
    %1254 = vmatpush1.msra.mxu0 %v1253
    %1255 = vmatprep.subr.mxu0 0.0
    %v1256 = vand.u32 %v721, 4294901760
    %v1257 = vsub.f32 %v721, %v1256
    %v1258 = vand.u32 %v1257, 4294901760
    %1259 = vmatpush1.msra.mxu0 %v1258
    %1260 = vmatprep.subr.mxu0 0.0
    %1261 = vmatpush2.msra.mxu0 0.0
    %1262 = vmatprep.subr.mxu0 0.0
    %1263 = vmatpush2.msra.mxu0 0.0
    %1264 = vmatprep.subr.mxu0 0.0
    %1265 = vmatpush2.msra.mxu0 0.0
    %1266 = vmatprep.subr.mxu0 0.0
    %1267 = vmatpush2.msra.mxu0 0.0
    %1268 = vmatprep.subr.mxu0 0.0
    %1269 = vmatpush2.msra.mxu0 0.0
    %1270 = vmatprep.subr.mxu0 0.0
    %1271 = vmatpush2.msra.mxu0 0.0
    %1272 = vmatprep.subr.mxu0 0.0
    %1273 = vmatpush2.msra.mxu0 0.0
    %1274 = vmatprep.subr.mxu0 0.0
    %1275 = vmatpush2.msra.mxu0 0.0
    %1276 = vmatprep.subr.mxu0 0.0
    %1277 = vmatpush2.msra.mxu0 0.0
    %1278 = vmatprep.subr.mxu0 0.0
    %1279 = vmatpush2.msra.mxu0 0.0
    %1280 = vmatprep.subr.mxu0 0.0
    %1281 = vmatpush2.msra.mxu0 0.0
    %1282 = vmatprep.subr.mxu0 0.0
    %1283 = vmatpush2.msra.mxu0 0.0
    %1284 = vmatprep.subr.mxu0 0.0
    %1285 = vmatpush2.msra.mxu0 0.0
    %1286 = vmatprep.subr.mxu0 0.0
    %1287 = vmatpush2.msra.mxu0 0.0
    %1288 = vmatprep.subr.mxu0 0.0
    %1289 = vmatpush2.msra.mxu0 0.0
    %1290 = vmatprep.subr.mxu0 0.0
    %1291 = vmatpush2.msra.mxu0 0.0
    %1292 = vmatprep.mubr.f32.mxu0 0.0
    %v1293 = vand.u32 %v719, 4294901760
    %1294 = vmatmul.mubr.f32.gmra.mxu0 %v1293
    %v1295 = vpop.f32.mrf.mxu0
    %v1296 = vadd.f32 %v1177, %v1295
    %v1297 = vpop.f32.mrf.mxu0
    %1298 = vdwg.mxu0
    %1299 = vmatprep.subr.mxu0 0.0
    %v1300 = vand.u32 %v736, 4294901760
    %1301 = vmatpush1.msra.mxu0 %v1300
    %1302 = vmatprep.subr.mxu0 0.0
    %v1303 = vand.u32 %v735, 4294901760
    %1304 = vmatpush1.msra.mxu0 %v1303
    %1305 = vmatprep.subr.mxu0 0.0
    %v1306 = vand.u32 %v734, 4294901760
    %1307 = vmatpush1.msra.mxu0 %v1306
    %1308 = vmatprep.subr.mxu0 0.0
    %v1309 = vand.u32 %v733, 4294901760
    %1310 = vmatpush1.msra.mxu0 %v1309
    %1311 = vmatprep.subr.mxu0 0.0
    %v1312 = vand.u32 %v732, 4294901760
    %1313 = vmatpush1.msra.mxu0 %v1312
    %1314 = vmatprep.subr.mxu0 0.0
    %v1315 = vand.u32 %v731, 4294901760
    %1316 = vmatpush1.msra.mxu0 %v1315
    %1317 = vmatprep.subr.mxu0 0.0
    %v1318 = vand.u32 %v730, 4294901760
    %1319 = vmatpush1.msra.mxu0 %v1318
    %1320 = vmatprep.subr.mxu0 0.0
    %v1321 = vand.u32 %v729, 4294901760
    %1322 = vmatpush1.msra.mxu0 %v1321
    %1323 = vmatprep.subr.mxu0 0.0
    %v1324 = vand.u32 %v728, 4294901760
    %1325 = vmatpush1.msra.mxu0 %v1324
    %1326 = vmatprep.subr.mxu0 0.0
    %v1327 = vand.u32 %v727, 4294901760
    %1328 = vmatpush1.msra.mxu0 %v1327
    %1329 = vmatprep.subr.mxu0 0.0
    %v1330 = vand.u32 %v726, 4294901760
    %1331 = vmatpush1.msra.mxu0 %v1330
    %1332 = vmatprep.subr.mxu0 0.0
    %v1333 = vand.u32 %v725, 4294901760
    %1334 = vmatpush1.msra.mxu0 %v1333
    %1335 = vmatprep.subr.mxu0 0.0
    %v1336 = vand.u32 %v724, 4294901760
    %1337 = vmatpush1.msra.mxu0 %v1336
    %1338 = vmatprep.subr.mxu0 0.0
    %v1339 = vand.u32 %v723, 4294901760
    %1340 = vmatpush1.msra.mxu0 %v1339
    %1341 = vmatprep.subr.mxu0 0.0
    %v1342 = vand.u32 %v722, 4294901760
    %1343 = vmatpush1.msra.mxu0 %v1342
    %1344 = vmatprep.subr.mxu0 0.0
    %v1345 = vand.u32 %v721, 4294901760
    %1346 = vmatpush1.msra.mxu0 %v1345
    %1347 = vmatprep.subr.mxu0 0.0
    %1348 = vmatpush2.msra.mxu0 0.0
    %1349 = vmatprep.subr.mxu0 0.0
    %1350 = vmatpush2.msra.mxu0 0.0
    %1351 = vmatprep.subr.mxu0 0.0
    %1352 = vmatpush2.msra.mxu0 0.0
    %1353 = vmatprep.subr.mxu0 0.0
    %1354 = vmatpush2.msra.mxu0 0.0
    %1355 = vmatprep.subr.mxu0 0.0
    %1356 = vmatpush2.msra.mxu0 0.0
    %1357 = vmatprep.subr.mxu0 0.0
    %1358 = vmatpush2.msra.mxu0 0.0
    %1359 = vmatprep.subr.mxu0 0.0
    %1360 = vmatpush2.msra.mxu0 0.0
    %1361 = vmatprep.subr.mxu0 0.0
    %1362 = vmatpush2.msra.mxu0 0.0
    %1363 = vmatprep.subr.mxu0 0.0
    %1364 = vmatpush2.msra.mxu0 0.0
    %1365 = vmatprep.subr.mxu0 0.0
    %1366 = vmatpush2.msra.mxu0 0.0
    %1367 = vmatprep.subr.mxu0 0.0
    %1368 = vmatpush2.msra.mxu0 0.0
    %1369 = vmatprep.subr.mxu0 0.0
    %1370 = vmatpush2.msra.mxu0 0.0
    %1371 = vmatprep.subr.mxu0 0.0
    %1372 = vmatpush2.msra.mxu0 0.0
    %1373 = vmatprep.subr.mxu0 0.0
    %1374 = vmatpush2.msra.mxu0 0.0
    %1375 = vmatprep.subr.mxu0 0.0
    %1376 = vmatpush2.msra.mxu0 0.0
    %1377 = vmatprep.subr.mxu0 0.0
    %1378 = vmatpush2.msra.mxu0 0.0
    %1379 = vmatprep.mubr.f32.mxu0 0.0
    %v1380 = vand.u32 %v719, 4294901760
    %1381 = vmatmul.mubr.f32.gmra.mxu0 %v1380
    %v1382 = vpop.f32.mrf.mxu0
    %v1383 = vadd.f32 %v1296, %v1382
    %v1384 = vpop.f32.mrf.mxu0
    %1385 = vdwg.mxu0
    %v1386 = vmax.f32 %v1383, 0.0
    %s1387 = scalar_lea.vmem [#allocation5], 256
    %v1388 = vld [vmem:[%s1387] sm:$0xff]
    %v1389 = vld [vmem:[%s1387 + $0x8] sm:$0xff]
    %v1390 = vld [vmem:[%s1387 + $0x10] sm:$0xff]
    %v1391 = vld [vmem:[%s1387 + $0x18] sm:$0xff]
    %v1392 = vld [vmem:[%s1387 + $0x20] sm:$0xff]
    %v1393 = vld [vmem:[%s1387 + $0x28] sm:$0xff]
    %v1394 = vld [vmem:[%s1387 + $0x30] sm:$0xff]
    %v1395 = vld [vmem:[%s1387 + $0x38] sm:$0xff]
    %v1396 = vld [vmem:[%s1387 + $0x40] sm:$0xff]
    %v1397 = vld [vmem:[%s1387 + $0x48] sm:$0xff]
    %v1398 = vld [vmem:[%s1387 + $0x50] sm:$0xff]
    %v1399 = vld [vmem:[%s1387 + $0x58] sm:$0xff]
    %v1400 = vld [vmem:[%s1387 + $0x60] sm:$0xff]
    %v1401 = vld [vmem:[%s1387 + $0x68] sm:$0xff]
    %v1402 = vld [vmem:[%s1387 + $0x70] sm:$0xff]
    %v1403 = vld [vmem:[%s1387 + $0x78] sm:$0xff]
    %s1404 = scalar_lea.vmem [#allocation7], 2
    %v1405 = vld [vmem:[%s1404] sm:$0x1]
    %v1407 = vlaneseq
    %v1408 = vshrl.u32 %v1407, 7
    %v1409 = vsub.s32 0, %v1408
    %v1410 = vrot.slane %v1405, %v1409
    %1412 = vmatprep.subr.mxu0 0.0
    %v1413 = vand.u32 %v1403, 4294901760
    %1414 = vmatpush1.msra.mxu0 %v1413
    %1415 = vmatprep.subr.mxu0 0.0
    %v1416 = vand.u32 %v1402, 4294901760
    %1417 = vmatpush1.msra.mxu0 %v1416
    %1418 = vmatprep.subr.mxu0 0.0
    %v1419 = vand.u32 %v1401, 4294901760
    %1420 = vmatpush1.msra.mxu0 %v1419
    %1421 = vmatprep.subr.mxu0 0.0
    %v1422 = vand.u32 %v1400, 4294901760
    %1423 = vmatpush1.msra.mxu0 %v1422
    %1424 = vmatprep.subr.mxu0 0.0
    %v1425 = vand.u32 %v1399, 4294901760
    %1426 = vmatpush1.msra.mxu0 %v1425
    %1427 = vmatprep.subr.mxu0 0.0
    %v1428 = vand.u32 %v1398, 4294901760
    %1429 = vmatpush1.msra.mxu0 %v1428
    %1430 = vmatprep.subr.mxu0 0.0
    %v1431 = vand.u32 %v1397, 4294901760
    %1432 = vmatpush1.msra.mxu0 %v1431
    %1433 = vmatprep.subr.mxu0 0.0
    %v1434 = vand.u32 %v1396, 4294901760
    %1435 = vmatpush1.msra.mxu0 %v1434
    %1436 = vmatprep.subr.mxu0 0.0
    %v1437 = vand.u32 %v1395, 4294901760
    %1438 = vmatpush1.msra.mxu0 %v1437
    %1439 = vmatprep.subr.mxu0 0.0
    %v1440 = vand.u32 %v1394, 4294901760
    %1441 = vmatpush1.msra.mxu0 %v1440
    %1442 = vmatprep.subr.mxu0 0.0
    %v1443 = vand.u32 %v1393, 4294901760
    %1444 = vmatpush1.msra.mxu0 %v1443
    %1445 = vmatprep.subr.mxu0 0.0
    %v1446 = vand.u32 %v1392, 4294901760
    %1447 = vmatpush1.msra.mxu0 %v1446
    %1448 = vmatprep.subr.mxu0 0.0
    %v1449 = vand.u32 %v1391, 4294901760
    %1450 = vmatpush1.msra.mxu0 %v1449
    %1451 = vmatprep.subr.mxu0 0.0
    %v1452 = vand.u32 %v1390, 4294901760
    %1453 = vmatpush1.msra.mxu0 %v1452
    %1454 = vmatprep.subr.mxu0 0.0
    %v1455 = vand.u32 %v1389, 4294901760
    %1456 = vmatpush1.msra.mxu0 %v1455
    %1457 = vmatprep.subr.mxu0 0.0
    %v1458 = vand.u32 %v1388, 4294901760
    %1459 = vmatpush1.msra.mxu0 %v1458
    %1460 = vmatprep.subr.mxu0 0.0
    %1461 = vmatpush2.msra.mxu0 0.0
    %1462 = vmatprep.subr.mxu0 0.0
    %1463 = vmatpush2.msra.mxu0 0.0
    %1464 = vmatprep.subr.mxu0 0.0
    %1465 = vmatpush2.msra.mxu0 0.0
    %1466 = vmatprep.subr.mxu0 0.0
    %1467 = vmatpush2.msra.mxu0 0.0
    %1468 = vmatprep.subr.mxu0 0.0
    %1469 = vmatpush2.msra.mxu0 0.0
    %1470 = vmatprep.subr.mxu0 0.0
    %1471 = vmatpush2.msra.mxu0 0.0
    %1472 = vmatprep.subr.mxu0 0.0
    %1473 = vmatpush2.msra.mxu0 0.0
    %1474 = vmatprep.subr.mxu0 0.0
    %1475 = vmatpush2.msra.mxu0 0.0
    %1476 = vmatprep.subr.mxu0 0.0
    %1477 = vmatpush2.msra.mxu0 0.0
    %1478 = vmatprep.subr.mxu0 0.0
    %1479 = vmatpush2.msra.mxu0 0.0
    %1480 = vmatprep.subr.mxu0 0.0
    %1481 = vmatpush2.msra.mxu0 0.0
    %1482 = vmatprep.subr.mxu0 0.0
    %1483 = vmatpush2.msra.mxu0 0.0
    %1484 = vmatprep.subr.mxu0 0.0
    %1485 = vmatpush2.msra.mxu0 0.0
    %1486 = vmatprep.subr.mxu0 0.0
    %1487 = vmatpush2.msra.mxu0 0.0
    %1488 = vmatprep.subr.mxu0 0.0
    %1489 = vmatpush2.msra.mxu0 0.0
    %1490 = vmatprep.subr.mxu0 0.0
    %1491 = vmatpush2.msra.mxu0 0.0
    %1492 = vmatprep.mubr.f32.mxu0 0.0
    %v1493 = vand.u32 %v1386, 4294901760
    %v1494 = vsub.f32 %v1386, %v1493
    %v1495 = vand.u32 %v1494, 4294901760
    %v1496 = vsub.f32 %v1494, %v1495
    %v1497 = vand.u32 %v1496, 4294901760
    %1498 = vmatmul.mubr.f32.gmra.mxu0 %v1497
    %v1499 = vpop.f32.mrf.mxu0
    %v1500 = vadd.f32 %v1410, %v1499
    %v1501 = vpop.f32.mrf.mxu0
    %1502 = vdwg.mxu0
    %1503 = vmatprep.subr.mxu0 0.0
    %v1504 = vand.u32 %v1403, 4294901760
    %v1505 = vsub.f32 %v1403, %v1504
    %v1506 = vand.u32 %v1505, 4294901760
    %v1507 = vsub.f32 %v1505, %v1506
    %v1508 = vand.u32 %v1507, 4294901760
    %1509 = vmatpush1.msra.mxu0 %v1508
    %1510 = vmatprep.subr.mxu0 0.0
    %v1511 = vand.u32 %v1402, 4294901760
    %v1512 = vsub.f32 %v1402, %v1511
    %v1513 = vand.u32 %v1512, 4294901760
    %v1514 = vsub.f32 %v1512, %v1513
    %v1515 = vand.u32 %v1514, 4294901760
    %1516 = vmatpush1.msra.mxu0 %v1515
    %1517 = vmatprep.subr.mxu0 0.0
    %v1518 = vand.u32 %v1401, 4294901760
    %v1519 = vsub.f32 %v1401, %v1518
    %v1520 = vand.u32 %v1519, 4294901760
    %v1521 = vsub.f32 %v1519, %v1520
    %v1522 = vand.u32 %v1521, 4294901760
    %1523 = vmatpush1.msra.mxu0 %v1522
    %1524 = vmatprep.subr.mxu0 0.0
    %v1525 = vand.u32 %v1400, 4294901760
    %v1526 = vsub.f32 %v1400, %v1525
    %v1527 = vand.u32 %v1526, 4294901760
    %v1528 = vsub.f32 %v1526, %v1527
    %v1529 = vand.u32 %v1528, 4294901760
    %1530 = vmatpush1.msra.mxu0 %v1529
    %1531 = vmatprep.subr.mxu0 0.0
    %v1532 = vand.u32 %v1399, 4294901760
    %v1533 = vsub.f32 %v1399, %v1532
    %v1534 = vand.u32 %v1533, 4294901760
    %v1535 = vsub.f32 %v1533, %v1534
    %v1536 = vand.u32 %v1535, 4294901760
    %1537 = vmatpush1.msra.mxu0 %v1536
    %1538 = vmatprep.subr.mxu0 0.0
    %v1539 = vand.u32 %v1398, 4294901760
    %v1540 = vsub.f32 %v1398, %v1539
    %v1541 = vand.u32 %v1540, 4294901760
    %v1542 = vsub.f32 %v1540, %v1541
    %v1543 = vand.u32 %v1542, 4294901760
    %1544 = vmatpush1.msra.mxu0 %v1543
    %1545 = vmatprep.subr.mxu0 0.0
    %v1546 = vand.u32 %v1397, 4294901760
    %v1547 = vsub.f32 %v1397, %v1546
    %v1548 = vand.u32 %v1547, 4294901760
    %v1549 = vsub.f32 %v1547, %v1548
    %v1550 = vand.u32 %v1549, 4294901760
    %1551 = vmatpush1.msra.mxu0 %v1550
    %1552 = vmatprep.subr.mxu0 0.0
    %v1553 = vand.u32 %v1396, 4294901760
    %v1554 = vsub.f32 %v1396, %v1553
    %v1555 = vand.u32 %v1554, 4294901760
    %v1556 = vsub.f32 %v1554, %v1555
    %v1557 = vand.u32 %v1556, 4294901760
    %1558 = vmatpush1.msra.mxu0 %v1557
    %1559 = vmatprep.subr.mxu0 0.0
    %v1560 = vand.u32 %v1395, 4294901760
    %v1561 = vsub.f32 %v1395, %v1560
    %v1562 = vand.u32 %v1561, 4294901760
    %v1563 = vsub.f32 %v1561, %v1562
    %v1564 = vand.u32 %v1563, 4294901760
    %1565 = vmatpush1.msra.mxu0 %v1564
    %1566 = vmatprep.subr.mxu0 0.0
    %v1567 = vand.u32 %v1394, 4294901760
    %v1568 = vsub.f32 %v1394, %v1567
    %v1569 = vand.u32 %v1568, 4294901760
    %v1570 = vsub.f32 %v1568, %v1569
    %v1571 = vand.u32 %v1570, 4294901760
    %1572 = vmatpush1.msra.mxu0 %v1571
    %1573 = vmatprep.subr.mxu0 0.0
    %v1574 = vand.u32 %v1393, 4294901760
    %v1575 = vsub.f32 %v1393, %v1574
    %v1576 = vand.u32 %v1575, 4294901760
    %v1577 = vsub.f32 %v1575, %v1576
    %v1578 = vand.u32 %v1577, 4294901760
    %1579 = vmatpush1.msra.mxu0 %v1578
    %1580 = vmatprep.subr.mxu0 0.0
    %v1581 = vand.u32 %v1392, 4294901760
    %v1582 = vsub.f32 %v1392, %v1581
    %v1583 = vand.u32 %v1582, 4294901760
    %v1584 = vsub.f32 %v1582, %v1583
    %v1585 = vand.u32 %v1584, 4294901760
    %1586 = vmatpush1.msra.mxu0 %v1585
    %1587 = vmatprep.subr.mxu0 0.0
    %v1588 = vand.u32 %v1391, 4294901760
    %v1589 = vsub.f32 %v1391, %v1588
    %v1590 = vand.u32 %v1589, 4294901760
    %v1591 = vsub.f32 %v1589, %v1590
    %v1592 = vand.u32 %v1591, 4294901760
    %1593 = vmatpush1.msra.mxu0 %v1592
    %1594 = vmatprep.subr.mxu0 0.0
    %v1595 = vand.u32 %v1390, 4294901760
    %v1596 = vsub.f32 %v1390, %v1595
    %v1597 = vand.u32 %v1596, 4294901760
    %v1598 = vsub.f32 %v1596, %v1597
    %v1599 = vand.u32 %v1598, 4294901760
    %1600 = vmatpush1.msra.mxu0 %v1599
    %1601 = vmatprep.subr.mxu0 0.0
    %v1602 = vand.u32 %v1389, 4294901760
    %v1603 = vsub.f32 %v1389, %v1602
    %v1604 = vand.u32 %v1603, 4294901760
    %v1605 = vsub.f32 %v1603, %v1604
    %v1606 = vand.u32 %v1605, 4294901760
    %1607 = vmatpush1.msra.mxu0 %v1606
    %1608 = vmatprep.subr.mxu0 0.0
    %v1609 = vand.u32 %v1388, 4294901760
    %v1610 = vsub.f32 %v1388, %v1609
    %v1611 = vand.u32 %v1610, 4294901760
    %v1612 = vsub.f32 %v1610, %v1611
    %v1613 = vand.u32 %v1612, 4294901760
    %1614 = vmatpush1.msra.mxu0 %v1613
    %1615 = vmatprep.subr.mxu0 0.0
    %1616 = vmatpush2.msra.mxu0 0.0
    %1617 = vmatprep.subr.mxu0 0.0
    %1618 = vmatpush2.msra.mxu0 0.0
    %1619 = vmatprep.subr.mxu0 0.0
    %1620 = vmatpush2.msra.mxu0 0.0
    %1621 = vmatprep.subr.mxu0 0.0
    %1622 = vmatpush2.msra.mxu0 0.0
    %1623 = vmatprep.subr.mxu0 0.0
    %1624 = vmatpush2.msra.mxu0 0.0
    %1625 = vmatprep.subr.mxu0 0.0
    %1626 = vmatpush2.msra.mxu0 0.0
    %1627 = vmatprep.subr.mxu0 0.0
    %1628 = vmatpush2.msra.mxu0 0.0
    %1629 = vmatprep.subr.mxu0 0.0
    %1630 = vmatpush2.msra.mxu0 0.0
    %1631 = vmatprep.subr.mxu0 0.0
    %1632 = vmatpush2.msra.mxu0 0.0
    %1633 = vmatprep.subr.mxu0 0.0
    %1634 = vmatpush2.msra.mxu0 0.0
    %1635 = vmatprep.subr.mxu0 0.0
    %1636 = vmatpush2.msra.mxu0 0.0
    %1637 = vmatprep.subr.mxu0 0.0
    %1638 = vmatpush2.msra.mxu0 0.0
    %1639 = vmatprep.subr.mxu0 0.0
    %1640 = vmatpush2.msra.mxu0 0.0
    %1641 = vmatprep.subr.mxu0 0.0
    %1642 = vmatpush2.msra.mxu0 0.0
    %1643 = vmatprep.subr.mxu0 0.0
    %1644 = vmatpush2.msra.mxu0 0.0
    %1645 = vmatprep.subr.mxu0 0.0
    %1646 = vmatpush2.msra.mxu0 0.0
    %1647 = vmatprep.mubr.f32.mxu0 0.0
    %v1648 = vand.u32 %v1386, 4294901760
    %1649 = vmatmul.mubr.f32.gmra.mxu0 %v1648
    %v1650 = vpop.f32.mrf.mxu0
    %v1651 = vadd.f32 %v1500, %v1650
    %v1652 = vpop.f32.mrf.mxu0
    %1653 = vdwg.mxu0
    %1654 = vmatprep.subr.mxu0 0.0
    %v1655 = vand.u32 %v1403, 4294901760
    %v1656 = vsub.f32 %v1403, %v1655
    %1657 = vmatpush1.msra.mxu0 %v1656
    %1658 = vmatprep.subr.mxu0 0.0
    %v1659 = vand.u32 %v1402, 4294901760
    %v1660 = vsub.f32 %v1402, %v1659
    %1661 = vmatpush1.msra.mxu0 %v1660
    %1662 = vmatprep.subr.mxu0 0.0
    %v1663 = vand.u32 %v1401, 4294901760
    %v1664 = vsub.f32 %v1401, %v1663
    %1665 = vmatpush1.msra.mxu0 %v1664
    %1666 = vmatprep.subr.mxu0 0.0
    %v1667 = vand.u32 %v1400, 4294901760
    %v1668 = vsub.f32 %v1400, %v1667
    %1669 = vmatpush1.msra.mxu0 %v1668
    %1670 = vmatprep.subr.mxu0 0.0
    %v1671 = vand.u32 %v1399, 4294901760
    %v1672 = vsub.f32 %v1399, %v1671
    %1673 = vmatpush1.msra.mxu0 %v1672
    %1674 = vmatprep.subr.mxu0 0.0
    %v1675 = vand.u32 %v1398, 4294901760
    %v1676 = vsub.f32 %v1398, %v1675
    %1677 = vmatpush1.msra.mxu0 %v1676
    %1678 = vmatprep.subr.mxu0 0.0
    %v1679 = vand.u32 %v1397, 4294901760
    %v1680 = vsub.f32 %v1397, %v1679
    %1681 = vmatpush1.msra.mxu0 %v1680
    %1682 = vmatprep.subr.mxu0 0.0
    %v1683 = vand.u32 %v1396, 4294901760
    %v1684 = vsub.f32 %v1396, %v1683
    %1685 = vmatpush1.msra.mxu0 %v1684
    %1686 = vmatprep.subr.mxu0 0.0
    %v1687 = vand.u32 %v1395, 4294901760
    %v1688 = vsub.f32 %v1395, %v1687
    %1689 = vmatpush1.msra.mxu0 %v1688
    %1690 = vmatprep.subr.mxu0 0.0
    %v1691 = vand.u32 %v1394, 4294901760
    %v1692 = vsub.f32 %v1394, %v1691
    %1693 = vmatpush1.msra.mxu0 %v1692
    %1694 = vmatprep.subr.mxu0 0.0
    %v1695 = vand.u32 %v1393, 4294901760
    %v1696 = vsub.f32 %v1393, %v1695
    %1697 = vmatpush1.msra.mxu0 %v1696
    %1698 = vmatprep.subr.mxu0 0.0
    %v1699 = vand.u32 %v1392, 4294901760
    %v1700 = vsub.f32 %v1392, %v1699
    %1701 = vmatpush1.msra.mxu0 %v1700
    %1702 = vmatprep.subr.mxu0 0.0
    %v1703 = vand.u32 %v1391, 4294901760
    %v1704 = vsub.f32 %v1391, %v1703
    %1705 = vmatpush1.msra.mxu0 %v1704
    %1706 = vmatprep.subr.mxu0 0.0
    %v1707 = vand.u32 %v1390, 4294901760
    %v1708 = vsub.f32 %v1390, %v1707
    %1709 = vmatpush1.msra.mxu0 %v1708
    %1710 = vmatprep.subr.mxu0 0.0
    %v1711 = vand.u32 %v1389, 4294901760
    %v1712 = vsub.f32 %v1389, %v1711
    %1713 = vmatpush1.msra.mxu0 %v1712
    %1714 = vmatprep.subr.mxu0 0.0
    %v1715 = vand.u32 %v1388, 4294901760
    %v1716 = vsub.f32 %v1388, %v1715
    %1717 = vmatpush1.msra.mxu0 %v1716
    %1718 = vmatprep.subr.mxu0 0.0
    %1719 = vmatpush2.msra.mxu0 0.0
    %1720 = vmatprep.subr.mxu0 0.0
    %1721 = vmatpush2.msra.mxu0 0.0
    %1722 = vmatprep.subr.mxu0 0.0
    %1723 = vmatpush2.msra.mxu0 0.0
    %1724 = vmatprep.subr.mxu0 0.0
    %1725 = vmatpush2.msra.mxu0 0.0
    %1726 = vmatprep.subr.mxu0 0.0
    %1727 = vmatpush2.msra.mxu0 0.0
    %1728 = vmatprep.subr.mxu0 0.0
    %1729 = vmatpush2.msra.mxu0 0.0
    %1730 = vmatprep.subr.mxu0 0.0
    %1731 = vmatpush2.msra.mxu0 0.0
    %1732 = vmatprep.subr.mxu0 0.0
    %1733 = vmatpush2.msra.mxu0 0.0
    %1734 = vmatprep.subr.mxu0 0.0
    %1735 = vmatpush2.msra.mxu0 0.0
    %1736 = vmatprep.subr.mxu0 0.0
    %1737 = vmatpush2.msra.mxu0 0.0
    %1738 = vmatprep.subr.mxu0 0.0
    %1739 = vmatpush2.msra.mxu0 0.0
    %1740 = vmatprep.subr.mxu0 0.0
    %1741 = vmatpush2.msra.mxu0 0.0
    %1742 = vmatprep.subr.mxu0 0.0
    %1743 = vmatpush2.msra.mxu0 0.0
    %1744 = vmatprep.subr.mxu0 0.0
    %1745 = vmatpush2.msra.mxu0 0.0
    %1746 = vmatprep.subr.mxu0 0.0
    %1747 = vmatpush2.msra.mxu0 0.0
    %1748 = vmatprep.subr.mxu0 0.0
    %1749 = vmatpush2.msra.mxu0 0.0
    %1750 = vmatprep.mubr.f32.mxu0 0.0
    %v1751 = vand.u32 %v1386, 4294901760
    %v1752 = vsub.f32 %v1386, %v1751
    %1753 = vmatmul.mubr.f32.gmra.mxu0 %v1752
    %v1754 = vpop.f32.mrf.mxu0
    %v1755 = vadd.f32 %v1651, %v1754
    %v1756 = vpop.f32.mrf.mxu0
    %1757 = vdwg.mxu0
    %1758 = vmatprep.subr.mxu0 0.0
    %v1759 = vand.u32 %v1403, 4294901760
    %1760 = vmatpush1.msra.mxu0 %v1759
    %1761 = vmatprep.subr.mxu0 0.0
    %v1762 = vand.u32 %v1402, 4294901760
    %1763 = vmatpush1.msra.mxu0 %v1762
    %1764 = vmatprep.subr.mxu0 0.0
    %v1765 = vand.u32 %v1401, 4294901760
    %1766 = vmatpush1.msra.mxu0 %v1765
    %1767 = vmatprep.subr.mxu0 0.0
    %v1768 = vand.u32 %v1400, 4294901760
    %1769 = vmatpush1.msra.mxu0 %v1768
    %1770 = vmatprep.subr.mxu0 0.0
    %v1771 = vand.u32 %v1399, 4294901760
    %1772 = vmatpush1.msra.mxu0 %v1771
    %1773 = vmatprep.subr.mxu0 0.0
    %v1774 = vand.u32 %v1398, 4294901760
    %1775 = vmatpush1.msra.mxu0 %v1774
    %1776 = vmatprep.subr.mxu0 0.0
    %v1777 = vand.u32 %v1397, 4294901760
    %1778 = vmatpush1.msra.mxu0 %v1777
    %1779 = vmatprep.subr.mxu0 0.0
    %v1780 = vand.u32 %v1396, 4294901760
    %1781 = vmatpush1.msra.mxu0 %v1780
    %1782 = vmatprep.subr.mxu0 0.0
    %v1783 = vand.u32 %v1395, 4294901760
    %1784 = vmatpush1.msra.mxu0 %v1783
    %1785 = vmatprep.subr.mxu0 0.0
    %v1786 = vand.u32 %v1394, 4294901760
    %1787 = vmatpush1.msra.mxu0 %v1786
    %1788 = vmatprep.subr.mxu0 0.0
    %v1789 = vand.u32 %v1393, 4294901760
    %1790 = vmatpush1.msra.mxu0 %v1789
    %1791 = vmatprep.subr.mxu0 0.0
    %v1792 = vand.u32 %v1392, 4294901760
    %1793 = vmatpush1.msra.mxu0 %v1792
    %1794 = vmatprep.subr.mxu0 0.0
    %v1795 = vand.u32 %v1391, 4294901760
    %1796 = vmatpush1.msra.mxu0 %v1795
    %1797 = vmatprep.subr.mxu0 0.0
    %v1798 = vand.u32 %v1390, 4294901760
    %1799 = vmatpush1.msra.mxu0 %v1798
    %1800 = vmatprep.subr.mxu0 0.0
    %v1801 = vand.u32 %v1389, 4294901760
    %1802 = vmatpush1.msra.mxu0 %v1801
    %1803 = vmatprep.subr.mxu0 0.0
    %v1804 = vand.u32 %v1388, 4294901760
    %1805 = vmatpush1.msra.mxu0 %v1804
    %1806 = vmatprep.subr.mxu0 0.0
    %1807 = vmatpush2.msra.mxu0 0.0
    %1808 = vmatprep.subr.mxu0 0.0
    %1809 = vmatpush2.msra.mxu0 0.0
    %1810 = vmatprep.subr.mxu0 0.0
    %1811 = vmatpush2.msra.mxu0 0.0
    %1812 = vmatprep.subr.mxu0 0.0
    %1813 = vmatpush2.msra.mxu0 0.0
    %1814 = vmatprep.subr.mxu0 0.0
    %1815 = vmatpush2.msra.mxu0 0.0
    %1816 = vmatprep.subr.mxu0 0.0
    %1817 = vmatpush2.msra.mxu0 0.0
    %1818 = vmatprep.subr.mxu0 0.0
    %1819 = vmatpush2.msra.mxu0 0.0
    %1820 = vmatprep.subr.mxu0 0.0
    %1821 = vmatpush2.msra.mxu0 0.0
    %1822 = vmatprep.subr.mxu0 0.0
    %1823 = vmatpush2.msra.mxu0 0.0
    %1824 = vmatprep.subr.mxu0 0.0
    %1825 = vmatpush2.msra.mxu0 0.0
    %1826 = vmatprep.subr.mxu0 0.0
    %1827 = vmatpush2.msra.mxu0 0.0
    %1828 = vmatprep.subr.mxu0 0.0
    %1829 = vmatpush2.msra.mxu0 0.0
    %1830 = vmatprep.subr.mxu0 0.0
    %1831 = vmatpush2.msra.mxu0 0.0
    %1832 = vmatprep.subr.mxu0 0.0
    %1833 = vmatpush2.msra.mxu0 0.0
    %1834 = vmatprep.subr.mxu0 0.0
    %1835 = vmatpush2.msra.mxu0 0.0
    %1836 = vmatprep.subr.mxu0 0.0
    %1837 = vmatpush2.msra.mxu0 0.0
    %1838 = vmatprep.mubr.f32.mxu0 0.0
    %v1839 = vand.u32 %v1386, 4294901760
    %v1840 = vsub.f32 %v1386, %v1839
    %v1841 = vand.u32 %v1840, 4294901760
    %1842 = vmatmul.mubr.f32.gmra.mxu0 %v1841
    %v1843 = vpop.f32.mrf.mxu0
    %v1844 = vadd.f32 %v1755, %v1843
    %v1845 = vpop.f32.mrf.mxu0
    %1846 = vdwg.mxu0
    %1847 = vmatprep.subr.mxu0 0.0
    %v1848 = vand.u32 %v1403, 4294901760
    %v1849 = vsub.f32 %v1403, %v1848
    %v1850 = vand.u32 %v1849, 4294901760
    %1851 = vmatpush1.msra.mxu0 %v1850
    %1852 = vmatprep.subr.mxu0 0.0
    %v1853 = vand.u32 %v1402, 4294901760
    %v1854 = vsub.f32 %v1402, %v1853
    %v1855 = vand.u32 %v1854, 4294901760
    %1856 = vmatpush1.msra.mxu0 %v1855
    %1857 = vmatprep.subr.mxu0 0.0
    %v1858 = vand.u32 %v1401, 4294901760
    %v1859 = vsub.f32 %v1401, %v1858
    %v1860 = vand.u32 %v1859, 4294901760
    %1861 = vmatpush1.msra.mxu0 %v1860
    %1862 = vmatprep.subr.mxu0 0.0
    %v1863 = vand.u32 %v1400, 4294901760
    %v1864 = vsub.f32 %v1400, %v1863
    %v1865 = vand.u32 %v1864, 4294901760
    %1866 = vmatpush1.msra.mxu0 %v1865
    %1867 = vmatprep.subr.mxu0 0.0
    %v1868 = vand.u32 %v1399, 4294901760
    %v1869 = vsub.f32 %v1399, %v1868
    %v1870 = vand.u32 %v1869, 4294901760
    %1871 = vmatpush1.msra.mxu0 %v1870
    %1872 = vmatprep.subr.mxu0 0.0
    %v1873 = vand.u32 %v1398, 4294901760
    %v1874 = vsub.f32 %v1398, %v1873
    %v1875 = vand.u32 %v1874, 4294901760
    %1876 = vmatpush1.msra.mxu0 %v1875
    %1877 = vmatprep.subr.mxu0 0.0
    %v1878 = vand.u32 %v1397, 4294901760
    %v1879 = vsub.f32 %v1397, %v1878
    %v1880 = vand.u32 %v1879, 4294901760
    %1881 = vmatpush1.msra.mxu0 %v1880
    %1882 = vmatprep.subr.mxu0 0.0
    %v1883 = vand.u32 %v1396, 4294901760
    %v1884 = vsub.f32 %v1396, %v1883
    %v1885 = vand.u32 %v1884, 4294901760
    %1886 = vmatpush1.msra.mxu0 %v1885
    %1887 = vmatprep.subr.mxu0 0.0
    %v1888 = vand.u32 %v1395, 4294901760
    %v1889 = vsub.f32 %v1395, %v1888
    %v1890 = vand.u32 %v1889, 4294901760
    %1891 = vmatpush1.msra.mxu0 %v1890
    %1892 = vmatprep.subr.mxu0 0.0
    %v1893 = vand.u32 %v1394, 4294901760
    %v1894 = vsub.f32 %v1394, %v1893
    %v1895 = vand.u32 %v1894, 4294901760
    %1896 = vmatpush1.msra.mxu0 %v1895
    %1897 = vmatprep.subr.mxu0 0.0
    %v1898 = vand.u32 %v1393, 4294901760
    %v1899 = vsub.f32 %v1393, %v1898
    %v1900 = vand.u32 %v1899, 4294901760
    %1901 = vmatpush1.msra.mxu0 %v1900
    %1902 = vmatprep.subr.mxu0 0.0
    %v1903 = vand.u32 %v1392, 4294901760
    %v1904 = vsub.f32 %v1392, %v1903
    %v1905 = vand.u32 %v1904, 4294901760
    %1906 = vmatpush1.msra.mxu0 %v1905
    %1907 = vmatprep.subr.mxu0 0.0
    %v1908 = vand.u32 %v1391, 4294901760
    %v1909 = vsub.f32 %v1391, %v1908
    %v1910 = vand.u32 %v1909, 4294901760
    %1911 = vmatpush1.msra.mxu0 %v1910
    %1912 = vmatprep.subr.mxu0 0.0
    %v1913 = vand.u32 %v1390, 4294901760
    %v1914 = vsub.f32 %v1390, %v1913
    %v1915 = vand.u32 %v1914, 4294901760
    %1916 = vmatpush1.msra.mxu0 %v1915
    %1917 = vmatprep.subr.mxu0 0.0
    %v1918 = vand.u32 %v1389, 4294901760
    %v1919 = vsub.f32 %v1389, %v1918
    %v1920 = vand.u32 %v1919, 4294901760
    %1921 = vmatpush1.msra.mxu0 %v1920
    %1922 = vmatprep.subr.mxu0 0.0
    %v1923 = vand.u32 %v1388, 4294901760
    %v1924 = vsub.f32 %v1388, %v1923
    %v1925 = vand.u32 %v1924, 4294901760
    %1926 = vmatpush1.msra.mxu0 %v1925
    %1927 = vmatprep.subr.mxu0 0.0
    %1928 = vmatpush2.msra.mxu0 0.0
    %1929 = vmatprep.subr.mxu0 0.0
    %1930 = vmatpush2.msra.mxu0 0.0
    %1931 = vmatprep.subr.mxu0 0.0
    %1932 = vmatpush2.msra.mxu0 0.0
    %1933 = vmatprep.subr.mxu0 0.0
    %1934 = vmatpush2.msra.mxu0 0.0
    %1935 = vmatprep.subr.mxu0 0.0
    %1936 = vmatpush2.msra.mxu0 0.0
    %1937 = vmatprep.subr.mxu0 0.0
    %1938 = vmatpush2.msra.mxu0 0.0
    %1939 = vmatprep.subr.mxu0 0.0
    %1940 = vmatpush2.msra.mxu0 0.0
    %1941 = vmatprep.subr.mxu0 0.0
    %1942 = vmatpush2.msra.mxu0 0.0
    %1943 = vmatprep.subr.mxu0 0.0
    %1944 = vmatpush2.msra.mxu0 0.0
    %1945 = vmatprep.subr.mxu0 0.0
    %1946 = vmatpush2.msra.mxu0 0.0
    %1947 = vmatprep.subr.mxu0 0.0
    %1948 = vmatpush2.msra.mxu0 0.0
    %1949 = vmatprep.subr.mxu0 0.0
    %1950 = vmatpush2.msra.mxu0 0.0
    %1951 = vmatprep.subr.mxu0 0.0
    %1952 = vmatpush2.msra.mxu0 0.0
    %1953 = vmatprep.subr.mxu0 0.0
    %1954 = vmatpush2.msra.mxu0 0.0
    %1955 = vmatprep.subr.mxu0 0.0
    %1956 = vmatpush2.msra.mxu0 0.0
    %1957 = vmatprep.subr.mxu0 0.0
    %1958 = vmatpush2.msra.mxu0 0.0
    %1959 = vmatprep.mubr.f32.mxu0 0.0
    %v1960 = vand.u32 %v1386, 4294901760
    %1961 = vmatmul.mubr.f32.gmra.mxu0 %v1960
    %v1962 = vpop.f32.mrf.mxu0
    %v1963 = vadd.f32 %v1844, %v1962
    %v1964 = vpop.f32.mrf.mxu0
    %1965 = vdwg.mxu0
    %1966 = vmatprep.subr.mxu0 0.0
    %v1967 = vand.u32 %v1403, 4294901760
    %1968 = vmatpush1.msra.mxu0 %v1967
    %1969 = vmatprep.subr.mxu0 0.0
    %v1970 = vand.u32 %v1402, 4294901760
    %1971 = vmatpush1.msra.mxu0 %v1970
    %1972 = vmatprep.subr.mxu0 0.0
    %v1973 = vand.u32 %v1401, 4294901760
    %1974 = vmatpush1.msra.mxu0 %v1973
    %1975 = vmatprep.subr.mxu0 0.0
    %v1976 = vand.u32 %v1400, 4294901760
    %1977 = vmatpush1.msra.mxu0 %v1976
    %1978 = vmatprep.subr.mxu0 0.0
    %v1979 = vand.u32 %v1399, 4294901760
    %1980 = vmatpush1.msra.mxu0 %v1979
    %1981 = vmatprep.subr.mxu0 0.0
    %v1982 = vand.u32 %v1398, 4294901760
    %1983 = vmatpush1.msra.mxu0 %v1982
    %1984 = vmatprep.subr.mxu0 0.0
    %v1985 = vand.u32 %v1397, 4294901760
    %1986 = vmatpush1.msra.mxu0 %v1985
    %1987 = vmatprep.subr.mxu0 0.0
    %v1988 = vand.u32 %v1396, 4294901760
    %1989 = vmatpush1.msra.mxu0 %v1988
    %1990 = vmatprep.subr.mxu0 0.0
    %v1991 = vand.u32 %v1395, 4294901760
    %1992 = vmatpush1.msra.mxu0 %v1991
    %1993 = vmatprep.subr.mxu0 0.0
    %v1994 = vand.u32 %v1394, 4294901760
    %1995 = vmatpush1.msra.mxu0 %v1994
    %1996 = vmatprep.subr.mxu0 0.0
    %v1997 = vand.u32 %v1393, 4294901760
    %1998 = vmatpush1.msra.mxu0 %v1997
    %1999 = vmatprep.subr.mxu0 0.0
    %v2000 = vand.u32 %v1392, 4294901760
    %2001 = vmatpush1.msra.mxu0 %v2000
    %2002 = vmatprep.subr.mxu0 0.0
    %v2003 = vand.u32 %v1391, 4294901760
    %2004 = vmatpush1.msra.mxu0 %v2003
    %2005 = vmatprep.subr.mxu0 0.0
    %v2006 = vand.u32 %v1390, 4294901760
    %2007 = vmatpush1.msra.mxu0 %v2006
    %2008 = vmatprep.subr.mxu0 0.0
    %v2009 = vand.u32 %v1389, 4294901760
    %2010 = vmatpush1.msra.mxu0 %v2009
    %2011 = vmatprep.subr.mxu0 0.0
    %v2012 = vand.u32 %v1388, 4294901760
    %2013 = vmatpush1.msra.mxu0 %v2012
    %2014 = vmatprep.subr.mxu0 0.0
    %2015 = vmatpush2.msra.mxu0 0.0
    %2016 = vmatprep.subr.mxu0 0.0
    %2017 = vmatpush2.msra.mxu0 0.0
    %2018 = vmatprep.subr.mxu0 0.0
    %2019 = vmatpush2.msra.mxu0 0.0
    %2020 = vmatprep.subr.mxu0 0.0
    %2021 = vmatpush2.msra.mxu0 0.0
    %2022 = vmatprep.subr.mxu0 0.0
    %2023 = vmatpush2.msra.mxu0 0.0
    %2024 = vmatprep.subr.mxu0 0.0
    %2025 = vmatpush2.msra.mxu0 0.0
    %2026 = vmatprep.subr.mxu0 0.0
    %2027 = vmatpush2.msra.mxu0 0.0
    %2028 = vmatprep.subr.mxu0 0.0
    %2029 = vmatpush2.msra.mxu0 0.0
    %2030 = vmatprep.subr.mxu0 0.0
    %2031 = vmatpush2.msra.mxu0 0.0
    %2032 = vmatprep.subr.mxu0 0.0
    %2033 = vmatpush2.msra.mxu0 0.0
    %2034 = vmatprep.subr.mxu0 0.0
    %2035 = vmatpush2.msra.mxu0 0.0
    %2036 = vmatprep.subr.mxu0 0.0
    %2037 = vmatpush2.msra.mxu0 0.0
    %2038 = vmatprep.subr.mxu0 0.0
    %2039 = vmatpush2.msra.mxu0 0.0
    %2040 = vmatprep.subr.mxu0 0.0
    %2041 = vmatpush2.msra.mxu0 0.0
    %2042 = vmatprep.subr.mxu0 0.0
    %2043 = vmatpush2.msra.mxu0 0.0
    %2044 = vmatprep.subr.mxu0 0.0
    %2045 = vmatpush2.msra.mxu0 0.0
    %2046 = vmatprep.mubr.f32.mxu0 0.0
    %v2047 = vand.u32 %v1386, 4294901760
    %2048 = vmatmul.mubr.f32.gmra.mxu0 %v2047
    %v2049 = vpop.f32.mrf.mxu0
    %v2050 = vadd.f32 %v1963, %v2049
    %v2051 = vpop.f32.mrf.mxu0
    %2052 = vdwg.mxu0
    %v2053 = vmax.f32 %v2050, 0.0
    %s2054 = scalar_lea.vmem [#allocation5], 384
    %v2055 = vld [vmem:[%s2054] sm:$0xff]
    %v2056 = vld [vmem:[%s2054 + $0x8] sm:$0xff]
    %v2057 = vld [vmem:[%s2054 + $0x10] sm:$0xff]
    %v2058 = vld [vmem:[%s2054 + $0x18] sm:$0xff]
    %v2059 = vld [vmem:[%s2054 + $0x20] sm:$0xff]
    %v2060 = vld [vmem:[%s2054 + $0x28] sm:$0xff]
    %v2061 = vld [vmem:[%s2054 + $0x30] sm:$0xff]
    %v2062 = vld [vmem:[%s2054 + $0x38] sm:$0xff]
    %v2063 = vld [vmem:[%s2054 + $0x40] sm:$0xff]
    %v2064 = vld [vmem:[%s2054 + $0x48] sm:$0xff]
    %v2065 = vld [vmem:[%s2054 + $0x50] sm:$0xff]
    %v2066 = vld [vmem:[%s2054 + $0x58] sm:$0xff]
    %v2067 = vld [vmem:[%s2054 + $0x60] sm:$0xff]
    %v2068 = vld [vmem:[%s2054 + $0x68] sm:$0xff]
    %v2069 = vld [vmem:[%s2054 + $0x70] sm:$0xff]
    %v2070 = vld [vmem:[%s2054 + $0x78] sm:$0xff]
    %s2071 = scalar_lea.vmem [#allocation7], 3
    %v2072 = vld [vmem:[%s2071] sm:$0x1]
    %v2074 = vlaneseq
    %v2075 = vshrl.u32 %v2074, 7
    %v2076 = vsub.s32 0, %v2075
    %v2077 = vrot.slane %v2072, %v2076
    %2079 = vmatprep.subr.mxu0 0.0
    %v2080 = vand.u32 %v2070, 4294901760
    %2081 = vmatpush1.msra.mxu0 %v2080
    %2082 = vmatprep.subr.mxu0 0.0
    %v2083 = vand.u32 %v2069, 4294901760
    %2084 = vmatpush1.msra.mxu0 %v2083
    %2085 = vmatprep.subr.mxu0 0.0
    %v2086 = vand.u32 %v2068, 4294901760
    %2087 = vmatpush1.msra.mxu0 %v2086
    %2088 = vmatprep.subr.mxu0 0.0
    %v2089 = vand.u32 %v2067, 4294901760
    %2090 = vmatpush1.msra.mxu0 %v2089
    %2091 = vmatprep.subr.mxu0 0.0
    %v2092 = vand.u32 %v2066, 4294901760
    %2093 = vmatpush1.msra.mxu0 %v2092
    %2094 = vmatprep.subr.mxu0 0.0
    %v2095 = vand.u32 %v2065, 4294901760
    %2096 = vmatpush1.msra.mxu0 %v2095
    %2097 = vmatprep.subr.mxu0 0.0
    %v2098 = vand.u32 %v2064, 4294901760
    %2099 = vmatpush1.msra.mxu0 %v2098
    %2100 = vmatprep.subr.mxu0 0.0
    %v2101 = vand.u32 %v2063, 4294901760
    %2102 = vmatpush1.msra.mxu0 %v2101
    %2103 = vmatprep.subr.mxu0 0.0
    %v2104 = vand.u32 %v2062, 4294901760
    %2105 = vmatpush1.msra.mxu0 %v2104
    %2106 = vmatprep.subr.mxu0 0.0
    %v2107 = vand.u32 %v2061, 4294901760
    %2108 = vmatpush1.msra.mxu0 %v2107
    %2109 = vmatprep.subr.mxu0 0.0
    %v2110 = vand.u32 %v2060, 4294901760
    %2111 = vmatpush1.msra.mxu0 %v2110
    %2112 = vmatprep.subr.mxu0 0.0
    %v2113 = vand.u32 %v2059, 4294901760
    %2114 = vmatpush1.msra.mxu0 %v2113
    %2115 = vmatprep.subr.mxu0 0.0
    %v2116 = vand.u32 %v2058, 4294901760
    %2117 = vmatpush1.msra.mxu0 %v2116
    %2118 = vmatprep.subr.mxu0 0.0
    %v2119 = vand.u32 %v2057, 4294901760
    %2120 = vmatpush1.msra.mxu0 %v2119
    %2121 = vmatprep.subr.mxu0 0.0
    %v2122 = vand.u32 %v2056, 4294901760
    %2123 = vmatpush1.msra.mxu0 %v2122
    %2124 = vmatprep.subr.mxu0 0.0
    %v2125 = vand.u32 %v2055, 4294901760
    %2126 = vmatpush1.msra.mxu0 %v2125
    %2127 = vmatprep.subr.mxu0 0.0
    %2128 = vmatpush2.msra.mxu0 0.0
    %2129 = vmatprep.subr.mxu0 0.0
    %2130 = vmatpush2.msra.mxu0 0.0
    %2131 = vmatprep.subr.mxu0 0.0
    %2132 = vmatpush2.msra.mxu0 0.0
    %2133 = vmatprep.subr.mxu0 0.0
    %2134 = vmatpush2.msra.mxu0 0.0
    %2135 = vmatprep.subr.mxu0 0.0
    %2136 = vmatpush2.msra.mxu0 0.0
    %2137 = vmatprep.subr.mxu0 0.0
    %2138 = vmatpush2.msra.mxu0 0.0
    %2139 = vmatprep.subr.mxu0 0.0
    %2140 = vmatpush2.msra.mxu0 0.0
    %2141 = vmatprep.subr.mxu0 0.0
    %2142 = vmatpush2.msra.mxu0 0.0
    %2143 = vmatprep.subr.mxu0 0.0
    %2144 = vmatpush2.msra.mxu0 0.0
    %2145 = vmatprep.subr.mxu0 0.0
    %2146 = vmatpush2.msra.mxu0 0.0
    %2147 = vmatprep.subr.mxu0 0.0
    %2148 = vmatpush2.msra.mxu0 0.0
    %2149 = vmatprep.subr.mxu0 0.0
    %2150 = vmatpush2.msra.mxu0 0.0
    %2151 = vmatprep.subr.mxu0 0.0
    %2152 = vmatpush2.msra.mxu0 0.0
    %2153 = vmatprep.subr.mxu0 0.0
    %2154 = vmatpush2.msra.mxu0 0.0
    %2155 = vmatprep.subr.mxu0 0.0
    %2156 = vmatpush2.msra.mxu0 0.0
    %2157 = vmatprep.subr.mxu0 0.0
    %2158 = vmatpush2.msra.mxu0 0.0
    %2159 = vmatprep.mubr.f32.mxu0 0.0
    %v2160 = vand.u32 %v2053, 4294901760
    %v2161 = vsub.f32 %v2053, %v2160
    %v2162 = vand.u32 %v2161, 4294901760
    %v2163 = vsub.f32 %v2161, %v2162
    %v2164 = vand.u32 %v2163, 4294901760
    %2165 = vmatmul.mubr.f32.gmra.mxu0 %v2164
    %v2166 = vpop.f32.mrf.mxu0
    %v2167 = vadd.f32 %v2077, %v2166
    %v2168 = vpop.f32.mrf.mxu0
    %2169 = vdwg.mxu0
    %2170 = vmatprep.subr.mxu0 0.0
    %v2171 = vand.u32 %v2070, 4294901760
    %v2172 = vsub.f32 %v2070, %v2171
    %v2173 = vand.u32 %v2172, 4294901760
    %v2174 = vsub.f32 %v2172, %v2173
    %v2175 = vand.u32 %v2174, 4294901760
    %2176 = vmatpush1.msra.mxu0 %v2175
    %2177 = vmatprep.subr.mxu0 0.0
    %v2178 = vand.u32 %v2069, 4294901760
    %v2179 = vsub.f32 %v2069, %v2178
    %v2180 = vand.u32 %v2179, 4294901760
    %v2181 = vsub.f32 %v2179, %v2180
    %v2182 = vand.u32 %v2181, 4294901760
    %2183 = vmatpush1.msra.mxu0 %v2182
    %2184 = vmatprep.subr.mxu0 0.0
    %v2185 = vand.u32 %v2068, 4294901760
    %v2186 = vsub.f32 %v2068, %v2185
    %v2187 = vand.u32 %v2186, 4294901760
    %v2188 = vsub.f32 %v2186, %v2187
    %v2189 = vand.u32 %v2188, 4294901760
    %2190 = vmatpush1.msra.mxu0 %v2189
    %2191 = vmatprep.subr.mxu0 0.0
    %v2192 = vand.u32 %v2067, 4294901760
    %v2193 = vsub.f32 %v2067, %v2192
    %v2194 = vand.u32 %v2193, 4294901760
    %v2195 = vsub.f32 %v2193, %v2194
    %v2196 = vand.u32 %v2195, 4294901760
    %2197 = vmatpush1.msra.mxu0 %v2196
    %2198 = vmatprep.subr.mxu0 0.0
    %v2199 = vand.u32 %v2066, 4294901760
    %v2200 = vsub.f32 %v2066, %v2199
    %v2201 = vand.u32 %v2200, 4294901760
    %v2202 = vsub.f32 %v2200, %v2201
    %v2203 = vand.u32 %v2202, 4294901760
    %2204 = vmatpush1.msra.mxu0 %v2203
    %2205 = vmatprep.subr.mxu0 0.0
    %v2206 = vand.u32 %v2065, 4294901760
    %v2207 = vsub.f32 %v2065, %v2206
    %v2208 = vand.u32 %v2207, 4294901760
    %v2209 = vsub.f32 %v2207, %v2208
    %v2210 = vand.u32 %v2209, 4294901760
    %2211 = vmatpush1.msra.mxu0 %v2210
    %2212 = vmatprep.subr.mxu0 0.0
    %v2213 = vand.u32 %v2064, 4294901760
    %v2214 = vsub.f32 %v2064, %v2213
    %v2215 = vand.u32 %v2214, 4294901760
    %v2216 = vsub.f32 %v2214, %v2215
    %v2217 = vand.u32 %v2216, 4294901760
    %2218 = vmatpush1.msra.mxu0 %v2217
    %2219 = vmatprep.subr.mxu0 0.0
    %v2220 = vand.u32 %v2063, 4294901760
    %v2221 = vsub.f32 %v2063, %v2220
    %v2222 = vand.u32 %v2221, 4294901760
    %v2223 = vsub.f32 %v2221, %v2222
    %v2224 = vand.u32 %v2223, 4294901760
    %2225 = vmatpush1.msra.mxu0 %v2224
    %2226 = vmatprep.subr.mxu0 0.0
    %v2227 = vand.u32 %v2062, 4294901760
    %v2228 = vsub.f32 %v2062, %v2227
    %v2229 = vand.u32 %v2228, 4294901760
    %v2230 = vsub.f32 %v2228, %v2229
    %v2231 = vand.u32 %v2230, 4294901760
    %2232 = vmatpush1.msra.mxu0 %v2231
    %2233 = vmatprep.subr.mxu0 0.0
    %v2234 = vand.u32 %v2061, 4294901760
    %v2235 = vsub.f32 %v2061, %v2234
    %v2236 = vand.u32 %v2235, 4294901760
    %v2237 = vsub.f32 %v2235, %v2236
    %v2238 = vand.u32 %v2237, 4294901760
    %2239 = vmatpush1.msra.mxu0 %v2238
    %2240 = vmatprep.subr.mxu0 0.0
    %v2241 = vand.u32 %v2060, 4294901760
    %v2242 = vsub.f32 %v2060, %v2241
    %v2243 = vand.u32 %v2242, 4294901760
    %v2244 = vsub.f32 %v2242, %v2243
    %v2245 = vand.u32 %v2244, 4294901760
    %2246 = vmatpush1.msra.mxu0 %v2245
    %2247 = vmatprep.subr.mxu0 0.0
    %v2248 = vand.u32 %v2059, 4294901760
    %v2249 = vsub.f32 %v2059, %v2248
    %v2250 = vand.u32 %v2249, 4294901760
    %v2251 = vsub.f32 %v2249, %v2250
    %v2252 = vand.u32 %v2251, 4294901760
    %2253 = vmatpush1.msra.mxu0 %v2252
    %2254 = vmatprep.subr.mxu0 0.0
    %v2255 = vand.u32 %v2058, 4294901760
    %v2256 = vsub.f32 %v2058, %v2255
    %v2257 = vand.u32 %v2256, 4294901760
    %v2258 = vsub.f32 %v2256, %v2257
    %v2259 = vand.u32 %v2258, 4294901760
    %2260 = vmatpush1.msra.mxu0 %v2259
    %2261 = vmatprep.subr.mxu0 0.0
    %v2262 = vand.u32 %v2057, 4294901760
    %v2263 = vsub.f32 %v2057, %v2262
    %v2264 = vand.u32 %v2263, 4294901760
    %v2265 = vsub.f32 %v2263, %v2264
    %v2266 = vand.u32 %v2265, 4294901760
    %2267 = vmatpush1.msra.mxu0 %v2266
    %2268 = vmatprep.subr.mxu0 0.0
    %v2269 = vand.u32 %v2056, 4294901760
    %v2270 = vsub.f32 %v2056, %v2269
    %v2271 = vand.u32 %v2270, 4294901760
    %v2272 = vsub.f32 %v2270, %v2271
    %v2273 = vand.u32 %v2272, 4294901760
    %2274 = vmatpush1.msra.mxu0 %v2273
    %2275 = vmatprep.subr.mxu0 0.0
    %v2276 = vand.u32 %v2055, 4294901760
    %v2277 = vsub.f32 %v2055, %v2276
    %v2278 = vand.u32 %v2277, 4294901760
    %v2279 = vsub.f32 %v2277, %v2278
    %v2280 = vand.u32 %v2279, 4294901760
    %2281 = vmatpush1.msra.mxu0 %v2280
    %2282 = vmatprep.subr.mxu0 0.0
    %2283 = vmatpush2.msra.mxu0 0.0
    %2284 = vmatprep.subr.mxu0 0.0
    %2285 = vmatpush2.msra.mxu0 0.0
    %2286 = vmatprep.subr.mxu0 0.0
    %2287 = vmatpush2.msra.mxu0 0.0
    %2288 = vmatprep.subr.mxu0 0.0
    %2289 = vmatpush2.msra.mxu0 0.0
    %2290 = vmatprep.subr.mxu0 0.0
    %2291 = vmatpush2.msra.mxu0 0.0
    %2292 = vmatprep.subr.mxu0 0.0
    %2293 = vmatpush2.msra.mxu0 0.0
    %2294 = vmatprep.subr.mxu0 0.0
    %2295 = vmatpush2.msra.mxu0 0.0
    %2296 = vmatprep.subr.mxu0 0.0
    %2297 = vmatpush2.msra.mxu0 0.0
    %2298 = vmatprep.subr.mxu0 0.0
    %2299 = vmatpush2.msra.mxu0 0.0
    %2300 = vmatprep.subr.mxu0 0.0
    %2301 = vmatpush2.msra.mxu0 0.0
    %2302 = vmatprep.subr.mxu0 0.0
    %2303 = vmatpush2.msra.mxu0 0.0
    %2304 = vmatprep.subr.mxu0 0.0
    %2305 = vmatpush2.msra.mxu0 0.0
    %2306 = vmatprep.subr.mxu0 0.0
    %2307 = vmatpush2.msra.mxu0 0.0
    %2308 = vmatprep.subr.mxu0 0.0
    %2309 = vmatpush2.msra.mxu0 0.0
    %2310 = vmatprep.subr.mxu0 0.0
    %2311 = vmatpush2.msra.mxu0 0.0
    %2312 = vmatprep.subr.mxu0 0.0
    %2313 = vmatpush2.msra.mxu0 0.0
    %2314 = vmatprep.mubr.f32.mxu0 0.0
    %v2315 = vand.u32 %v2053, 4294901760
    %2316 = vmatmul.mubr.f32.gmra.mxu0 %v2315
    %v2317 = vpop.f32.mrf.mxu0
    %v2318 = vadd.f32 %v2167, %v2317
    %v2319 = vpop.f32.mrf.mxu0
    %2320 = vdwg.mxu0
    %2321 = vmatprep.subr.mxu0 0.0
    %v2322 = vand.u32 %v2070, 4294901760
    %v2323 = vsub.f32 %v2070, %v2322
    %2324 = vmatpush1.msra.mxu0 %v2323
    %2325 = vmatprep.subr.mxu0 0.0
    %v2326 = vand.u32 %v2069, 4294901760
    %v2327 = vsub.f32 %v2069, %v2326
    %2328 = vmatpush1.msra.mxu0 %v2327
    %2329 = vmatprep.subr.mxu0 0.0
    %v2330 = vand.u32 %v2068, 4294901760
    %v2331 = vsub.f32 %v2068, %v2330
    %2332 = vmatpush1.msra.mxu0 %v2331
    %2333 = vmatprep.subr.mxu0 0.0
    %v2334 = vand.u32 %v2067, 4294901760
    %v2335 = vsub.f32 %v2067, %v2334
    %2336 = vmatpush1.msra.mxu0 %v2335
    %2337 = vmatprep.subr.mxu0 0.0
    %v2338 = vand.u32 %v2066, 4294901760
    %v2339 = vsub.f32 %v2066, %v2338
    %2340 = vmatpush1.msra.mxu0 %v2339
    %2341 = vmatprep.subr.mxu0 0.0
    %v2342 = vand.u32 %v2065, 4294901760
    %v2343 = vsub.f32 %v2065, %v2342
    %2344 = vmatpush1.msra.mxu0 %v2343
    %2345 = vmatprep.subr.mxu0 0.0
    %v2346 = vand.u32 %v2064, 4294901760
    %v2347 = vsub.f32 %v2064, %v2346
    %2348 = vmatpush1.msra.mxu0 %v2347
    %2349 = vmatprep.subr.mxu0 0.0
    %v2350 = vand.u32 %v2063, 4294901760
    %v2351 = vsub.f32 %v2063, %v2350
    %2352 = vmatpush1.msra.mxu0 %v2351
    %2353 = vmatprep.subr.mxu0 0.0
    %v2354 = vand.u32 %v2062, 4294901760
    %v2355 = vsub.f32 %v2062, %v2354
    %2356 = vmatpush1.msra.mxu0 %v2355
    %2357 = vmatprep.subr.mxu0 0.0
    %v2358 = vand.u32 %v2061, 4294901760
    %v2359 = vsub.f32 %v2061, %v2358
    %2360 = vmatpush1.msra.mxu0 %v2359
    %2361 = vmatprep.subr.mxu0 0.0
    %v2362 = vand.u32 %v2060, 4294901760
    %v2363 = vsub.f32 %v2060, %v2362
    %2364 = vmatpush1.msra.mxu0 %v2363
    %2365 = vmatprep.subr.mxu0 0.0
    %v2366 = vand.u32 %v2059, 4294901760
    %v2367 = vsub.f32 %v2059, %v2366
    %2368 = vmatpush1.msra.mxu0 %v2367
    %2369 = vmatprep.subr.mxu0 0.0
    %v2370 = vand.u32 %v2058, 4294901760
    %v2371 = vsub.f32 %v2058, %v2370
    %2372 = vmatpush1.msra.mxu0 %v2371
    %2373 = vmatprep.subr.mxu0 0.0
    %v2374 = vand.u32 %v2057, 4294901760
    %v2375 = vsub.f32 %v2057, %v2374
    %2376 = vmatpush1.msra.mxu0 %v2375
    %2377 = vmatprep.subr.mxu0 0.0
    %v2378 = vand.u32 %v2056, 4294901760
    %v2379 = vsub.f32 %v2056, %v2378
    %2380 = vmatpush1.msra.mxu0 %v2379
    %2381 = vmatprep.subr.mxu0 0.0
    %v2382 = vand.u32 %v2055, 4294901760
    %v2383 = vsub.f32 %v2055, %v2382
    %2384 = vmatpush1.msra.mxu0 %v2383
    %2385 = vmatprep.subr.mxu0 0.0
    %2386 = vmatpush2.msra.mxu0 0.0
    %2387 = vmatprep.subr.mxu0 0.0
    %2388 = vmatpush2.msra.mxu0 0.0
    %2389 = vmatprep.subr.mxu0 0.0
    %2390 = vmatpush2.msra.mxu0 0.0
    %2391 = vmatprep.subr.mxu0 0.0
    %2392 = vmatpush2.msra.mxu0 0.0
    %2393 = vmatprep.subr.mxu0 0.0
    %2394 = vmatpush2.msra.mxu0 0.0
    %2395 = vmatprep.subr.mxu0 0.0
    %2396 = vmatpush2.msra.mxu0 0.0
    %2397 = vmatprep.subr.mxu0 0.0
    %2398 = vmatpush2.msra.mxu0 0.0
    %2399 = vmatprep.subr.mxu0 0.0
    %2400 = vmatpush2.msra.mxu0 0.0
    %2401 = vmatprep.subr.mxu0 0.0
    %2402 = vmatpush2.msra.mxu0 0.0
    %2403 = vmatprep.subr.mxu0 0.0
    %2404 = vmatpush2.msra.mxu0 0.0
    %2405 = vmatprep.subr.mxu0 0.0
    %2406 = vmatpush2.msra.mxu0 0.0
    %2407 = vmatprep.subr.mxu0 0.0
    %2408 = vmatpush2.msra.mxu0 0.0
    %2409 = vmatprep.subr.mxu0 0.0
    %2410 = vmatpush2.msra.mxu0 0.0
    %2411 = vmatprep.subr.mxu0 0.0
    %2412 = vmatpush2.msra.mxu0 0.0
    %2413 = vmatprep.subr.mxu0 0.0
    %2414 = vmatpush2.msra.mxu0 0.0
    %2415 = vmatprep.subr.mxu0 0.0
    %2416 = vmatpush2.msra.mxu0 0.0
    %2417 = vmatprep.mubr.f32.mxu0 0.0
    %v2418 = vand.u32 %v2053, 4294901760
    %v2419 = vsub.f32 %v2053, %v2418
    %2420 = vmatmul.mubr.f32.gmra.mxu0 %v2419
    %v2421 = vpop.f32.mrf.mxu0
    %v2422 = vadd.f32 %v2318, %v2421
    %v2423 = vpop.f32.mrf.mxu0
    %2424 = vdwg.mxu0
    %2425 = vmatprep.subr.mxu0 0.0
    %v2426 = vand.u32 %v2070, 4294901760
    %2427 = vmatpush1.msra.mxu0 %v2426
    %2428 = vmatprep.subr.mxu0 0.0
    %v2429 = vand.u32 %v2069, 4294901760
    %2430 = vmatpush1.msra.mxu0 %v2429
    %2431 = vmatprep.subr.mxu0 0.0
    %v2432 = vand.u32 %v2068, 4294901760
    %2433 = vmatpush1.msra.mxu0 %v2432
    %2434 = vmatprep.subr.mxu0 0.0
    %v2435 = vand.u32 %v2067, 4294901760
    %2436 = vmatpush1.msra.mxu0 %v2435
    %2437 = vmatprep.subr.mxu0 0.0
    %v2438 = vand.u32 %v2066, 4294901760
    %2439 = vmatpush1.msra.mxu0 %v2438
    %2440 = vmatprep.subr.mxu0 0.0
    %v2441 = vand.u32 %v2065, 4294901760
    %2442 = vmatpush1.msra.mxu0 %v2441
    %2443 = vmatprep.subr.mxu0 0.0
    %v2444 = vand.u32 %v2064, 4294901760
    %2445 = vmatpush1.msra.mxu0 %v2444
    %2446 = vmatprep.subr.mxu0 0.0
    %v2447 = vand.u32 %v2063, 4294901760
    %2448 = vmatpush1.msra.mxu0 %v2447
    %2449 = vmatprep.subr.mxu0 0.0
    %v2450 = vand.u32 %v2062, 4294901760
    %2451 = vmatpush1.msra.mxu0 %v2450
    %2452 = vmatprep.subr.mxu0 0.0
    %v2453 = vand.u32 %v2061, 4294901760
    %2454 = vmatpush1.msra.mxu0 %v2453
    %2455 = vmatprep.subr.mxu0 0.0
    %v2456 = vand.u32 %v2060, 4294901760
    %2457 = vmatpush1.msra.mxu0 %v2456
    %2458 = vmatprep.subr.mxu0 0.0
    %v2459 = vand.u32 %v2059, 4294901760
    %2460 = vmatpush1.msra.mxu0 %v2459
    %2461 = vmatprep.subr.mxu0 0.0
    %v2462 = vand.u32 %v2058, 4294901760
    %2463 = vmatpush1.msra.mxu0 %v2462
    %2464 = vmatprep.subr.mxu0 0.0
    %v2465 = vand.u32 %v2057, 4294901760
    %2466 = vmatpush1.msra.mxu0 %v2465
    %2467 = vmatprep.subr.mxu0 0.0
    %v2468 = vand.u32 %v2056, 4294901760
    %2469 = vmatpush1.msra.mxu0 %v2468
    %2470 = vmatprep.subr.mxu0 0.0
    %v2471 = vand.u32 %v2055, 4294901760
    %2472 = vmatpush1.msra.mxu0 %v2471
    %2473 = vmatprep.subr.mxu0 0.0
    %2474 = vmatpush2.msra.mxu0 0.0
    %2475 = vmatprep.subr.mxu0 0.0
    %2476 = vmatpush2.msra.mxu0 0.0
    %2477 = vmatprep.subr.mxu0 0.0
    %2478 = vmatpush2.msra.mxu0 0.0
    %2479 = vmatprep.subr.mxu0 0.0
    %2480 = vmatpush2.msra.mxu0 0.0
    %2481 = vmatprep.subr.mxu0 0.0
    %2482 = vmatpush2.msra.mxu0 0.0
    %2483 = vmatprep.subr.mxu0 0.0
    %2484 = vmatpush2.msra.mxu0 0.0
    %2485 = vmatprep.subr.mxu0 0.0
    %2486 = vmatpush2.msra.mxu0 0.0
    %2487 = vmatprep.subr.mxu0 0.0
    %2488 = vmatpush2.msra.mxu0 0.0
    %2489 = vmatprep.subr.mxu0 0.0
    %2490 = vmatpush2.msra.mxu0 0.0
    %2491 = vmatprep.subr.mxu0 0.0
    %2492 = vmatpush2.msra.mxu0 0.0
    %2493 = vmatprep.subr.mxu0 0.0
    %2494 = vmatpush2.msra.mxu0 0.0
    %2495 = vmatprep.subr.mxu0 0.0
    %2496 = vmatpush2.msra.mxu0 0.0
    %2497 = vmatprep.subr.mxu0 0.0
    %2498 = vmatpush2.msra.mxu0 0.0
    %2499 = vmatprep.subr.mxu0 0.0
    %2500 = vmatpush2.msra.mxu0 0.0
    %2501 = vmatprep.subr.mxu0 0.0
    %2502 = vmatpush2.msra.mxu0 0.0
    %2503 = vmatprep.subr.mxu0 0.0
    %2504 = vmatpush2.msra.mxu0 0.0
    %2505 = vmatprep.mubr.f32.mxu0 0.0
    %v2506 = vand.u32 %v2053, 4294901760
    %v2507 = vsub.f32 %v2053, %v2506
    %v2508 = vand.u32 %v2507, 4294901760
    %2509 = vmatmul.mubr.f32.gmra.mxu0 %v2508
    %v2510 = vpop.f32.mrf.mxu0
    %v2511 = vadd.f32 %v2422, %v2510
    %v2512 = vpop.f32.mrf.mxu0
    %2513 = vdwg.mxu0
    %2514 = vmatprep.subr.mxu0 0.0
    %v2515 = vand.u32 %v2070, 4294901760
    %v2516 = vsub.f32 %v2070, %v2515
    %v2517 = vand.u32 %v2516, 4294901760
    %2518 = vmatpush1.msra.mxu0 %v2517
    %2519 = vmatprep.subr.mxu0 0.0
    %v2520 = vand.u32 %v2069, 4294901760
    %v2521 = vsub.f32 %v2069, %v2520
    %v2522 = vand.u32 %v2521, 4294901760
    %2523 = vmatpush1.msra.mxu0 %v2522
    %2524 = vmatprep.subr.mxu0 0.0
    %v2525 = vand.u32 %v2068, 4294901760
    %v2526 = vsub.f32 %v2068, %v2525
    %v2527 = vand.u32 %v2526, 4294901760
    %2528 = vmatpush1.msra.mxu0 %v2527
    %2529 = vmatprep.subr.mxu0 0.0
    %v2530 = vand.u32 %v2067, 4294901760
    %v2531 = vsub.f32 %v2067, %v2530
    %v2532 = vand.u32 %v2531, 4294901760
    %2533 = vmatpush1.msra.mxu0 %v2532
    %2534 = vmatprep.subr.mxu0 0.0
    %v2535 = vand.u32 %v2066, 4294901760
    %v2536 = vsub.f32 %v2066, %v2535
    %v2537 = vand.u32 %v2536, 4294901760
    %2538 = vmatpush1.msra.mxu0 %v2537
    %2539 = vmatprep.subr.mxu0 0.0
    %v2540 = vand.u32 %v2065, 4294901760
    %v2541 = vsub.f32 %v2065, %v2540
    %v2542 = vand.u32 %v2541, 4294901760
    %2543 = vmatpush1.msra.mxu0 %v2542
    %2544 = vmatprep.subr.mxu0 0.0
    %v2545 = vand.u32 %v2064, 4294901760
    %v2546 = vsub.f32 %v2064, %v2545
    %v2547 = vand.u32 %v2546, 4294901760
    %2548 = vmatpush1.msra.mxu0 %v2547
    %2549 = vmatprep.subr.mxu0 0.0
    %v2550 = vand.u32 %v2063, 4294901760
    %v2551 = vsub.f32 %v2063, %v2550
    %v2552 = vand.u32 %v2551, 4294901760
    %2553 = vmatpush1.msra.mxu0 %v2552
    %2554 = vmatprep.subr.mxu0 0.0
    %v2555 = vand.u32 %v2062, 4294901760
    %v2556 = vsub.f32 %v2062, %v2555
    %v2557 = vand.u32 %v2556, 4294901760
    %2558 = vmatpush1.msra.mxu0 %v2557
    %2559 = vmatprep.subr.mxu0 0.0
    %v2560 = vand.u32 %v2061, 4294901760
    %v2561 = vsub.f32 %v2061, %v2560
    %v2562 = vand.u32 %v2561, 4294901760
    %2563 = vmatpush1.msra.mxu0 %v2562
    %2564 = vmatprep.subr.mxu0 0.0
    %v2565 = vand.u32 %v2060, 4294901760
    %v2566 = vsub.f32 %v2060, %v2565
    %v2567 = vand.u32 %v2566, 4294901760
    %2568 = vmatpush1.msra.mxu0 %v2567
    %2569 = vmatprep.subr.mxu0 0.0
    %v2570 = vand.u32 %v2059, 4294901760
    %v2571 = vsub.f32 %v2059, %v2570
    %v2572 = vand.u32 %v2571, 4294901760
    %2573 = vmatpush1.msra.mxu0 %v2572
    %2574 = vmatprep.subr.mxu0 0.0
    %v2575 = vand.u32 %v2058, 4294901760
    %v2576 = vsub.f32 %v2058, %v2575
    %v2577 = vand.u32 %v2576, 4294901760
    %2578 = vmatpush1.msra.mxu0 %v2577
    %2579 = vmatprep.subr.mxu0 0.0
    %v2580 = vand.u32 %v2057, 4294901760
    %v2581 = vsub.f32 %v2057, %v2580
    %v2582 = vand.u32 %v2581, 4294901760
    %2583 = vmatpush1.msra.mxu0 %v2582
    %2584 = vmatprep.subr.mxu0 0.0
    %v2585 = vand.u32 %v2056, 4294901760
    %v2586 = vsub.f32 %v2056, %v2585
    %v2587 = vand.u32 %v2586, 4294901760
    %2588 = vmatpush1.msra.mxu0 %v2587
    %2589 = vmatprep.subr.mxu0 0.0
    %v2590 = vand.u32 %v2055, 4294901760
    %v2591 = vsub.f32 %v2055, %v2590
    %v2592 = vand.u32 %v2591, 4294901760
    %2593 = vmatpush1.msra.mxu0 %v2592
    %2594 = vmatprep.subr.mxu0 0.0
    %2595 = vmatpush2.msra.mxu0 0.0
    %2596 = vmatprep.subr.mxu0 0.0
    %2597 = vmatpush2.msra.mxu0 0.0
    %2598 = vmatprep.subr.mxu0 0.0
    %2599 = vmatpush2.msra.mxu0 0.0
    %2600 = vmatprep.subr.mxu0 0.0
    %2601 = vmatpush2.msra.mxu0 0.0
    %2602 = vmatprep.subr.mxu0 0.0
    %2603 = vmatpush2.msra.mxu0 0.0
    %2604 = vmatprep.subr.mxu0 0.0
    %2605 = vmatpush2.msra.mxu0 0.0
    %2606 = vmatprep.subr.mxu0 0.0
    %2607 = vmatpush2.msra.mxu0 0.0
    %2608 = vmatprep.subr.mxu0 0.0
    %2609 = vmatpush2.msra.mxu0 0.0
    %2610 = vmatprep.subr.mxu0 0.0
    %2611 = vmatpush2.msra.mxu0 0.0
    %2612 = vmatprep.subr.mxu0 0.0
    %2613 = vmatpush2.msra.mxu0 0.0
    %2614 = vmatprep.subr.mxu0 0.0
    %2615 = vmatpush2.msra.mxu0 0.0
    %2616 = vmatprep.subr.mxu0 0.0
    %2617 = vmatpush2.msra.mxu0 0.0
    %2618 = vmatprep.subr.mxu0 0.0
    %2619 = vmatpush2.msra.mxu0 0.0
    %2620 = vmatprep.subr.mxu0 0.0
    %2621 = vmatpush2.msra.mxu0 0.0
    %2622 = vmatprep.subr.mxu0 0.0
    %2623 = vmatpush2.msra.mxu0 0.0
    %2624 = vmatprep.subr.mxu0 0.0
    %2625 = vmatpush2.msra.mxu0 0.0
    %2626 = vmatprep.mubr.f32.mxu0 0.0
    %v2627 = vand.u32 %v2053, 4294901760
    %2628 = vmatmul.mubr.f32.gmra.mxu0 %v2627
    %v2629 = vpop.f32.mrf.mxu0
    %v2630 = vadd.f32 %v2511, %v2629
    %v2631 = vpop.f32.mrf.mxu0
    %2632 = vdwg.mxu0
    %2633 = vmatprep.subr.mxu0 0.0
    %v2634 = vand.u32 %v2070, 4294901760
    %2635 = vmatpush1.msra.mxu0 %v2634
    %2636 = vmatprep.subr.mxu0 0.0
    %v2637 = vand.u32 %v2069, 4294901760
    %2638 = vmatpush1.msra.mxu0 %v2637
    %2639 = vmatprep.subr.mxu0 0.0
    %v2640 = vand.u32 %v2068, 4294901760
    %2641 = vmatpush1.msra.mxu0 %v2640
    %2642 = vmatprep.subr.mxu0 0.0
    %v2643 = vand.u32 %v2067, 4294901760
    %2644 = vmatpush1.msra.mxu0 %v2643
    %2645 = vmatprep.subr.mxu0 0.0
    %v2646 = vand.u32 %v2066, 4294901760
    %2647 = vmatpush1.msra.mxu0 %v2646
    %2648 = vmatprep.subr.mxu0 0.0
    %v2649 = vand.u32 %v2065, 4294901760
    %2650 = vmatpush1.msra.mxu0 %v2649
    %2651 = vmatprep.subr.mxu0 0.0
    %v2652 = vand.u32 %v2064, 4294901760
    %2653 = vmatpush1.msra.mxu0 %v2652
    %2654 = vmatprep.subr.mxu0 0.0
    %v2655 = vand.u32 %v2063, 4294901760
    %2656 = vmatpush1.msra.mxu0 %v2655
    %2657 = vmatprep.subr.mxu0 0.0
    %v2658 = vand.u32 %v2062, 4294901760
    %2659 = vmatpush1.msra.mxu0 %v2658
    %2660 = vmatprep.subr.mxu0 0.0
    %v2661 = vand.u32 %v2061, 4294901760
    %2662 = vmatpush1.msra.mxu0 %v2661
    %2663 = vmatprep.subr.mxu0 0.0
    %v2664 = vand.u32 %v2060, 4294901760
    %2665 = vmatpush1.msra.mxu0 %v2664
    %2666 = vmatprep.subr.mxu0 0.0
    %v2667 = vand.u32 %v2059, 4294901760
    %2668 = vmatpush1.msra.mxu0 %v2667
    %2669 = vmatprep.subr.mxu0 0.0
    %v2670 = vand.u32 %v2058, 4294901760
    %2671 = vmatpush1.msra.mxu0 %v2670
    %2672 = vmatprep.subr.mxu0 0.0
    %v2673 = vand.u32 %v2057, 4294901760
    %2674 = vmatpush1.msra.mxu0 %v2673
    %2675 = vmatprep.subr.mxu0 0.0
    %v2676 = vand.u32 %v2056, 4294901760
    %2677 = vmatpush1.msra.mxu0 %v2676
    %2678 = vmatprep.subr.mxu0 0.0
    %v2679 = vand.u32 %v2055, 4294901760
    %2680 = vmatpush1.msra.mxu0 %v2679
    %2681 = vmatprep.subr.mxu0 0.0
    %2682 = vmatpush2.msra.mxu0 0.0
    %2683 = vmatprep.subr.mxu0 0.0
    %2684 = vmatpush2.msra.mxu0 0.0
    %2685 = vmatprep.subr.mxu0 0.0
    %2686 = vmatpush2.msra.mxu0 0.0
    %2687 = vmatprep.subr.mxu0 0.0
    %2688 = vmatpush2.msra.mxu0 0.0
    %2689 = vmatprep.subr.mxu0 0.0
    %2690 = vmatpush2.msra.mxu0 0.0
    %2691 = vmatprep.subr.mxu0 0.0
    %2692 = vmatpush2.msra.mxu0 0.0
    %2693 = vmatprep.subr.mxu0 0.0
    %2694 = vmatpush2.msra.mxu0 0.0
    %2695 = vmatprep.subr.mxu0 0.0
    %2696 = vmatpush2.msra.mxu0 0.0
    %2697 = vmatprep.subr.mxu0 0.0
    %2698 = vmatpush2.msra.mxu0 0.0
    %2699 = vmatprep.subr.mxu0 0.0
    %2700 = vmatpush2.msra.mxu0 0.0
    %2701 = vmatprep.subr.mxu0 0.0
    %2702 = vmatpush2.msra.mxu0 0.0
    %2703 = vmatprep.subr.mxu0 0.0
    %2704 = vmatpush2.msra.mxu0 0.0
    %2705 = vmatprep.subr.mxu0 0.0
    %2706 = vmatpush2.msra.mxu0 0.0
    %2707 = vmatprep.subr.mxu0 0.0
    %2708 = vmatpush2.msra.mxu0 0.0
    %2709 = vmatprep.subr.mxu0 0.0
    %2710 = vmatpush2.msra.mxu0 0.0
    %2711 = vmatprep.subr.mxu0 0.0
    %2712 = vmatpush2.msra.mxu0 0.0
    %2713 = vmatprep.mubr.f32.mxu0 0.0
    %v2714 = vand.u32 %v2053, 4294901760
    %2715 = vmatmul.mubr.f32.gmra.mxu0 %v2714
    %v2716 = vpop.f32.mrf.mxu0
    %v2717 = vadd.f32 %v2630, %v2716
    %v2718 = vpop.f32.mrf.mxu0
    %2719 = vdwg.mxu0
    %v2720 = vmax.f32 %v2717, 0.0
    %s2721 = scalar_lea.vmem [#allocation5], 512
    %v2722 = vld [vmem:[%s2721] sm:$0xff]
    %v2723 = vld [vmem:[%s2721 + $0x8] sm:$0xff]
    %v2724 = vld [vmem:[%s2721 + $0x10] sm:$0xff]
    %v2725 = vld [vmem:[%s2721 + $0x18] sm:$0xff]
    %v2726 = vld [vmem:[%s2721 + $0x20] sm:$0xff]
    %v2727 = vld [vmem:[%s2721 + $0x28] sm:$0xff]
    %v2728 = vld [vmem:[%s2721 + $0x30] sm:$0xff]
    %v2729 = vld [vmem:[%s2721 + $0x38] sm:$0xff]
    %v2730 = vld [vmem:[%s2721 + $0x40] sm:$0xff]
    %v2731 = vld [vmem:[%s2721 + $0x48] sm:$0xff]
    %v2732 = vld [vmem:[%s2721 + $0x50] sm:$0xff]
    %v2733 = vld [vmem:[%s2721 + $0x58] sm:$0xff]
    %v2734 = vld [vmem:[%s2721 + $0x60] sm:$0xff]
    %v2735 = vld [vmem:[%s2721 + $0x68] sm:$0xff]
    %v2736 = vld [vmem:[%s2721 + $0x70] sm:$0xff]
    %v2737 = vld [vmem:[%s2721 + $0x78] sm:$0xff]
    %s2738 = scalar_lea.vmem [#allocation7], 4
    %v2739 = vld [vmem:[%s2738] sm:$0x1]
    %v2741 = vlaneseq
    %v2742 = vshrl.u32 %v2741, 7
    %v2743 = vsub.s32 0, %v2742
    %v2744 = vrot.slane %v2739, %v2743
    %2746 = vmatprep.subr.mxu0 0.0
    %v2747 = vand.u32 %v2737, 4294901760
    %2748 = vmatpush1.msra.mxu0 %v2747
    %2749 = vmatprep.subr.mxu0 0.0
    %v2750 = vand.u32 %v2736, 4294901760
    %2751 = vmatpush1.msra.mxu0 %v2750
    %2752 = vmatprep.subr.mxu0 0.0
    %v2753 = vand.u32 %v2735, 4294901760
    %2754 = vmatpush1.msra.mxu0 %v2753
    %2755 = vmatprep.subr.mxu0 0.0
    %v2756 = vand.u32 %v2734, 4294901760
    %2757 = vmatpush1.msra.mxu0 %v2756
    %2758 = vmatprep.subr.mxu0 0.0
    %v2759 = vand.u32 %v2733, 4294901760
    %2760 = vmatpush1.msra.mxu0 %v2759
    %2761 = vmatprep.subr.mxu0 0.0
    %v2762 = vand.u32 %v2732, 4294901760
    %2763 = vmatpush1.msra.mxu0 %v2762
    %2764 = vmatprep.subr.mxu0 0.0
    %v2765 = vand.u32 %v2731, 4294901760
    %2766 = vmatpush1.msra.mxu0 %v2765
    %2767 = vmatprep.subr.mxu0 0.0
    %v2768 = vand.u32 %v2730, 4294901760
    %2769 = vmatpush1.msra.mxu0 %v2768
    %2770 = vmatprep.subr.mxu0 0.0
    %v2771 = vand.u32 %v2729, 4294901760
    %2772 = vmatpush1.msra.mxu0 %v2771
    %2773 = vmatprep.subr.mxu0 0.0
    %v2774 = vand.u32 %v2728, 4294901760
    %2775 = vmatpush1.msra.mxu0 %v2774
    %2776 = vmatprep.subr.mxu0 0.0
    %v2777 = vand.u32 %v2727, 4294901760
    %2778 = vmatpush1.msra.mxu0 %v2777
    %2779 = vmatprep.subr.mxu0 0.0
    %v2780 = vand.u32 %v2726, 4294901760
    %2781 = vmatpush1.msra.mxu0 %v2780
    %2782 = vmatprep.subr.mxu0 0.0
    %v2783 = vand.u32 %v2725, 4294901760
    %2784 = vmatpush1.msra.mxu0 %v2783
    %2785 = vmatprep.subr.mxu0 0.0
    %v2786 = vand.u32 %v2724, 4294901760
    %2787 = vmatpush1.msra.mxu0 %v2786
    %2788 = vmatprep.subr.mxu0 0.0
    %v2789 = vand.u32 %v2723, 4294901760
    %2790 = vmatpush1.msra.mxu0 %v2789
    %2791 = vmatprep.subr.mxu0 0.0
    %v2792 = vand.u32 %v2722, 4294901760
    %2793 = vmatpush1.msra.mxu0 %v2792
    %2794 = vmatprep.subr.mxu0 0.0
    %2795 = vmatpush2.msra.mxu0 0.0
    %2796 = vmatprep.subr.mxu0 0.0
    %2797 = vmatpush2.msra.mxu0 0.0
    %2798 = vmatprep.subr.mxu0 0.0
    %2799 = vmatpush2.msra.mxu0 0.0
    %2800 = vmatprep.subr.mxu0 0.0
    %2801 = vmatpush2.msra.mxu0 0.0
    %2802 = vmatprep.subr.mxu0 0.0
    %2803 = vmatpush2.msra.mxu0 0.0
    %2804 = vmatprep.subr.mxu0 0.0
    %2805 = vmatpush2.msra.mxu0 0.0
    %2806 = vmatprep.subr.mxu0 0.0
    %2807 = vmatpush2.msra.mxu0 0.0
    %2808 = vmatprep.subr.mxu0 0.0
    %2809 = vmatpush2.msra.mxu0 0.0
    %2810 = vmatprep.subr.mxu0 0.0
    %2811 = vmatpush2.msra.mxu0 0.0
    %2812 = vmatprep.subr.mxu0 0.0
    %2813 = vmatpush2.msra.mxu0 0.0
    %2814 = vmatprep.subr.mxu0 0.0
    %2815 = vmatpush2.msra.mxu0 0.0
    %2816 = vmatprep.subr.mxu0 0.0
    %2817 = vmatpush2.msra.mxu0 0.0
    %2818 = vmatprep.subr.mxu0 0.0
    %2819 = vmatpush2.msra.mxu0 0.0
    %2820 = vmatprep.subr.mxu0 0.0
    %2821 = vmatpush2.msra.mxu0 0.0
    %2822 = vmatprep.subr.mxu0 0.0
    %2823 = vmatpush2.msra.mxu0 0.0
    %2824 = vmatprep.subr.mxu0 0.0
    %2825 = vmatpush2.msra.mxu0 0.0
    %2826 = vmatprep.mubr.f32.mxu0 0.0
    %v2827 = vand.u32 %v2720, 4294901760
    %v2828 = vsub.f32 %v2720, %v2827
    %v2829 = vand.u32 %v2828, 4294901760
    %v2830 = vsub.f32 %v2828, %v2829
    %v2831 = vand.u32 %v2830, 4294901760
    %2832 = vmatmul.mubr.f32.gmra.mxu0 %v2831
    %v2833 = vpop.f32.mrf.mxu0
    %v2834 = vadd.f32 %v2744, %v2833
    %v2835 = vpop.f32.mrf.mxu0
    %2836 = vdwg.mxu0
    %2837 = vmatprep.subr.mxu0 0.0
    %v2838 = vand.u32 %v2737, 4294901760
    %v2839 = vsub.f32 %v2737, %v2838
    %v2840 = vand.u32 %v2839, 4294901760
    %v2841 = vsub.f32 %v2839, %v2840
    %v2842 = vand.u32 %v2841, 4294901760
    %2843 = vmatpush1.msra.mxu0 %v2842
    %2844 = vmatprep.subr.mxu0 0.0
    %v2845 = vand.u32 %v2736, 4294901760
    %v2846 = vsub.f32 %v2736, %v2845
    %v2847 = vand.u32 %v2846, 4294901760
    %v2848 = vsub.f32 %v2846, %v2847
    %v2849 = vand.u32 %v2848, 4294901760
    %2850 = vmatpush1.msra.mxu0 %v2849
    %2851 = vmatprep.subr.mxu0 0.0
    %v2852 = vand.u32 %v2735, 4294901760
    %v2853 = vsub.f32 %v2735, %v2852
    %v2854 = vand.u32 %v2853, 4294901760
    %v2855 = vsub.f32 %v2853, %v2854
    %v2856 = vand.u32 %v2855, 4294901760
    %2857 = vmatpush1.msra.mxu0 %v2856
    %2858 = vmatprep.subr.mxu0 0.0
    %v2859 = vand.u32 %v2734, 4294901760
    %v2860 = vsub.f32 %v2734, %v2859
    %v2861 = vand.u32 %v2860, 4294901760
    %v2862 = vsub.f32 %v2860, %v2861
    %v2863 = vand.u32 %v2862, 4294901760
    %2864 = vmatpush1.msra.mxu0 %v2863
    %2865 = vmatprep.subr.mxu0 0.0
    %v2866 = vand.u32 %v2733, 4294901760
    %v2867 = vsub.f32 %v2733, %v2866
    %v2868 = vand.u32 %v2867, 4294901760
    %v2869 = vsub.f32 %v2867, %v2868
    %v2870 = vand.u32 %v2869, 4294901760
    %2871 = vmatpush1.msra.mxu0 %v2870
    %2872 = vmatprep.subr.mxu0 0.0
    %v2873 = vand.u32 %v2732, 4294901760
    %v2874 = vsub.f32 %v2732, %v2873
    %v2875 = vand.u32 %v2874, 4294901760
    %v2876 = vsub.f32 %v2874, %v2875
    %v2877 = vand.u32 %v2876, 4294901760
    %2878 = vmatpush1.msra.mxu0 %v2877
    %2879 = vmatprep.subr.mxu0 0.0
    %v2880 = vand.u32 %v2731, 4294901760
    %v2881 = vsub.f32 %v2731, %v2880
    %v2882 = vand.u32 %v2881, 4294901760
    %v2883 = vsub.f32 %v2881, %v2882
    %v2884 = vand.u32 %v2883, 4294901760
    %2885 = vmatpush1.msra.mxu0 %v2884
    %2886 = vmatprep.subr.mxu0 0.0
    %v2887 = vand.u32 %v2730, 4294901760
    %v2888 = vsub.f32 %v2730, %v2887
    %v2889 = vand.u32 %v2888, 4294901760
    %v2890 = vsub.f32 %v2888, %v2889
    %v2891 = vand.u32 %v2890, 4294901760
    %2892 = vmatpush1.msra.mxu0 %v2891
    %2893 = vmatprep.subr.mxu0 0.0
    %v2894 = vand.u32 %v2729, 4294901760
    %v2895 = vsub.f32 %v2729, %v2894
    %v2896 = vand.u32 %v2895, 4294901760
    %v2897 = vsub.f32 %v2895, %v2896
    %v2898 = vand.u32 %v2897, 4294901760
    %2899 = vmatpush1.msra.mxu0 %v2898
    %2900 = vmatprep.subr.mxu0 0.0
    %v2901 = vand.u32 %v2728, 4294901760
    %v2902 = vsub.f32 %v2728, %v2901
    %v2903 = vand.u32 %v2902, 4294901760
    %v2904 = vsub.f32 %v2902, %v2903
    %v2905 = vand.u32 %v2904, 4294901760
    %2906 = vmatpush1.msra.mxu0 %v2905
    %2907 = vmatprep.subr.mxu0 0.0
    %v2908 = vand.u32 %v2727, 4294901760
    %v2909 = vsub.f32 %v2727, %v2908
    %v2910 = vand.u32 %v2909, 4294901760
    %v2911 = vsub.f32 %v2909, %v2910
    %v2912 = vand.u32 %v2911, 4294901760
    %2913 = vmatpush1.msra.mxu0 %v2912
    %2914 = vmatprep.subr.mxu0 0.0
    %v2915 = vand.u32 %v2726, 4294901760
    %v2916 = vsub.f32 %v2726, %v2915
    %v2917 = vand.u32 %v2916, 4294901760
    %v2918 = vsub.f32 %v2916, %v2917
    %v2919 = vand.u32 %v2918, 4294901760
    %2920 = vmatpush1.msra.mxu0 %v2919
    %2921 = vmatprep.subr.mxu0 0.0
    %v2922 = vand.u32 %v2725, 4294901760
    %v2923 = vsub.f32 %v2725, %v2922
    %v2924 = vand.u32 %v2923, 4294901760
    %v2925 = vsub.f32 %v2923, %v2924
    %v2926 = vand.u32 %v2925, 4294901760
    %2927 = vmatpush1.msra.mxu0 %v2926
    %2928 = vmatprep.subr.mxu0 0.0
    %v2929 = vand.u32 %v2724, 4294901760
    %v2930 = vsub.f32 %v2724, %v2929
    %v2931 = vand.u32 %v2930, 4294901760
    %v2932 = vsub.f32 %v2930, %v2931
    %v2933 = vand.u32 %v2932, 4294901760
    %2934 = vmatpush1.msra.mxu0 %v2933
    %2935 = vmatprep.subr.mxu0 0.0
    %v2936 = vand.u32 %v2723, 4294901760
    %v2937 = vsub.f32 %v2723, %v2936
    %v2938 = vand.u32 %v2937, 4294901760
    %v2939 = vsub.f32 %v2937, %v2938
    %v2940 = vand.u32 %v2939, 4294901760
    %2941 = vmatpush1.msra.mxu0 %v2940
    %2942 = vmatprep.subr.mxu0 0.0
    %v2943 = vand.u32 %v2722, 4294901760
    %v2944 = vsub.f32 %v2722, %v2943
    %v2945 = vand.u32 %v2944, 4294901760
    %v2946 = vsub.f32 %v2944, %v2945
    %v2947 = vand.u32 %v2946, 4294901760
    %2948 = vmatpush1.msra.mxu0 %v2947
    %2949 = vmatprep.subr.mxu0 0.0
    %2950 = vmatpush2.msra.mxu0 0.0
    %2951 = vmatprep.subr.mxu0 0.0
    %2952 = vmatpush2.msra.mxu0 0.0
    %2953 = vmatprep.subr.mxu0 0.0
    %2954 = vmatpush2.msra.mxu0 0.0
    %2955 = vmatprep.subr.mxu0 0.0
    %2956 = vmatpush2.msra.mxu0 0.0
    %2957 = vmatprep.subr.mxu0 0.0
    %2958 = vmatpush2.msra.mxu0 0.0
    %2959 = vmatprep.subr.mxu0 0.0
    %2960 = vmatpush2.msra.mxu0 0.0
    %2961 = vmatprep.subr.mxu0 0.0
    %2962 = vmatpush2.msra.mxu0 0.0
    %2963 = vmatprep.subr.mxu0 0.0
    %2964 = vmatpush2.msra.mxu0 0.0
    %2965 = vmatprep.subr.mxu0 0.0
    %2966 = vmatpush2.msra.mxu0 0.0
    %2967 = vmatprep.subr.mxu0 0.0
    %2968 = vmatpush2.msra.mxu0 0.0
    %2969 = vmatprep.subr.mxu0 0.0
    %2970 = vmatpush2.msra.mxu0 0.0
    %2971 = vmatprep.subr.mxu0 0.0
    %2972 = vmatpush2.msra.mxu0 0.0
    %2973 = vmatprep.subr.mxu0 0.0
    %2974 = vmatpush2.msra.mxu0 0.0
    %2975 = vmatprep.subr.mxu0 0.0
    %2976 = vmatpush2.msra.mxu0 0.0
    %2977 = vmatprep.subr.mxu0 0.0
    %2978 = vmatpush2.msra.mxu0 0.0
    %2979 = vmatprep.subr.mxu0 0.0
    %2980 = vmatpush2.msra.mxu0 0.0
    %2981 = vmatprep.mubr.f32.mxu0 0.0
    %v2982 = vand.u32 %v2720, 4294901760
    %2983 = vmatmul.mubr.f32.gmra.mxu0 %v2982
    %v2984 = vpop.f32.mrf.mxu0
    %v2985 = vadd.f32 %v2834, %v2984
    %v2986 = vpop.f32.mrf.mxu0
    %2987 = vdwg.mxu0
    %2988 = vmatprep.subr.mxu0 0.0
    %v2989 = vand.u32 %v2737, 4294901760
    %v2990 = vsub.f32 %v2737, %v2989
    %2991 = vmatpush1.msra.mxu0 %v2990
    %2992 = vmatprep.subr.mxu0 0.0
    %v2993 = vand.u32 %v2736, 4294901760
    %v2994 = vsub.f32 %v2736, %v2993
    %2995 = vmatpush1.msra.mxu0 %v2994
    %2996 = vmatprep.subr.mxu0 0.0
    %v2997 = vand.u32 %v2735, 4294901760
    %v2998 = vsub.f32 %v2735, %v2997
    %2999 = vmatpush1.msra.mxu0 %v2998
    %3000 = vmatprep.subr.mxu0 0.0
    %v3001 = vand.u32 %v2734, 4294901760
    %v3002 = vsub.f32 %v2734, %v3001
    %3003 = vmatpush1.msra.mxu0 %v3002
    %3004 = vmatprep.subr.mxu0 0.0
    %v3005 = vand.u32 %v2733, 4294901760
    %v3006 = vsub.f32 %v2733, %v3005
    %3007 = vmatpush1.msra.mxu0 %v3006
    %3008 = vmatprep.subr.mxu0 0.0
    %v3009 = vand.u32 %v2732, 4294901760
    %v3010 = vsub.f32 %v2732, %v3009
    %3011 = vmatpush1.msra.mxu0 %v3010
    %3012 = vmatprep.subr.mxu0 0.0
    %v3013 = vand.u32 %v2731, 4294901760
    %v3014 = vsub.f32 %v2731, %v3013
    %3015 = vmatpush1.msra.mxu0 %v3014
    %3016 = vmatprep.subr.mxu0 0.0
    %v3017 = vand.u32 %v2730, 4294901760
    %v3018 = vsub.f32 %v2730, %v3017
    %3019 = vmatpush1.msra.mxu0 %v3018
    %3020 = vmatprep.subr.mxu0 0.0
    %v3021 = vand.u32 %v2729, 4294901760
    %v3022 = vsub.f32 %v2729, %v3021
    %3023 = vmatpush1.msra.mxu0 %v3022
    %3024 = vmatprep.subr.mxu0 0.0
    %v3025 = vand.u32 %v2728, 4294901760
    %v3026 = vsub.f32 %v2728, %v3025
    %3027 = vmatpush1.msra.mxu0 %v3026
    %3028 = vmatprep.subr.mxu0 0.0
    %v3029 = vand.u32 %v2727, 4294901760
    %v3030 = vsub.f32 %v2727, %v3029
    %3031 = vmatpush1.msra.mxu0 %v3030
    %3032 = vmatprep.subr.mxu0 0.0
    %v3033 = vand.u32 %v2726, 4294901760
    %v3034 = vsub.f32 %v2726, %v3033
    %3035 = vmatpush1.msra.mxu0 %v3034
    %3036 = vmatprep.subr.mxu0 0.0
    %v3037 = vand.u32 %v2725, 4294901760
    %v3038 = vsub.f32 %v2725, %v3037
    %3039 = vmatpush1.msra.mxu0 %v3038
    %3040 = vmatprep.subr.mxu0 0.0
    %v3041 = vand.u32 %v2724, 4294901760
    %v3042 = vsub.f32 %v2724, %v3041
    %3043 = vmatpush1.msra.mxu0 %v3042
    %3044 = vmatprep.subr.mxu0 0.0
    %v3045 = vand.u32 %v2723, 4294901760
    %v3046 = vsub.f32 %v2723, %v3045
    %3047 = vmatpush1.msra.mxu0 %v3046
    %3048 = vmatprep.subr.mxu0 0.0
    %v3049 = vand.u32 %v2722, 4294901760
    %v3050 = vsub.f32 %v2722, %v3049
    %3051 = vmatpush1.msra.mxu0 %v3050
    %3052 = vmatprep.subr.mxu0 0.0
    %3053 = vmatpush2.msra.mxu0 0.0
    %3054 = vmatprep.subr.mxu0 0.0
    %3055 = vmatpush2.msra.mxu0 0.0
    %3056 = vmatprep.subr.mxu0 0.0
    %3057 = vmatpush2.msra.mxu0 0.0
    %3058 = vmatprep.subr.mxu0 0.0
    %3059 = vmatpush2.msra.mxu0 0.0
    %3060 = vmatprep.subr.mxu0 0.0
    %3061 = vmatpush2.msra.mxu0 0.0
    %3062 = vmatprep.subr.mxu0 0.0
    %3063 = vmatpush2.msra.mxu0 0.0
    %3064 = vmatprep.subr.mxu0 0.0
    %3065 = vmatpush2.msra.mxu0 0.0
    %3066 = vmatprep.subr.mxu0 0.0
    %3067 = vmatpush2.msra.mxu0 0.0
    %3068 = vmatprep.subr.mxu0 0.0
    %3069 = vmatpush2.msra.mxu0 0.0
    %3070 = vmatprep.subr.mxu0 0.0
    %3071 = vmatpush2.msra.mxu0 0.0
    %3072 = vmatprep.subr.mxu0 0.0
    %3073 = vmatpush2.msra.mxu0 0.0
    %3074 = vmatprep.subr.mxu0 0.0
    %3075 = vmatpush2.msra.mxu0 0.0
    %3076 = vmatprep.subr.mxu0 0.0
    %3077 = vmatpush2.msra.mxu0 0.0
    %3078 = vmatprep.subr.mxu0 0.0
    %3079 = vmatpush2.msra.mxu0 0.0
    %3080 = vmatprep.subr.mxu0 0.0
    %3081 = vmatpush2.msra.mxu0 0.0
    %3082 = vmatprep.subr.mxu0 0.0
    %3083 = vmatpush2.msra.mxu0 0.0
    %3084 = vmatprep.mubr.f32.mxu0 0.0
    %v3085 = vand.u32 %v2720, 4294901760
    %v3086 = vsub.f32 %v2720, %v3085
    %3087 = vmatmul.mubr.f32.gmra.mxu0 %v3086
    %v3088 = vpop.f32.mrf.mxu0
    %v3089 = vadd.f32 %v2985, %v3088
    %v3090 = vpop.f32.mrf.mxu0
    %3091 = vdwg.mxu0
    %3092 = vmatprep.subr.mxu0 0.0
    %v3093 = vand.u32 %v2737, 4294901760
    %3094 = vmatpush1.msra.mxu0 %v3093
    %3095 = vmatprep.subr.mxu0 0.0
    %v3096 = vand.u32 %v2736, 4294901760
    %3097 = vmatpush1.msra.mxu0 %v3096
    %3098 = vmatprep.subr.mxu0 0.0
    %v3099 = vand.u32 %v2735, 4294901760
    %3100 = vmatpush1.msra.mxu0 %v3099
    %3101 = vmatprep.subr.mxu0 0.0
    %v3102 = vand.u32 %v2734, 4294901760
    %3103 = vmatpush1.msra.mxu0 %v3102
    %3104 = vmatprep.subr.mxu0 0.0
    %v3105 = vand.u32 %v2733, 4294901760
    %3106 = vmatpush1.msra.mxu0 %v3105
    %3107 = vmatprep.subr.mxu0 0.0
    %v3108 = vand.u32 %v2732, 4294901760
    %3109 = vmatpush1.msra.mxu0 %v3108
    %3110 = vmatprep.subr.mxu0 0.0
    %v3111 = vand.u32 %v2731, 4294901760
    %3112 = vmatpush1.msra.mxu0 %v3111
    %3113 = vmatprep.subr.mxu0 0.0
    %v3114 = vand.u32 %v2730, 4294901760
    %3115 = vmatpush1.msra.mxu0 %v3114
    %3116 = vmatprep.subr.mxu0 0.0
    %v3117 = vand.u32 %v2729, 4294901760
    %3118 = vmatpush1.msra.mxu0 %v3117
    %3119 = vmatprep.subr.mxu0 0.0
    %v3120 = vand.u32 %v2728, 4294901760
    %3121 = vmatpush1.msra.mxu0 %v3120
    %3122 = vmatprep.subr.mxu0 0.0
    %v3123 = vand.u32 %v2727, 4294901760
    %3124 = vmatpush1.msra.mxu0 %v3123
    %3125 = vmatprep.subr.mxu0 0.0
    %v3126 = vand.u32 %v2726, 4294901760
    %3127 = vmatpush1.msra.mxu0 %v3126
    %3128 = vmatprep.subr.mxu0 0.0
    %v3129 = vand.u32 %v2725, 4294901760
    %3130 = vmatpush1.msra.mxu0 %v3129
    %3131 = vmatprep.subr.mxu0 0.0
    %v3132 = vand.u32 %v2724, 4294901760
    %3133 = vmatpush1.msra.mxu0 %v3132
    %3134 = vmatprep.subr.mxu0 0.0
    %v3135 = vand.u32 %v2723, 4294901760
    %3136 = vmatpush1.msra.mxu0 %v3135
    %3137 = vmatprep.subr.mxu0 0.0
    %v3138 = vand.u32 %v2722, 4294901760
    %3139 = vmatpush1.msra.mxu0 %v3138
    %3140 = vmatprep.subr.mxu0 0.0
    %3141 = vmatpush2.msra.mxu0 0.0
    %3142 = vmatprep.subr.mxu0 0.0
    %3143 = vmatpush2.msra.mxu0 0.0
    %3144 = vmatprep.subr.mxu0 0.0
    %3145 = vmatpush2.msra.mxu0 0.0
    %3146 = vmatprep.subr.mxu0 0.0
    %3147 = vmatpush2.msra.mxu0 0.0
    %3148 = vmatprep.subr.mxu0 0.0
    %3149 = vmatpush2.msra.mxu0 0.0
    %3150 = vmatprep.subr.mxu0 0.0
    %3151 = vmatpush2.msra.mxu0 0.0
    %3152 = vmatprep.subr.mxu0 0.0
    %3153 = vmatpush2.msra.mxu0 0.0
    %3154 = vmatprep.subr.mxu0 0.0
    %3155 = vmatpush2.msra.mxu0 0.0
    %3156 = vmatprep.subr.mxu0 0.0
    %3157 = vmatpush2.msra.mxu0 0.0
    %3158 = vmatprep.subr.mxu0 0.0
    %3159 = vmatpush2.msra.mxu0 0.0
    %3160 = vmatprep.subr.mxu0 0.0
    %3161 = vmatpush2.msra.mxu0 0.0
    %3162 = vmatprep.subr.mxu0 0.0
    %3163 = vmatpush2.msra.mxu0 0.0
    %3164 = vmatprep.subr.mxu0 0.0
    %3165 = vmatpush2.msra.mxu0 0.0
    %3166 = vmatprep.subr.mxu0 0.0
    %3167 = vmatpush2.msra.mxu0 0.0
    %3168 = vmatprep.subr.mxu0 0.0
    %3169 = vmatpush2.msra.mxu0 0.0
    %3170 = vmatprep.subr.mxu0 0.0
    %3171 = vmatpush2.msra.mxu0 0.0
    %3172 = vmatprep.mubr.f32.mxu0 0.0
    %v3173 = vand.u32 %v2720, 4294901760
    %v3174 = vsub.f32 %v2720, %v3173
    %v3175 = vand.u32 %v3174, 4294901760
    %3176 = vmatmul.mubr.f32.gmra.mxu0 %v3175
    %v3177 = vpop.f32.mrf.mxu0
    %v3178 = vadd.f32 %v3089, %v3177
    %v3179 = vpop.f32.mrf.mxu0
    %3180 = vdwg.mxu0
    %3181 = vmatprep.subr.mxu0 0.0
    %v3182 = vand.u32 %v2737, 4294901760
    %v3183 = vsub.f32 %v2737, %v3182
    %v3184 = vand.u32 %v3183, 4294901760
    %3185 = vmatpush1.msra.mxu0 %v3184
    %3186 = vmatprep.subr.mxu0 0.0
    %v3187 = vand.u32 %v2736, 4294901760
    %v3188 = vsub.f32 %v2736, %v3187
    %v3189 = vand.u32 %v3188, 4294901760
    %3190 = vmatpush1.msra.mxu0 %v3189
    %3191 = vmatprep.subr.mxu0 0.0
    %v3192 = vand.u32 %v2735, 4294901760
    %v3193 = vsub.f32 %v2735, %v3192
    %v3194 = vand.u32 %v3193, 4294901760
    %3195 = vmatpush1.msra.mxu0 %v3194
    %3196 = vmatprep.subr.mxu0 0.0
    %v3197 = vand.u32 %v2734, 4294901760
    %v3198 = vsub.f32 %v2734, %v3197
    %v3199 = vand.u32 %v3198, 4294901760
    %3200 = vmatpush1.msra.mxu0 %v3199
    %3201 = vmatprep.subr.mxu0 0.0
    %v3202 = vand.u32 %v2733, 4294901760
    %v3203 = vsub.f32 %v2733, %v3202
    %v3204 = vand.u32 %v3203, 4294901760
    %3205 = vmatpush1.msra.mxu0 %v3204
    %3206 = vmatprep.subr.mxu0 0.0
    %v3207 = vand.u32 %v2732, 4294901760
    %v3208 = vsub.f32 %v2732, %v3207
    %v3209 = vand.u32 %v3208, 4294901760
    %3210 = vmatpush1.msra.mxu0 %v3209
    %3211 = vmatprep.subr.mxu0 0.0
    %v3212 = vand.u32 %v2731, 4294901760
    %v3213 = vsub.f32 %v2731, %v3212
    %v3214 = vand.u32 %v3213, 4294901760
    %3215 = vmatpush1.msra.mxu0 %v3214
    %3216 = vmatprep.subr.mxu0 0.0
    %v3217 = vand.u32 %v2730, 4294901760
    %v3218 = vsub.f32 %v2730, %v3217
    %v3219 = vand.u32 %v3218, 4294901760
    %3220 = vmatpush1.msra.mxu0 %v3219
    %3221 = vmatprep.subr.mxu0 0.0
    %v3222 = vand.u32 %v2729, 4294901760
    %v3223 = vsub.f32 %v2729, %v3222
    %v3224 = vand.u32 %v3223, 4294901760
    %3225 = vmatpush1.msra.mxu0 %v3224
    %3226 = vmatprep.subr.mxu0 0.0
    %v3227 = vand.u32 %v2728, 4294901760
    %v3228 = vsub.f32 %v2728, %v3227
    %v3229 = vand.u32 %v3228, 4294901760
    %3230 = vmatpush1.msra.mxu0 %v3229
    %3231 = vmatprep.subr.mxu0 0.0
    %v3232 = vand.u32 %v2727, 4294901760
    %v3233 = vsub.f32 %v2727, %v3232
    %v3234 = vand.u32 %v3233, 4294901760
    %3235 = vmatpush1.msra.mxu0 %v3234
    %3236 = vmatprep.subr.mxu0 0.0
    %v3237 = vand.u32 %v2726, 4294901760
    %v3238 = vsub.f32 %v2726, %v3237
    %v3239 = vand.u32 %v3238, 4294901760
    %3240 = vmatpush1.msra.mxu0 %v3239
    %3241 = vmatprep.subr.mxu0 0.0
    %v3242 = vand.u32 %v2725, 4294901760
    %v3243 = vsub.f32 %v2725, %v3242
    %v3244 = vand.u32 %v3243, 4294901760
    %3245 = vmatpush1.msra.mxu0 %v3244
    %3246 = vmatprep.subr.mxu0 0.0
    %v3247 = vand.u32 %v2724, 4294901760
    %v3248 = vsub.f32 %v2724, %v3247
    %v3249 = vand.u32 %v3248, 4294901760
    %3250 = vmatpush1.msra.mxu0 %v3249
    %3251 = vmatprep.subr.mxu0 0.0
    %v3252 = vand.u32 %v2723, 4294901760
    %v3253 = vsub.f32 %v2723, %v3252
    %v3254 = vand.u32 %v3253, 4294901760
    %3255 = vmatpush1.msra.mxu0 %v3254
    %3256 = vmatprep.subr.mxu0 0.0
    %v3257 = vand.u32 %v2722, 4294901760
    %v3258 = vsub.f32 %v2722, %v3257
    %v3259 = vand.u32 %v3258, 4294901760
    %3260 = vmatpush1.msra.mxu0 %v3259
    %3261 = vmatprep.subr.mxu0 0.0
    %3262 = vmatpush2.msra.mxu0 0.0
    %3263 = vmatprep.subr.mxu0 0.0
    %3264 = vmatpush2.msra.mxu0 0.0
    %3265 = vmatprep.subr.mxu0 0.0
    %3266 = vmatpush2.msra.mxu0 0.0
    %3267 = vmatprep.subr.mxu0 0.0
    %3268 = vmatpush2.msra.mxu0 0.0
    %3269 = vmatprep.subr.mxu0 0.0
    %3270 = vmatpush2.msra.mxu0 0.0
    %3271 = vmatprep.subr.mxu0 0.0
    %3272 = vmatpush2.msra.mxu0 0.0
    %3273 = vmatprep.subr.mxu0 0.0
    %3274 = vmatpush2.msra.mxu0 0.0
    %3275 = vmatprep.subr.mxu0 0.0
    %3276 = vmatpush2.msra.mxu0 0.0
    %3277 = vmatprep.subr.mxu0 0.0
    %3278 = vmatpush2.msra.mxu0 0.0
    %3279 = vmatprep.subr.mxu0 0.0
    %3280 = vmatpush2.msra.mxu0 0.0
    %3281 = vmatprep.subr.mxu0 0.0
    %3282 = vmatpush2.msra.mxu0 0.0
    %3283 = vmatprep.subr.mxu0 0.0
    %3284 = vmatpush2.msra.mxu0 0.0
    %3285 = vmatprep.subr.mxu0 0.0
    %3286 = vmatpush2.msra.mxu0 0.0
    %3287 = vmatprep.subr.mxu0 0.0
    %3288 = vmatpush2.msra.mxu0 0.0
    %3289 = vmatprep.subr.mxu0 0.0
    %3290 = vmatpush2.msra.mxu0 0.0
    %3291 = vmatprep.subr.mxu0 0.0
    %3292 = vmatpush2.msra.mxu0 0.0
    %3293 = vmatprep.mubr.f32.mxu0 0.0
    %v3294 = vand.u32 %v2720, 4294901760
    %3295 = vmatmul.mubr.f32.gmra.mxu0 %v3294
    %v3296 = vpop.f32.mrf.mxu0
    %v3297 = vadd.f32 %v3178, %v3296
    %v3298 = vpop.f32.mrf.mxu0
    %3299 = vdwg.mxu0
    %3300 = vmatprep.subr.mxu0 0.0
    %v3301 = vand.u32 %v2737, 4294901760
    %3302 = vmatpush1.msra.mxu0 %v3301
    %3303 = vmatprep.subr.mxu0 0.0
    %v3304 = vand.u32 %v2736, 4294901760
    %3305 = vmatpush1.msra.mxu0 %v3304
    %3306 = vmatprep.subr.mxu0 0.0
    %v3307 = vand.u32 %v2735, 4294901760
    %3308 = vmatpush1.msra.mxu0 %v3307
    %3309 = vmatprep.subr.mxu0 0.0
    %v3310 = vand.u32 %v2734, 4294901760
    %3311 = vmatpush1.msra.mxu0 %v3310
    %3312 = vmatprep.subr.mxu0 0.0
    %v3313 = vand.u32 %v2733, 4294901760
    %3314 = vmatpush1.msra.mxu0 %v3313
    %3315 = vmatprep.subr.mxu0 0.0
    %v3316 = vand.u32 %v2732, 4294901760
    %3317 = vmatpush1.msra.mxu0 %v3316
    %3318 = vmatprep.subr.mxu0 0.0
    %v3319 = vand.u32 %v2731, 4294901760
    %3320 = vmatpush1.msra.mxu0 %v3319
    %3321 = vmatprep.subr.mxu0 0.0
    %v3322 = vand.u32 %v2730, 4294901760
    %3323 = vmatpush1.msra.mxu0 %v3322
    %3324 = vmatprep.subr.mxu0 0.0
    %v3325 = vand.u32 %v2729, 4294901760
    %3326 = vmatpush1.msra.mxu0 %v3325
    %3327 = vmatprep.subr.mxu0 0.0
    %v3328 = vand.u32 %v2728, 4294901760
    %3329 = vmatpush1.msra.mxu0 %v3328
    %3330 = vmatprep.subr.mxu0 0.0
    %v3331 = vand.u32 %v2727, 4294901760
    %3332 = vmatpush1.msra.mxu0 %v3331
    %3333 = vmatprep.subr.mxu0 0.0
    %v3334 = vand.u32 %v2726, 4294901760
    %3335 = vmatpush1.msra.mxu0 %v3334
    %3336 = vmatprep.subr.mxu0 0.0
    %v3337 = vand.u32 %v2725, 4294901760
    %3338 = vmatpush1.msra.mxu0 %v3337
    %3339 = vmatprep.subr.mxu0 0.0
    %v3340 = vand.u32 %v2724, 4294901760
    %3341 = vmatpush1.msra.mxu0 %v3340
    %3342 = vmatprep.subr.mxu0 0.0
    %v3343 = vand.u32 %v2723, 4294901760
    %3344 = vmatpush1.msra.mxu0 %v3343
    %3345 = vmatprep.subr.mxu0 0.0
    %v3346 = vand.u32 %v2722, 4294901760
    %3347 = vmatpush1.msra.mxu0 %v3346
    %3348 = vmatprep.subr.mxu0 0.0
    %3349 = vmatpush2.msra.mxu0 0.0
    %3350 = vmatprep.subr.mxu0 0.0
    %3351 = vmatpush2.msra.mxu0 0.0
    %3352 = vmatprep.subr.mxu0 0.0
    %3353 = vmatpush2.msra.mxu0 0.0
    %3354 = vmatprep.subr.mxu0 0.0
    %3355 = vmatpush2.msra.mxu0 0.0
    %3356 = vmatprep.subr.mxu0 0.0
    %3357 = vmatpush2.msra.mxu0 0.0
    %3358 = vmatprep.subr.mxu0 0.0
    %3359 = vmatpush2.msra.mxu0 0.0
    %3360 = vmatprep.subr.mxu0 0.0
    %3361 = vmatpush2.msra.mxu0 0.0
    %3362 = vmatprep.subr.mxu0 0.0
    %3363 = vmatpush2.msra.mxu0 0.0
    %3364 = vmatprep.subr.mxu0 0.0
    %3365 = vmatpush2.msra.mxu0 0.0
    %3366 = vmatprep.subr.mxu0 0.0
    %3367 = vmatpush2.msra.mxu0 0.0
    %3368 = vmatprep.subr.mxu0 0.0
    %3369 = vmatpush2.msra.mxu0 0.0
    %3370 = vmatprep.subr.mxu0 0.0
    %3371 = vmatpush2.msra.mxu0 0.0
    %3372 = vmatprep.subr.mxu0 0.0
    %3373 = vmatpush2.msra.mxu0 0.0
    %3374 = vmatprep.subr.mxu0 0.0
    %3375 = vmatpush2.msra.mxu0 0.0
    %3376 = vmatprep.subr.mxu0 0.0
    %3377 = vmatpush2.msra.mxu0 0.0
    %3378 = vmatprep.subr.mxu0 0.0
    %3379 = vmatpush2.msra.mxu0 0.0
    %3380 = vmatprep.mubr.f32.mxu0 0.0
    %v3381 = vand.u32 %v2720, 4294901760
    %3382 = vmatmul.mubr.f32.gmra.mxu0 %v3381
    %v3383 = vpop.f32.mrf.mxu0
    %v3384 = vadd.f32 %v3297, %v3383
    %v3385 = vpop.f32.mrf.mxu0
    %3386 = vdwg.mxu0
    %v3387 = vmax.f32 %v3384, 0.0
    %s3388 = scalar_lea.vmem [#allocation5], 640
    %v3389 = vld [vmem:[%s3388] sm:$0xff]
    %v3390 = vld [vmem:[%s3388 + $0x8] sm:$0xff]
    %v3391 = vld [vmem:[%s3388 + $0x10] sm:$0xff]
    %v3392 = vld [vmem:[%s3388 + $0x18] sm:$0xff]
    %v3393 = vld [vmem:[%s3388 + $0x20] sm:$0xff]
    %v3394 = vld [vmem:[%s3388 + $0x28] sm:$0xff]
    %v3395 = vld [vmem:[%s3388 + $0x30] sm:$0xff]
    %v3396 = vld [vmem:[%s3388 + $0x38] sm:$0xff]
    %v3397 = vld [vmem:[%s3388 + $0x40] sm:$0xff]
    %v3398 = vld [vmem:[%s3388 + $0x48] sm:$0xff]
    %v3399 = vld [vmem:[%s3388 + $0x50] sm:$0xff]
    %v3400 = vld [vmem:[%s3388 + $0x58] sm:$0xff]
    %v3401 = vld [vmem:[%s3388 + $0x60] sm:$0xff]
    %v3402 = vld [vmem:[%s3388 + $0x68] sm:$0xff]
    %v3403 = vld [vmem:[%s3388 + $0x70] sm:$0xff]
    %v3404 = vld [vmem:[%s3388 + $0x78] sm:$0xff]
    %s3405 = scalar_lea.vmem [#allocation7], 5
    %v3406 = vld [vmem:[%s3405] sm:$0x1]
    %v3408 = vlaneseq
    %v3409 = vshrl.u32 %v3408, 7
    %v3410 = vsub.s32 0, %v3409
    %v3411 = vrot.slane %v3406, %v3410
    %3413 = vmatprep.subr.mxu0 0.0
    %v3414 = vand.u32 %v3404, 4294901760
    %3415 = vmatpush1.msra.mxu0 %v3414
    %3416 = vmatprep.subr.mxu0 0.0
    %v3417 = vand.u32 %v3403, 4294901760
    %3418 = vmatpush1.msra.mxu0 %v3417
    %3419 = vmatprep.subr.mxu0 0.0
    %v3420 = vand.u32 %v3402, 4294901760
    %3421 = vmatpush1.msra.mxu0 %v3420
    %3422 = vmatprep.subr.mxu0 0.0
    %v3423 = vand.u32 %v3401, 4294901760
    %3424 = vmatpush1.msra.mxu0 %v3423
    %3425 = vmatprep.subr.mxu0 0.0
    %v3426 = vand.u32 %v3400, 4294901760
    %3427 = vmatpush1.msra.mxu0 %v3426
    %3428 = vmatprep.subr.mxu0 0.0
    %v3429 = vand.u32 %v3399, 4294901760
    %3430 = vmatpush1.msra.mxu0 %v3429
    %3431 = vmatprep.subr.mxu0 0.0
    %v3432 = vand.u32 %v3398, 4294901760
    %3433 = vmatpush1.msra.mxu0 %v3432
    %3434 = vmatprep.subr.mxu0 0.0
    %v3435 = vand.u32 %v3397, 4294901760
    %3436 = vmatpush1.msra.mxu0 %v3435
    %3437 = vmatprep.subr.mxu0 0.0
    %v3438 = vand.u32 %v3396, 4294901760
    %3439 = vmatpush1.msra.mxu0 %v3438
    %3440 = vmatprep.subr.mxu0 0.0
    %v3441 = vand.u32 %v3395, 4294901760
    %3442 = vmatpush1.msra.mxu0 %v3441
    %3443 = vmatprep.subr.mxu0 0.0
    %v3444 = vand.u32 %v3394, 4294901760
    %3445 = vmatpush1.msra.mxu0 %v3444
    %3446 = vmatprep.subr.mxu0 0.0
    %v3447 = vand.u32 %v3393, 4294901760
    %3448 = vmatpush1.msra.mxu0 %v3447
    %3449 = vmatprep.subr.mxu0 0.0
    %v3450 = vand.u32 %v3392, 4294901760
    %3451 = vmatpush1.msra.mxu0 %v3450
    %3452 = vmatprep.subr.mxu0 0.0
    %v3453 = vand.u32 %v3391, 4294901760
    %3454 = vmatpush1.msra.mxu0 %v3453
    %3455 = vmatprep.subr.mxu0 0.0
    %v3456 = vand.u32 %v3390, 4294901760
    %3457 = vmatpush1.msra.mxu0 %v3456
    %3458 = vmatprep.subr.mxu0 0.0
    %v3459 = vand.u32 %v3389, 4294901760
    %3460 = vmatpush1.msra.mxu0 %v3459
    %3461 = vmatprep.subr.mxu0 0.0
    %3462 = vmatpush2.msra.mxu0 0.0
    %3463 = vmatprep.subr.mxu0 0.0
    %3464 = vmatpush2.msra.mxu0 0.0
    %3465 = vmatprep.subr.mxu0 0.0
    %3466 = vmatpush2.msra.mxu0 0.0
    %3467 = vmatprep.subr.mxu0 0.0
    %3468 = vmatpush2.msra.mxu0 0.0
    %3469 = vmatprep.subr.mxu0 0.0
    %3470 = vmatpush2.msra.mxu0 0.0
    %3471 = vmatprep.subr.mxu0 0.0
    %3472 = vmatpush2.msra.mxu0 0.0
    %3473 = vmatprep.subr.mxu0 0.0
    %3474 = vmatpush2.msra.mxu0 0.0
    %3475 = vmatprep.subr.mxu0 0.0
    %3476 = vmatpush2.msra.mxu0 0.0
    %3477 = vmatprep.subr.mxu0 0.0
    %3478 = vmatpush2.msra.mxu0 0.0
    %3479 = vmatprep.subr.mxu0 0.0
    %3480 = vmatpush2.msra.mxu0 0.0
    %3481 = vmatprep.subr.mxu0 0.0
    %3482 = vmatpush2.msra.mxu0 0.0
    %3483 = vmatprep.subr.mxu0 0.0
    %3484 = vmatpush2.msra.mxu0 0.0
    %3485 = vmatprep.subr.mxu0 0.0
    %3486 = vmatpush2.msra.mxu0 0.0
    %3487 = vmatprep.subr.mxu0 0.0
    %3488 = vmatpush2.msra.mxu0 0.0
    %3489 = vmatprep.subr.mxu0 0.0
    %3490 = vmatpush2.msra.mxu0 0.0
    %3491 = vmatprep.subr.mxu0 0.0
    %3492 = vmatpush2.msra.mxu0 0.0
    %3493 = vmatprep.mubr.f32.mxu0 0.0
    %v3494 = vand.u32 %v3387, 4294901760
    %v3495 = vsub.f32 %v3387, %v3494
    %v3496 = vand.u32 %v3495, 4294901760
    %v3497 = vsub.f32 %v3495, %v3496
    %v3498 = vand.u32 %v3497, 4294901760
    %3499 = vmatmul.mubr.f32.gmra.mxu0 %v3498
    %v3500 = vpop.f32.mrf.mxu0
    %v3501 = vadd.f32 %v3411, %v3500
    %v3502 = vpop.f32.mrf.mxu0
    %3503 = vdwg.mxu0
    %3504 = vmatprep.subr.mxu0 0.0
    %v3505 = vand.u32 %v3404, 4294901760
    %v3506 = vsub.f32 %v3404, %v3505
    %v3507 = vand.u32 %v3506, 4294901760
    %v3508 = vsub.f32 %v3506, %v3507
    %v3509 = vand.u32 %v3508, 4294901760
    %3510 = vmatpush1.msra.mxu0 %v3509
    %3511 = vmatprep.subr.mxu0 0.0
    %v3512 = vand.u32 %v3403, 4294901760
    %v3513 = vsub.f32 %v3403, %v3512
    %v3514 = vand.u32 %v3513, 4294901760
    %v3515 = vsub.f32 %v3513, %v3514
    %v3516 = vand.u32 %v3515, 4294901760
    %3517 = vmatpush1.msra.mxu0 %v3516
    %3518 = vmatprep.subr.mxu0 0.0
    %v3519 = vand.u32 %v3402, 4294901760
    %v3520 = vsub.f32 %v3402, %v3519
    %v3521 = vand.u32 %v3520, 4294901760
    %v3522 = vsub.f32 %v3520, %v3521
    %v3523 = vand.u32 %v3522, 4294901760
    %3524 = vmatpush1.msra.mxu0 %v3523
    %3525 = vmatprep.subr.mxu0 0.0
    %v3526 = vand.u32 %v3401, 4294901760
    %v3527 = vsub.f32 %v3401, %v3526
    %v3528 = vand.u32 %v3527, 4294901760
    %v3529 = vsub.f32 %v3527, %v3528
    %v3530 = vand.u32 %v3529, 4294901760
    %3531 = vmatpush1.msra.mxu0 %v3530
    %3532 = vmatprep.subr.mxu0 0.0
    %v3533 = vand.u32 %v3400, 4294901760
    %v3534 = vsub.f32 %v3400, %v3533
    %v3535 = vand.u32 %v3534, 4294901760
    %v3536 = vsub.f32 %v3534, %v3535
    %v3537 = vand.u32 %v3536, 4294901760
    %3538 = vmatpush1.msra.mxu0 %v3537
    %3539 = vmatprep.subr.mxu0 0.0
    %v3540 = vand.u32 %v3399, 4294901760
    %v3541 = vsub.f32 %v3399, %v3540
    %v3542 = vand.u32 %v3541, 4294901760
    %v3543 = vsub.f32 %v3541, %v3542
    %v3544 = vand.u32 %v3543, 4294901760
    %3545 = vmatpush1.msra.mxu0 %v3544
    %3546 = vmatprep.subr.mxu0 0.0
    %v3547 = vand.u32 %v3398, 4294901760
    %v3548 = vsub.f32 %v3398, %v3547
    %v3549 = vand.u32 %v3548, 4294901760
    %v3550 = vsub.f32 %v3548, %v3549
    %v3551 = vand.u32 %v3550, 4294901760
    %3552 = vmatpush1.msra.mxu0 %v3551
    %3553 = vmatprep.subr.mxu0 0.0
    %v3554 = vand.u32 %v3397, 4294901760
    %v3555 = vsub.f32 %v3397, %v3554
    %v3556 = vand.u32 %v3555, 4294901760
    %v3557 = vsub.f32 %v3555, %v3556
    %v3558 = vand.u32 %v3557, 4294901760
    %3559 = vmatpush1.msra.mxu0 %v3558
    %3560 = vmatprep.subr.mxu0 0.0
    %v3561 = vand.u32 %v3396, 4294901760
    %v3562 = vsub.f32 %v3396, %v3561
    %v3563 = vand.u32 %v3562, 4294901760
    %v3564 = vsub.f32 %v3562, %v3563
    %v3565 = vand.u32 %v3564, 4294901760
    %3566 = vmatpush1.msra.mxu0 %v3565
    %3567 = vmatprep.subr.mxu0 0.0
    %v3568 = vand.u32 %v3395, 4294901760
    %v3569 = vsub.f32 %v3395, %v3568
    %v3570 = vand.u32 %v3569, 4294901760
    %v3571 = vsub.f32 %v3569, %v3570
    %v3572 = vand.u32 %v3571, 4294901760
    %3573 = vmatpush1.msra.mxu0 %v3572
    %3574 = vmatprep.subr.mxu0 0.0
    %v3575 = vand.u32 %v3394, 4294901760
    %v3576 = vsub.f32 %v3394, %v3575
    %v3577 = vand.u32 %v3576, 4294901760
    %v3578 = vsub.f32 %v3576, %v3577
    %v3579 = vand.u32 %v3578, 4294901760
    %3580 = vmatpush1.msra.mxu0 %v3579
    %3581 = vmatprep.subr.mxu0 0.0
    %v3582 = vand.u32 %v3393, 4294901760
    %v3583 = vsub.f32 %v3393, %v3582
    %v3584 = vand.u32 %v3583, 4294901760
    %v3585 = vsub.f32 %v3583, %v3584
    %v3586 = vand.u32 %v3585, 4294901760
    %3587 = vmatpush1.msra.mxu0 %v3586
    %3588 = vmatprep.subr.mxu0 0.0
    %v3589 = vand.u32 %v3392, 4294901760
    %v3590 = vsub.f32 %v3392, %v3589
    %v3591 = vand.u32 %v3590, 4294901760
    %v3592 = vsub.f32 %v3590, %v3591
    %v3593 = vand.u32 %v3592, 4294901760
    %3594 = vmatpush1.msra.mxu0 %v3593
    %3595 = vmatprep.subr.mxu0 0.0
    %v3596 = vand.u32 %v3391, 4294901760
    %v3597 = vsub.f32 %v3391, %v3596
    %v3598 = vand.u32 %v3597, 4294901760
    %v3599 = vsub.f32 %v3597, %v3598
    %v3600 = vand.u32 %v3599, 4294901760
    %3601 = vmatpush1.msra.mxu0 %v3600
    %3602 = vmatprep.subr.mxu0 0.0
    %v3603 = vand.u32 %v3390, 4294901760
    %v3604 = vsub.f32 %v3390, %v3603
    %v3605 = vand.u32 %v3604, 4294901760
    %v3606 = vsub.f32 %v3604, %v3605
    %v3607 = vand.u32 %v3606, 4294901760
    %3608 = vmatpush1.msra.mxu0 %v3607
    %3609 = vmatprep.subr.mxu0 0.0
    %v3610 = vand.u32 %v3389, 4294901760
    %v3611 = vsub.f32 %v3389, %v3610
    %v3612 = vand.u32 %v3611, 4294901760
    %v3613 = vsub.f32 %v3611, %v3612
    %v3614 = vand.u32 %v3613, 4294901760
    %3615 = vmatpush1.msra.mxu0 %v3614
    %3616 = vmatprep.subr.mxu0 0.0
    %3617 = vmatpush2.msra.mxu0 0.0
    %3618 = vmatprep.subr.mxu0 0.0
    %3619 = vmatpush2.msra.mxu0 0.0
    %3620 = vmatprep.subr.mxu0 0.0
    %3621 = vmatpush2.msra.mxu0 0.0
    %3622 = vmatprep.subr.mxu0 0.0
    %3623 = vmatpush2.msra.mxu0 0.0
    %3624 = vmatprep.subr.mxu0 0.0
    %3625 = vmatpush2.msra.mxu0 0.0
    %3626 = vmatprep.subr.mxu0 0.0
    %3627 = vmatpush2.msra.mxu0 0.0
    %3628 = vmatprep.subr.mxu0 0.0
    %3629 = vmatpush2.msra.mxu0 0.0
    %3630 = vmatprep.subr.mxu0 0.0
    %3631 = vmatpush2.msra.mxu0 0.0
    %3632 = vmatprep.subr.mxu0 0.0
    %3633 = vmatpush2.msra.mxu0 0.0
    %3634 = vmatprep.subr.mxu0 0.0
    %3635 = vmatpush2.msra.mxu0 0.0
    %3636 = vmatprep.subr.mxu0 0.0
    %3637 = vmatpush2.msra.mxu0 0.0
    %3638 = vmatprep.subr.mxu0 0.0
    %3639 = vmatpush2.msra.mxu0 0.0
    %3640 = vmatprep.subr.mxu0 0.0
    %3641 = vmatpush2.msra.mxu0 0.0
    %3642 = vmatprep.subr.mxu0 0.0
    %3643 = vmatpush2.msra.mxu0 0.0
    %3644 = vmatprep.subr.mxu0 0.0
    %3645 = vmatpush2.msra.mxu0 0.0
    %3646 = vmatprep.subr.mxu0 0.0
    %3647 = vmatpush2.msra.mxu0 0.0
    %3648 = vmatprep.mubr.f32.mxu0 0.0
    %v3649 = vand.u32 %v3387, 4294901760
    %3650 = vmatmul.mubr.f32.gmra.mxu0 %v3649
    %v3651 = vpop.f32.mrf.mxu0
    %v3652 = vadd.f32 %v3501, %v3651
    %v3653 = vpop.f32.mrf.mxu0
    %3654 = vdwg.mxu0
    %3655 = vmatprep.subr.mxu0 0.0
    %v3656 = vand.u32 %v3404, 4294901760
    %v3657 = vsub.f32 %v3404, %v3656
    %3658 = vmatpush1.msra.mxu0 %v3657
    %3659 = vmatprep.subr.mxu0 0.0
    %v3660 = vand.u32 %v3403, 4294901760
    %v3661 = vsub.f32 %v3403, %v3660
    %3662 = vmatpush1.msra.mxu0 %v3661
    %3663 = vmatprep.subr.mxu0 0.0
    %v3664 = vand.u32 %v3402, 4294901760
    %v3665 = vsub.f32 %v3402, %v3664
    %3666 = vmatpush1.msra.mxu0 %v3665
    %3667 = vmatprep.subr.mxu0 0.0
    %v3668 = vand.u32 %v3401, 4294901760
    %v3669 = vsub.f32 %v3401, %v3668
    %3670 = vmatpush1.msra.mxu0 %v3669
    %3671 = vmatprep.subr.mxu0 0.0
    %v3672 = vand.u32 %v3400, 4294901760
    %v3673 = vsub.f32 %v3400, %v3672
    %3674 = vmatpush1.msra.mxu0 %v3673
    %3675 = vmatprep.subr.mxu0 0.0
    %v3676 = vand.u32 %v3399, 4294901760
    %v3677 = vsub.f32 %v3399, %v3676
    %3678 = vmatpush1.msra.mxu0 %v3677
    %3679 = vmatprep.subr.mxu0 0.0
    %v3680 = vand.u32 %v3398, 4294901760
    %v3681 = vsub.f32 %v3398, %v3680
    %3682 = vmatpush1.msra.mxu0 %v3681
    %3683 = vmatprep.subr.mxu0 0.0
    %v3684 = vand.u32 %v3397, 4294901760
    %v3685 = vsub.f32 %v3397, %v3684
    %3686 = vmatpush1.msra.mxu0 %v3685
    %3687 = vmatprep.subr.mxu0 0.0
    %v3688 = vand.u32 %v3396, 4294901760
    %v3689 = vsub.f32 %v3396, %v3688
    %3690 = vmatpush1.msra.mxu0 %v3689
    %3691 = vmatprep.subr.mxu0 0.0
    %v3692 = vand.u32 %v3395, 4294901760
    %v3693 = vsub.f32 %v3395, %v3692
    %3694 = vmatpush1.msra.mxu0 %v3693
    %3695 = vmatprep.subr.mxu0 0.0
    %v3696 = vand.u32 %v3394, 4294901760
    %v3697 = vsub.f32 %v3394, %v3696
    %3698 = vmatpush1.msra.mxu0 %v3697
    %3699 = vmatprep.subr.mxu0 0.0
    %v3700 = vand.u32 %v3393, 4294901760
    %v3701 = vsub.f32 %v3393, %v3700
    %3702 = vmatpush1.msra.mxu0 %v3701
    %3703 = vmatprep.subr.mxu0 0.0
    %v3704 = vand.u32 %v3392, 4294901760
    %v3705 = vsub.f32 %v3392, %v3704
    %3706 = vmatpush1.msra.mxu0 %v3705
    %3707 = vmatprep.subr.mxu0 0.0
    %v3708 = vand.u32 %v3391, 4294901760
    %v3709 = vsub.f32 %v3391, %v3708
    %3710 = vmatpush1.msra.mxu0 %v3709
    %3711 = vmatprep.subr.mxu0 0.0
    %v3712 = vand.u32 %v3390, 4294901760
    %v3713 = vsub.f32 %v3390, %v3712
    %3714 = vmatpush1.msra.mxu0 %v3713
    %3715 = vmatprep.subr.mxu0 0.0
    %v3716 = vand.u32 %v3389, 4294901760
    %v3717 = vsub.f32 %v3389, %v3716
    %3718 = vmatpush1.msra.mxu0 %v3717
    %3719 = vmatprep.subr.mxu0 0.0
    %3720 = vmatpush2.msra.mxu0 0.0
    %3721 = vmatprep.subr.mxu0 0.0
    %3722 = vmatpush2.msra.mxu0 0.0
    %3723 = vmatprep.subr.mxu0 0.0
    %3724 = vmatpush2.msra.mxu0 0.0
    %3725 = vmatprep.subr.mxu0 0.0
    %3726 = vmatpush2.msra.mxu0 0.0
    %3727 = vmatprep.subr.mxu0 0.0
    %3728 = vmatpush2.msra.mxu0 0.0
    %3729 = vmatprep.subr.mxu0 0.0
    %3730 = vmatpush2.msra.mxu0 0.0
    %3731 = vmatprep.subr.mxu0 0.0
    %3732 = vmatpush2.msra.mxu0 0.0
    %3733 = vmatprep.subr.mxu0 0.0
    %3734 = vmatpush2.msra.mxu0 0.0
    %3735 = vmatprep.subr.mxu0 0.0
    %3736 = vmatpush2.msra.mxu0 0.0
    %3737 = vmatprep.subr.mxu0 0.0
    %3738 = vmatpush2.msra.mxu0 0.0
    %3739 = vmatprep.subr.mxu0 0.0
    %3740 = vmatpush2.msra.mxu0 0.0
    %3741 = vmatprep.subr.mxu0 0.0
    %3742 = vmatpush2.msra.mxu0 0.0
    %3743 = vmatprep.subr.mxu0 0.0
    %3744 = vmatpush2.msra.mxu0 0.0
    %3745 = vmatprep.subr.mxu0 0.0
    %3746 = vmatpush2.msra.mxu0 0.0
    %3747 = vmatprep.subr.mxu0 0.0
    %3748 = vmatpush2.msra.mxu0 0.0
    %3749 = vmatprep.subr.mxu0 0.0
    %3750 = vmatpush2.msra.mxu0 0.0
    %3751 = vmatprep.mubr.f32.mxu0 0.0
    %v3752 = vand.u32 %v3387, 4294901760
    %v3753 = vsub.f32 %v3387, %v3752
    %3754 = vmatmul.mubr.f32.gmra.mxu0 %v3753
    %v3755 = vpop.f32.mrf.mxu0
    %v3756 = vadd.f32 %v3652, %v3755
    %v3757 = vpop.f32.mrf.mxu0
    %3758 = vdwg.mxu0
    %3759 = vmatprep.subr.mxu0 0.0
    %v3760 = vand.u32 %v3404, 4294901760
    %3761 = vmatpush1.msra.mxu0 %v3760
    %3762 = vmatprep.subr.mxu0 0.0
    %v3763 = vand.u32 %v3403, 4294901760
    %3764 = vmatpush1.msra.mxu0 %v3763
    %3765 = vmatprep.subr.mxu0 0.0
    %v3766 = vand.u32 %v3402, 4294901760
    %3767 = vmatpush1.msra.mxu0 %v3766
    %3768 = vmatprep.subr.mxu0 0.0
    %v3769 = vand.u32 %v3401, 4294901760
    %3770 = vmatpush1.msra.mxu0 %v3769
    %3771 = vmatprep.subr.mxu0 0.0
    %v3772 = vand.u32 %v3400, 4294901760
    %3773 = vmatpush1.msra.mxu0 %v3772
    %3774 = vmatprep.subr.mxu0 0.0
    %v3775 = vand.u32 %v3399, 4294901760
    %3776 = vmatpush1.msra.mxu0 %v3775
    %3777 = vmatprep.subr.mxu0 0.0
    %v3778 = vand.u32 %v3398, 4294901760
    %3779 = vmatpush1.msra.mxu0 %v3778
    %3780 = vmatprep.subr.mxu0 0.0
    %v3781 = vand.u32 %v3397, 4294901760
    %3782 = vmatpush1.msra.mxu0 %v3781
    %3783 = vmatprep.subr.mxu0 0.0
    %v3784 = vand.u32 %v3396, 4294901760
    %3785 = vmatpush1.msra.mxu0 %v3784
    %3786 = vmatprep.subr.mxu0 0.0
    %v3787 = vand.u32 %v3395, 4294901760
    %3788 = vmatpush1.msra.mxu0 %v3787
    %3789 = vmatprep.subr.mxu0 0.0
    %v3790 = vand.u32 %v3394, 4294901760
    %3791 = vmatpush1.msra.mxu0 %v3790
    %3792 = vmatprep.subr.mxu0 0.0
    %v3793 = vand.u32 %v3393, 4294901760
    %3794 = vmatpush1.msra.mxu0 %v3793
    %3795 = vmatprep.subr.mxu0 0.0
    %v3796 = vand.u32 %v3392, 4294901760
    %3797 = vmatpush1.msra.mxu0 %v3796
    %3798 = vmatprep.subr.mxu0 0.0
    %v3799 = vand.u32 %v3391, 4294901760
    %3800 = vmatpush1.msra.mxu0 %v3799
    %3801 = vmatprep.subr.mxu0 0.0
    %v3802 = vand.u32 %v3390, 4294901760
    %3803 = vmatpush1.msra.mxu0 %v3802
    %3804 = vmatprep.subr.mxu0 0.0
    %v3805 = vand.u32 %v3389, 4294901760
    %3806 = vmatpush1.msra.mxu0 %v3805
    %3807 = vmatprep.subr.mxu0 0.0
    %3808 = vmatpush2.msra.mxu0 0.0
    %3809 = vmatprep.subr.mxu0 0.0
    %3810 = vmatpush2.msra.mxu0 0.0
    %3811 = vmatprep.subr.mxu0 0.0
    %3812 = vmatpush2.msra.mxu0 0.0
    %3813 = vmatprep.subr.mxu0 0.0
    %3814 = vmatpush2.msra.mxu0 0.0
    %3815 = vmatprep.subr.mxu0 0.0
    %3816 = vmatpush2.msra.mxu0 0.0
    %3817 = vmatprep.subr.mxu0 0.0
    %3818 = vmatpush2.msra.mxu0 0.0
    %3819 = vmatprep.subr.mxu0 0.0
    %3820 = vmatpush2.msra.mxu0 0.0
    %3821 = vmatprep.subr.mxu0 0.0
    %3822 = vmatpush2.msra.mxu0 0.0
    %3823 = vmatprep.subr.mxu0 0.0
    %3824 = vmatpush2.msra.mxu0 0.0
    %3825 = vmatprep.subr.mxu0 0.0
    %3826 = vmatpush2.msra.mxu0 0.0
    %3827 = vmatprep.subr.mxu0 0.0
    %3828 = vmatpush2.msra.mxu0 0.0
    %3829 = vmatprep.subr.mxu0 0.0
    %3830 = vmatpush2.msra.mxu0 0.0
    %3831 = vmatprep.subr.mxu0 0.0
    %3832 = vmatpush2.msra.mxu0 0.0
    %3833 = vmatprep.subr.mxu0 0.0
    %3834 = vmatpush2.msra.mxu0 0.0
    %3835 = vmatprep.subr.mxu0 0.0
    %3836 = vmatpush2.msra.mxu0 0.0
    %3837 = vmatprep.subr.mxu0 0.0
    %3838 = vmatpush2.msra.mxu0 0.0
    %3839 = vmatprep.mubr.f32.mxu0 0.0
    %v3840 = vand.u32 %v3387, 4294901760
    %v3841 = vsub.f32 %v3387, %v3840
    %v3842 = vand.u32 %v3841, 4294901760
    %3843 = vmatmul.mubr.f32.gmra.mxu0 %v3842
    %v3844 = vpop.f32.mrf.mxu0
    %v3845 = vadd.f32 %v3756, %v3844
    %v3846 = vpop.f32.mrf.mxu0
    %3847 = vdwg.mxu0
    %3848 = vmatprep.subr.mxu0 0.0
    %v3849 = vand.u32 %v3404, 4294901760
    %v3850 = vsub.f32 %v3404, %v3849
    %v3851 = vand.u32 %v3850, 4294901760
    %3852 = vmatpush1.msra.mxu0 %v3851
    %3853 = vmatprep.subr.mxu0 0.0
    %v3854 = vand.u32 %v3403, 4294901760
    %v3855 = vsub.f32 %v3403, %v3854
    %v3856 = vand.u32 %v3855, 4294901760
    %3857 = vmatpush1.msra.mxu0 %v3856
    %3858 = vmatprep.subr.mxu0 0.0
    %v3859 = vand.u32 %v3402, 4294901760
    %v3860 = vsub.f32 %v3402, %v3859
    %v3861 = vand.u32 %v3860, 4294901760
    %3862 = vmatpush1.msra.mxu0 %v3861
    %3863 = vmatprep.subr.mxu0 0.0
    %v3864 = vand.u32 %v3401, 4294901760
    %v3865 = vsub.f32 %v3401, %v3864
    %v3866 = vand.u32 %v3865, 4294901760
    %3867 = vmatpush1.msra.mxu0 %v3866
    %3868 = vmatprep.subr.mxu0 0.0
    %v3869 = vand.u32 %v3400, 4294901760
    %v3870 = vsub.f32 %v3400, %v3869
    %v3871 = vand.u32 %v3870, 4294901760
    %3872 = vmatpush1.msra.mxu0 %v3871
    %3873 = vmatprep.subr.mxu0 0.0
    %v3874 = vand.u32 %v3399, 4294901760
    %v3875 = vsub.f32 %v3399, %v3874
    %v3876 = vand.u32 %v3875, 4294901760
    %3877 = vmatpush1.msra.mxu0 %v3876
    %3878 = vmatprep.subr.mxu0 0.0
    %v3879 = vand.u32 %v3398, 4294901760
    %v3880 = vsub.f32 %v3398, %v3879
    %v3881 = vand.u32 %v3880, 4294901760
    %3882 = vmatpush1.msra.mxu0 %v3881
    %3883 = vmatprep.subr.mxu0 0.0
    %v3884 = vand.u32 %v3397, 4294901760
    %v3885 = vsub.f32 %v3397, %v3884
    %v3886 = vand.u32 %v3885, 4294901760
    %3887 = vmatpush1.msra.mxu0 %v3886
    %3888 = vmatprep.subr.mxu0 0.0
    %v3889 = vand.u32 %v3396, 4294901760
    %v3890 = vsub.f32 %v3396, %v3889
    %v3891 = vand.u32 %v3890, 4294901760
    %3892 = vmatpush1.msra.mxu0 %v3891
    %3893 = vmatprep.subr.mxu0 0.0
    %v3894 = vand.u32 %v3395, 4294901760
    %v3895 = vsub.f32 %v3395, %v3894
    %v3896 = vand.u32 %v3895, 4294901760
    %3897 = vmatpush1.msra.mxu0 %v3896
    %3898 = vmatprep.subr.mxu0 0.0
    %v3899 = vand.u32 %v3394, 4294901760
    %v3900 = vsub.f32 %v3394, %v3899
    %v3901 = vand.u32 %v3900, 4294901760
    %3902 = vmatpush1.msra.mxu0 %v3901
    %3903 = vmatprep.subr.mxu0 0.0
    %v3904 = vand.u32 %v3393, 4294901760
    %v3905 = vsub.f32 %v3393, %v3904
    %v3906 = vand.u32 %v3905, 4294901760
    %3907 = vmatpush1.msra.mxu0 %v3906
    %3908 = vmatprep.subr.mxu0 0.0
    %v3909 = vand.u32 %v3392, 4294901760
    %v3910 = vsub.f32 %v3392, %v3909
    %v3911 = vand.u32 %v3910, 4294901760
    %3912 = vmatpush1.msra.mxu0 %v3911
    %3913 = vmatprep.subr.mxu0 0.0
    %v3914 = vand.u32 %v3391, 4294901760
    %v3915 = vsub.f32 %v3391, %v3914
    %v3916 = vand.u32 %v3915, 4294901760
    %3917 = vmatpush1.msra.mxu0 %v3916
    %3918 = vmatprep.subr.mxu0 0.0
    %v3919 = vand.u32 %v3390, 4294901760
    %v3920 = vsub.f32 %v3390, %v3919
    %v3921 = vand.u32 %v3920, 4294901760
    %3922 = vmatpush1.msra.mxu0 %v3921
    %3923 = vmatprep.subr.mxu0 0.0
    %v3924 = vand.u32 %v3389, 4294901760
    %v3925 = vsub.f32 %v3389, %v3924
    %v3926 = vand.u32 %v3925, 4294901760
    %3927 = vmatpush1.msra.mxu0 %v3926
    %3928 = vmatprep.subr.mxu0 0.0
    %3929 = vmatpush2.msra.mxu0 0.0
    %3930 = vmatprep.subr.mxu0 0.0
    %3931 = vmatpush2.msra.mxu0 0.0
    %3932 = vmatprep.subr.mxu0 0.0
    %3933 = vmatpush2.msra.mxu0 0.0
    %3934 = vmatprep.subr.mxu0 0.0
    %3935 = vmatpush2.msra.mxu0 0.0
    %3936 = vmatprep.subr.mxu0 0.0
    %3937 = vmatpush2.msra.mxu0 0.0
    %3938 = vmatprep.subr.mxu0 0.0
    %3939 = vmatpush2.msra.mxu0 0.0
    %3940 = vmatprep.subr.mxu0 0.0
    %3941 = vmatpush2.msra.mxu0 0.0
    %3942 = vmatprep.subr.mxu0 0.0
    %3943 = vmatpush2.msra.mxu0 0.0
    %3944 = vmatprep.subr.mxu0 0.0
    %3945 = vmatpush2.msra.mxu0 0.0
    %3946 = vmatprep.subr.mxu0 0.0
    %3947 = vmatpush2.msra.mxu0 0.0
    %3948 = vmatprep.subr.mxu0 0.0
    %3949 = vmatpush2.msra.mxu0 0.0
    %3950 = vmatprep.subr.mxu0 0.0
    %3951 = vmatpush2.msra.mxu0 0.0
    %3952 = vmatprep.subr.mxu0 0.0
    %3953 = vmatpush2.msra.mxu0 0.0
    %3954 = vmatprep.subr.mxu0 0.0
    %3955 = vmatpush2.msra.mxu0 0.0
    %3956 = vmatprep.subr.mxu0 0.0
    %3957 = vmatpush2.msra.mxu0 0.0
    %3958 = vmatprep.subr.mxu0 0.0
    %3959 = vmatpush2.msra.mxu0 0.0
    %3960 = vmatprep.mubr.f32.mxu0 0.0
    %v3961 = vand.u32 %v3387, 4294901760
    %3962 = vmatmul.mubr.f32.gmra.mxu0 %v3961
    %v3963 = vpop.f32.mrf.mxu0
    %v3964 = vadd.f32 %v3845, %v3963
    %v3965 = vpop.f32.mrf.mxu0
    %3966 = vdwg.mxu0
    %3967 = vmatprep.subr.mxu0 0.0
    %v3968 = vand.u32 %v3404, 4294901760
    %3969 = vmatpush1.msra.mxu0 %v3968
    %3970 = vmatprep.subr.mxu0 0.0
    %v3971 = vand.u32 %v3403, 4294901760
    %3972 = vmatpush1.msra.mxu0 %v3971
    %3973 = vmatprep.subr.mxu0 0.0
    %v3974 = vand.u32 %v3402, 4294901760
    %3975 = vmatpush1.msra.mxu0 %v3974
    %3976 = vmatprep.subr.mxu0 0.0
    %v3977 = vand.u32 %v3401, 4294901760
    %3978 = vmatpush1.msra.mxu0 %v3977
    %3979 = vmatprep.subr.mxu0 0.0
    %v3980 = vand.u32 %v3400, 4294901760
    %3981 = vmatpush1.msra.mxu0 %v3980
    %3982 = vmatprep.subr.mxu0 0.0
    %v3983 = vand.u32 %v3399, 4294901760
    %3984 = vmatpush1.msra.mxu0 %v3983
    %3985 = vmatprep.subr.mxu0 0.0
    %v3986 = vand.u32 %v3398, 4294901760
    %3987 = vmatpush1.msra.mxu0 %v3986
    %3988 = vmatprep.subr.mxu0 0.0
    %v3989 = vand.u32 %v3397, 4294901760
    %3990 = vmatpush1.msra.mxu0 %v3989
    %3991 = vmatprep.subr.mxu0 0.0
    %v3992 = vand.u32 %v3396, 4294901760
    %3993 = vmatpush1.msra.mxu0 %v3992
    %3994 = vmatprep.subr.mxu0 0.0
    %v3995 = vand.u32 %v3395, 4294901760
    %3996 = vmatpush1.msra.mxu0 %v3995
    %3997 = vmatprep.subr.mxu0 0.0
    %v3998 = vand.u32 %v3394, 4294901760
    %3999 = vmatpush1.msra.mxu0 %v3998
    %4000 = vmatprep.subr.mxu0 0.0
    %v4001 = vand.u32 %v3393, 4294901760
    %4002 = vmatpush1.msra.mxu0 %v4001
    %4003 = vmatprep.subr.mxu0 0.0
    %v4004 = vand.u32 %v3392, 4294901760
    %4005 = vmatpush1.msra.mxu0 %v4004
    %4006 = vmatprep.subr.mxu0 0.0
    %v4007 = vand.u32 %v3391, 4294901760
    %4008 = vmatpush1.msra.mxu0 %v4007
    %4009 = vmatprep.subr.mxu0 0.0
    %v4010 = vand.u32 %v3390, 4294901760
    %4011 = vmatpush1.msra.mxu0 %v4010
    %4012 = vmatprep.subr.mxu0 0.0
    %v4013 = vand.u32 %v3389, 4294901760
    %4014 = vmatpush1.msra.mxu0 %v4013
    %4015 = vmatprep.subr.mxu0 0.0
    %4016 = vmatpush2.msra.mxu0 0.0
    %4017 = vmatprep.subr.mxu0 0.0
    %4018 = vmatpush2.msra.mxu0 0.0
    %4019 = vmatprep.subr.mxu0 0.0
    %4020 = vmatpush2.msra.mxu0 0.0
    %4021 = vmatprep.subr.mxu0 0.0
    %4022 = vmatpush2.msra.mxu0 0.0
    %4023 = vmatprep.subr.mxu0 0.0
    %4024 = vmatpush2.msra.mxu0 0.0
    %4025 = vmatprep.subr.mxu0 0.0
    %4026 = vmatpush2.msra.mxu0 0.0
    %4027 = vmatprep.subr.mxu0 0.0
    %4028 = vmatpush2.msra.mxu0 0.0
    %4029 = vmatprep.subr.mxu0 0.0
    %4030 = vmatpush2.msra.mxu0 0.0
    %4031 = vmatprep.subr.mxu0 0.0
    %4032 = vmatpush2.msra.mxu0 0.0
    %4033 = vmatprep.subr.mxu0 0.0
    %4034 = vmatpush2.msra.mxu0 0.0
    %4035 = vmatprep.subr.mxu0 0.0
    %4036 = vmatpush2.msra.mxu0 0.0
    %4037 = vmatprep.subr.mxu0 0.0
    %4038 = vmatpush2.msra.mxu0 0.0
    %4039 = vmatprep.subr.mxu0 0.0
    %4040 = vmatpush2.msra.mxu0 0.0
    %4041 = vmatprep.subr.mxu0 0.0
    %4042 = vmatpush2.msra.mxu0 0.0
    %4043 = vmatprep.subr.mxu0 0.0
    %4044 = vmatpush2.msra.mxu0 0.0
    %4045 = vmatprep.subr.mxu0 0.0
    %4046 = vmatpush2.msra.mxu0 0.0
    %4047 = vmatprep.mubr.f32.mxu0 0.0
    %v4048 = vand.u32 %v3387, 4294901760
    %4049 = vmatmul.mubr.f32.gmra.mxu0 %v4048
    %v4050 = vpop.f32.mrf.mxu0
    %v4051 = vadd.f32 %v3964, %v4050
    %v4052 = vpop.f32.mrf.mxu0
    %4053 = vdwg.mxu0
    %4054 = vst [vmem:[#allocation8] sm:$0xff] %v4051
    // Predicated region
    $region26: #{tpu_custom_call.1} parent=1 // pred_check
      _
    $region27: #{tpu_custom_call.1} parent=1 // pred_check_branch
      %4056 = sbr.rel (0) target = $region29
    $region28: #{tpu_custom_call.1} parent=1 // pred_region
      %s4058 = ssub.s32 128, 128
      %4059 = vsyncadd [#allocation4], %s4058
      %s4061 = sshll.u32 [#allocation8], 4
      %s4062 = int_to_ptr.vmem [resolvable:$true] %s4061
      %4064 = dma.vmem_to_hbm [thread:$0]  %s4062, 128, %s3, [#allocation4]
    $region29: #{tpu_custom_call.1} parent=1 // pred_fallthru
      _
    // Predicated region
    $region30: #{tpu_custom_call.1} parent=1 // pred_check
      _
    $region31: #{tpu_custom_call.1} parent=1 // pred_check_branch
      %4066 = sbr.rel (0) target = $region33
    $region32: #{tpu_custom_call.1} parent=1 // pred_region
      %4067 = dma.done [#allocation4], 128
    $region33: #{tpu_custom_call.1} parent=1 // pred_fallthru
      _
    %4068 = vsyncpa [#allocation3], 1
    %4069 = vsyncpa [#allocation6], 1
    %4070 = vsyncpa [#allocation4], 1

</llo_original>
